<compile_context>
chip_gen: v6e
topology: v6e:2x2x1
jax: 0.10.0
libtpu: 0.0.40
codegen_flags: <defaults>
</compile_context>

<pallas_src>
import jax
import jax.numpy as jnp
import numpy as np
from jax import lax
from jax.experimental import pallas as pl
from jax.experimental.pallas import tpu as pltpu

# ---- dims implied by the module (small runnable spatial size) ----------------
C_IN = 3
H_IN = W_IN = 16
C1, C2, C3 = 64, 128, 256          # reference_net conv channels
K1, K2 = 7, 3                      # conv kernel sizes
H1 = W1 = H_IN // 2                # after conv1 (k=7, s=2, p=3)  -> 8
H2 = W2 = H1 // 2                  # after conv2 (k=3, s=2, p=1)  -> 4
H3 = W3 = H2 // 2                  # after conv3 (k=3, s=2, p=1)  -> 2
LOCAL_DIM = 512                    # Linear(256, 512)
GLOBAL_DIM = 512                   # CLIP visual feature dim (stand-in)
PATCH = C_IN * K1 * K1             # 147


# ---------------------------------------------------------------------------
# wrapper-side helpers (layout plumbing / constant matrices)
# ---------------------------------------------------------------------------
def conv1_patches(x):
    """im2col for Conv2d(3,64,k=7,s=2,p=3): (B,3,H,W) -> (B, H1*W1, 147), last dim (ci,kh,kw)."""
    B = x.shape[0]
    xp = jnp.pad(x, ((0, 0), (0, 0), (3, 3), (3, 3)))
    taps = [xp[:, :, kh:kh + 2 * H1:2, kw:kw + 2 * W1:2]
            for kh in range(K1) for kw in range(K1)]        # each (B, 3, H1, W1)
    p = jnp.stack(taps, axis=2)                             # (B, 3, 49, H1, W1)
    p = jnp.transpose(p, (0, 3, 4, 1, 2))                   # (B, H1, W1, 3, 49)
    return p.reshape(B, H1 * W1, PATCH)


def make_gather_mats(B, h_in, w_in, h_out, w_out, k, stride, pad):
    """Constant 0/1 matrices turning a KxK/stride/pad conv on flattened pixel rows
    into per-tap matmuls: out_tap = G[tap] @ h_in_rows. Shape (k*k, B*Pout, B*Pin)."""
    g = np.zeros((k * k, B * h_out * w_out, B * h_in * w_in), np.float32)
    for kh in range(k):
        for kw in range(k):
            t = kh * k + kw
            for b in range(B):
                for i in range(h_out):
                    for j in range(w_out):
                        ih = stride * i + kh - pad
                        iw = stride * j + kw - pad
                        if 0 <= ih < h_in and 0 <= iw < w_in:
                            g[t, (b * h_out + i) * w_out + j,
                                 (b * h_in + ih) * w_in + iw] = 1.0
    return g


def block_diag_pool(B, P):
    """(B, B*P) block-diagonal averaging matrix (mean over P rows per batch)."""
    m = np.zeros((B, B * P), np.float32)
    for b in range(B):
        m[b, b * P:(b + 1) * P] = 1.0 / P
    return m


# ---------------------------------------------------------------------------
# the Pallas kernel (single invocation, whole batch)
# ---------------------------------------------------------------------------
def canonical_identity_kernel(p1_ref, w1_ref, b1_ref,
                              g2_ref, w2_ref, b2_ref,
                              g3_ref, w3_ref, b3_ref,
                              pooll_ref, wl_ref, bl_ref,
                              poolg_ref, wg_ref, bg_ref,
                              o_ref):
    f32 = jnp.float32
    p1 = p1_ref[...]                                                     # (B*64, 147)

    # ---- reference_net -----------------------------------------------------
    # Conv2d(3, 64, k=7, s=2, p=3) as one big-M im2col matmul + ReLU.
    h = jnp.dot(p1, w1_ref[...], preferred_element_type=f32) + b1_ref[...]
    h = jnp.maximum(h, 0.0)                                              # (B*64, 64)

    def conv3x3_s2(hin, g_ref, w_ref, b_ref):
        # 3x3 / stride-2 / pad-1 conv on flattened (B*Pin, Cin) rows:
        # per tap, a 0/1 gather matmul followed by a (Cin x Cout) matmul (MXU only).
        acc = None
        for k in range(g_ref.shape[0]):
            tap = jnp.dot(g_ref[k], hin, preferred_element_type=f32)
            y = jnp.dot(tap, w_ref[k], preferred_element_type=f32)
            acc = y if acc is None else acc + y
        return jnp.maximum(acc + b_ref[...], 0.0)

    h = conv3x3_s2(h, g2_ref, w2_ref, b2_ref)                            # (B*16, 128)
    h = conv3x3_s2(h, g3_ref, w3_ref, b3_ref)                            # (B*4,  256)

    # AdaptiveAvgPool2d(1) + Flatten + Linear(256, 512)
    pooled = jnp.dot(pooll_ref[...], h, preferred_element_type=f32)      # (B, 256)
    local = jnp.dot(pooled, wl_ref[...], preferred_element_type=f32) + bl_ref[...]  # (B, 512)

    # ---- clip_encoder ------------------------------------------------------
    # TODO(synk): the pretrained CLIP visual transformer is not reproduced here; it is
    # replaced by a deterministic stand-in (mean over conv1 image patches -> linear to 512).
    gproj = jnp.dot(p1, wg_ref[...], preferred_element_type=f32)         # (B*64, 512)
    glob = jnp.dot(poolg_ref[...], gproj, preferred_element_type=f32) + bg_ref[...]  # (B, 512)

    # torch.cat([global_feature, local_feature], dim=1) -> lane-dense (B, 1024)
    o_ref[:, 0:GLOBAL_DIM] = glob.astype(o_ref.dtype)
    o_ref[:, GLOBAL_DIM:GLOBAL_DIM + LOCAL_DIM] = local.astype(o_ref.dtype)


# ---------------------------------------------------------------------------
# wrapper
# ---------------------------------------------------------------------------
def canonical_identity_encoder(x, params):
    (w1, b1, w2, b2, w3, b3, wl, bl, wg, bg) = params
    B = x.shape[0]

    # layout plumbing in XLA so every kernel operand is lane-dense
    p1 = conv1_patches(x.astype(jnp.float32)).reshape(B * H1 * W1, PATCH)    # (B*64, 147)
    w1m = w1.reshape(C1, PATCH).T                                            # (147, 64)
    w2t = jnp.transpose(w2, (2, 3, 1, 0)).reshape(K2 * K2, C1, C2)           # (9, 64, 128)
    w3t = jnp.transpose(w3, (2, 3, 1, 0)).reshape(K2 * K2, C2, C3)           # (9, 128, 256)
    wlm = wl.T                                                               # (256, 512)

    g2 = jnp.asarray(make_gather_mats(B, H1, W1, H2, W2, K2, 2, 1))          # (9, B*16, B*64)
    g3 = jnp.asarray(make_gather_mats(B, H2, W2, H3, W3, K2, 2, 1))          # (9, B*4,  B*16)
    pool_local = jnp.asarray(block_diag_pool(B, H3 * W3))                    # AdaptiveAvgPool2d(1)
    pool_global = jnp.asarray(block_diag_pool(B, H1 * W1))                   # CLIP stand-in pooling

    inputs = (p1, w1m, b1[None, :], g2, w2t, b2[None, :], g3, w3t, b3[None, :],
              pool_local, wlm, bl[None, :], pool_global, wg, bg[None, :])

    def full_spec(a):
        return pl.BlockSpec(a.shape, lambda i, _nd=a.ndim: (0,) * _nd)

    out_dim = GLOBAL_DIM + LOCAL_DIM
    grid_spec = pltpu.PrefetchScalarGridSpec(
        num_scalar_prefetch=0,
        grid=(1,),                                    # whole batch in one fat step (big-M matmuls)
        in_specs=[full_spec(a) for a in inputs],
        out_specs=pl.BlockSpec((B, out_dim), lambda i: (0, 0)),
    )
    return pl.pallas_call(
        canonical_identity_kernel,
        out_shape=jax.ShapeDtypeStruct((B, out_dim), jnp.float32),
        grid_spec=grid_spec,
        compiler_params=pltpu.CompilerParams(dimension_semantics=("arbitrary",)),
    )(*inputs)


# ---------------------------------------------------------------------------
# plain-JAX reference with identical semantics (correctness check)
# ---------------------------------------------------------------------------
def reference(x, params):
    (w1, b1, w2, b2, w3, b3, wl, bl, wg, bg) = params
    x = x.astype(jnp.float32)

    def conv(h, w, b, stride, pad):
        y = lax.conv_general_dilated(
            h, w, window_strides=(stride, stride),
            padding=[(pad, pad), (pad, pad)],
            dimension_numbers=("NCHW", "OIHW", "NCHW"))
        return jnp.maximum(y + b[None, :, None, None], 0.0)

    h = conv(x, w1, b1, 2, 3)
    h = conv(h, w2, b2, 2, 1)
    h = conv(h, w3, b3, 2, 1)
    pooled = jnp.mean(h, axis=(2, 3))                     # AdaptiveAvgPool2d(1) + Flatten
    local = pooled @ wl.T + bl                            # Linear(256, 512)

    glob = jnp.mean(conv1_patches(x), axis=1) @ wg + bg   # CLIP visual stand-in (matches kernel)
    return jnp.concatenate([glob, local], axis=1)


if __name__ == "__main__":
    B = 2
    keys = jax.random.split(jax.random.PRNGKey(0), 11)
    x = jax.random.normal(keys[0], (B, C_IN, H_IN, W_IN), jnp.float32)

    def nrm(k, shape, scale):
        return jax.random.normal(k, shape, jnp.float32) * scale

    # parameters in PyTorch layouts (Conv2d: OIHW, Linear: (out, in))
    w1 = nrm(keys[1], (C1, C_IN, K1, K1), np.sqrt(2.0 / PATCH))
    b1 = nrm(keys[2], (C1,), 0.05)
    w2 = nrm(keys[3], (C2, C1, K2, K2), np.sqrt(2.0 / (C1 * K2 * K2)))
    b2 = nrm(keys[4], (C2,), 0.05)
    w3 = nrm(keys[5], (C3, C2, K2, K2), np.sqrt(2.0 / (C2 * K2 * K2)))
    b3 = nrm(keys[6], (C3,), 0.05)
    wl = nrm(keys[7], (LOCAL_DIM, C3), np.sqrt(1.0 / C3))
    bl = nrm(keys[8], (LOCAL_DIM,), 0.05)
    wg = nrm(keys[9], (PATCH, GLOBAL_DIM), np.sqrt(1.0 / PATCH))   # CLIP stand-in projection
    bg = nrm(keys[10], (GLOBAL_DIM,), 0.05)
    params = (w1, b1, w2, b2, w3, b3, wl, bl, wg, bg)

    out = jax.block_until_ready(canonical_identity_encoder(x, params))
    assert out.shape == (B, GLOBAL_DIM + LOCAL_DIM), out.shape

    ref = reference(x, params)
    np.testing.assert_allclose(np.asarray(out), np.asarray(ref), rtol=1e-3, atol=1e-3)
    print("KERNEL_OK")
</pallas_src>

<mosaic_0001>
module attributes {stable_mosaic.version = 11 : i64} {
  func.func @canonical_identity_kernel(%arg0: i32, %arg1: memref<128x147xf32, #tpu.memory_space<vmem>>, %arg2: memref<147x64xf32, #tpu.memory_space<vmem>>, %arg3: memref<1x64xf32, #tpu.memory_space<vmem>>, %arg4: memref<9x32x128xf32, #tpu.memory_space<vmem>>, %arg5: memref<9x64x128xf32, #tpu.memory_space<vmem>>, %arg6: memref<1x128xf32, #tpu.memory_space<vmem>>, %arg7: memref<9x8x32xf32, #tpu.memory_space<vmem>>, %arg8: memref<9x128x256xf32, #tpu.memory_space<vmem>>, %arg9: memref<1x256xf32, #tpu.memory_space<vmem>>, %arg10: memref<2x8xf32, #tpu.memory_space<vmem>>, %arg11: memref<256x512xf32, #tpu.memory_space<vmem>>, %arg12: memref<1x512xf32, #tpu.memory_space<vmem>>, %arg13: memref<2x128xf32, #tpu.memory_space<vmem>>, %arg14: memref<147x512xf32, #tpu.memory_space<vmem>>, %arg15: memref<1x512xf32, #tpu.memory_space<vmem>>, %arg16: memref<2x1024xf32, #tpu.memory_space<vmem>>) attributes {dimension_semantics = [#tpu.dimension_semantics<arbitrary>], iteration_bounds = array<i64: 1>, scalar_prefetch = 0 : i64, scratch_operands = 0 : i64, tpu.core_type = #tpu.core_type<tc>, window_params = [{pipeline_mode = #tpu.pipeline_mode<synchronous>, transform_indices = @transform_0, window_bounds = array<i64: 128, 147>}, {pipeline_mode = #tpu.pipeline_mode<synchronous>, transform_indices = @transform_1, window_bounds = array<i64: 147, 64>}, {pipeline_mode = #tpu.pipeline_mode<synchronous>, transform_indices = @transform_2, window_bounds = array<i64: 1, 64>}, {pipeline_mode = #tpu.pipeline_mode<synchronous>, transform_indices = @transform_3, window_bounds = array<i64: 9, 32, 128>}, {pipeline_mode = #tpu.pipeline_mode<synchronous>, transform_indices = @transform_4, window_bounds = array<i64: 9, 64, 128>}, {pipeline_mode = #tpu.pipeline_mode<synchronous>, transform_indices = @transform_5, window_bounds = array<i64: 1, 128>}, {pipeline_mode = #tpu.pipeline_mode<synchronous>, transform_indices = @transform_6, window_bounds = array<i64: 9, 8, 32>}, {pipeline_mode = #tpu.pipeline_mode<synchronous>, transform_indices = @transform_7, window_bounds = array<i64: 9, 128, 256>}, {pipeline_mode = #tpu.pipeline_mode<synchronous>, transform_indices = @transform_8, window_bounds = array<i64: 1, 256>}, {pipeline_mode = #tpu.pipeline_mode<synchronous>, transform_indices = @transform_9, window_bounds = array<i64: 2, 8>}, {pipeline_mode = #tpu.pipeline_mode<synchronous>, transform_indices = @transform_10, window_bounds = array<i64: 256, 512>}, {pipeline_mode = #tpu.pipeline_mode<synchronous>, transform_indices = @transform_11, window_bounds = array<i64: 1, 512>}, {pipeline_mode = #tpu.pipeline_mode<synchronous>, transform_indices = @transform_12, window_bounds = array<i64: 2, 128>}, {pipeline_mode = #tpu.pipeline_mode<synchronous>, transform_indices = @transform_13, window_bounds = array<i64: 147, 512>}, {pipeline_mode = #tpu.pipeline_mode<synchronous>, transform_indices = @transform_14, window_bounds = array<i64: 1, 512>}, {pipeline_mode = #tpu.pipeline_mode<synchronous>, transform_indices = @transform_15, window_bounds = array<i64: 2, 1024>}]} {
    %c0 = arith.constant 0 : index
    %c0_0 = arith.constant 0 : index
    %0 = vector.load %arg1[%c0, %c0_0] : memref<128x147xf32, #tpu.memory_space<vmem>>, vector<128x147xf32>
    %c0_1 = arith.constant 0 : index
    %c0_2 = arith.constant 0 : index
    %1 = vector.load %arg2[%c0_1, %c0_2] : memref<147x64xf32, #tpu.memory_space<vmem>>, vector<147x64xf32>
    %cst = arith.constant dense<0.000000e+00> : vector<128x64xf32>
    %2 = tpu.matmul %0, %1, %cst {dimension_numbers = #tpu.dot_dimension_numbers<[1], [0], [0], [1], [0, 0, 1, 1], [], []>} : vector<128x147xf32>, vector<147x64xf32>, vector<128x64xf32> -> vector<128x64xf32>
    %c0_3 = arith.constant 0 : index
    %c0_4 = arith.constant 0 : index
    %3 = vector.load %arg3[%c0_3, %c0_4] : memref<1x64xf32, #tpu.memory_space<vmem>>, vector<1x64xf32>
    %4 = vector.broadcast %3 : vector<1x64xf32> to vector<128x64xf32>
    %5 = arith.addf %2, %4 : vector<128x64xf32>
    %cst_5 = arith.constant 0.000000e+00 : f32
    %6 = vector.broadcast %cst_5 : f32 to vector<128x64xf32>
    %7 = arith.maximumf %5, %6 : vector<128x64xf32>
    %c0_6 = arith.constant 0 : index
    %c0_7 = arith.constant 0 : index
    %c0_8 = arith.constant 0 : index
    %8 = vector.load %arg4[%c0_6, %c0_7, %c0_8] : memref<9x32x128xf32, #tpu.memory_space<vmem>>, vector<1x32x128xf32>
    %9 = vector.shape_cast %8 : vector<1x32x128xf32> to vector<32x128xf32>
    %cst_9 = arith.constant dense<0.000000e+00> : vector<32x64xf32>
    %10 = tpu.matmul %9, %7, %cst_9 {dimension_numbers = #tpu.dot_dimension_numbers<[1], [0], [0], [1], [0, 0, 1, 1], [], []>} : vector<32x128xf32>, vector<128x64xf32>, vector<32x64xf32> -> vector<32x64xf32>
    %c0_10 = arith.constant 0 : index
    %c0_11 = arith.constant 0 : index
    %c0_12 = arith.constant 0 : index
    %11 = vector.load %arg5[%c0_10, %c0_11, %c0_12] : memref<9x64x128xf32, #tpu.memory_space<vmem>>, vector<1x64x128xf32>
    %12 = vector.shape_cast %11 : vector<1x64x128xf32> to vector<64x128xf32>
    %cst_13 = arith.constant dense<0.000000e+00> : vector<32x128xf32>
    %13 = tpu.matmul %10, %12, %cst_13 {dimension_numbers = #tpu.dot_dimension_numbers<[1], [0], [0], [1], [0, 0, 1, 1], [], []>} : vector<32x64xf32>, vector<64x128xf32>, vector<32x128xf32> -> vector<32x128xf32>
    %c1 = arith.constant 1 : index
    %c0_14 = arith.constant 0 : index
    %c0_15 = arith.constant 0 : index
    %14 = vector.load %arg4[%c1, %c0_14, %c0_15] : memref<9x32x128xf32, #tpu.memory_space<vmem>>, vector<1x32x128xf32>
    %15 = vector.shape_cast %14 : vector<1x32x128xf32> to vector<32x128xf32>
    %cst_16 = arith.constant dense<0.000000e+00> : vector<32x64xf32>
    %16 = tpu.matmul %15, %7, %cst_16 {dimension_numbers = #tpu.dot_dimension_numbers<[1], [0], [0], [1], [0, 0, 1, 1], [], []>} : vector<32x128xf32>, vector<128x64xf32>, vector<32x64xf32> -> vector<32x64xf32>
    %c1_17 = arith.constant 1 : index
    %c0_18 = arith.constant 0 : index
    %c0_19 = arith.constant 0 : index
    %17 = vector.load %arg5[%c1_17, %c0_18, %c0_19] : memref<9x64x128xf32, #tpu.memory_space<vmem>>, vector<1x64x128xf32>
    %18 = vector.shape_cast %17 : vector<1x64x128xf32> to vector<64x128xf32>
    %cst_20 = arith.constant dense<0.000000e+00> : vector<32x128xf32>
    %19 = tpu.matmul %16, %18, %cst_20 {dimension_numbers = #tpu.dot_dimension_numbers<[1], [0], [0], [1], [0, 0, 1, 1], [], []>} : vector<32x64xf32>, vector<64x128xf32>, vector<32x128xf32> -> vector<32x128xf32>
    %20 = arith.addf %13, %19 : vector<32x128xf32>
    %c2 = arith.constant 2 : index
    %c0_21 = arith.constant 0 : index
    %c0_22 = arith.constant 0 : index
    %21 = vector.load %arg4[%c2, %c0_21, %c0_22] : memref<9x32x128xf32, #tpu.memory_space<vmem>>, vector<1x32x128xf32>
    %22 = vector.shape_cast %21 : vector<1x32x128xf32> to vector<32x128xf32>
    %cst_23 = arith.constant dense<0.000000e+00> : vector<32x64xf32>
    %23 = tpu.matmul %22, %7, %cst_23 {dimension_numbers = #tpu.dot_dimension_numbers<[1], [0], [0], [1], [0, 0, 1, 1], [], []>} : vector<32x128xf32>, vector<128x64xf32>, vector<32x64xf32> -> vector<32x64xf32>
    %c2_24 = arith.constant 2 : index
    %c0_25 = arith.constant 0 : index
    %c0_26 = arith.constant 0 : index
    %24 = vector.load %arg5[%c2_24, %c0_25, %c0_26] : memref<9x64x128xf32, #tpu.memory_space<vmem>>, vector<1x64x128xf32>
    %25 = vector.shape_cast %24 : vector<1x64x128xf32> to vector<64x128xf32>
    %cst_27 = arith.constant dense<0.000000e+00> : vector<32x128xf32>
    %26 = tpu.matmul %23, %25, %cst_27 {dimension_numbers = #tpu.dot_dimension_numbers<[1], [0], [0], [1], [0, 0, 1, 1], [], []>} : vector<32x64xf32>, vector<64x128xf32>, vector<32x128xf32> -> vector<32x128xf32>
    %27 = arith.addf %20, %26 : vector<32x128xf32>
    %c3 = arith.constant 3 : index
    %c0_28 = arith.constant 0 : index
    %c0_29 = arith.constant 0 : index
    %28 = vector.load %arg4[%c3, %c0_28, %c0_29] : memref<9x32x128xf32, #tpu.memory_space<vmem>>, vector<1x32x128xf32>
    %29 = vector.shape_cast %28 : vector<1x32x128xf32> to vector<32x128xf32>
    %cst_30 = arith.constant dense<0.000000e+00> : vector<32x64xf32>
    %30 = tpu.matmul %29, %7, %cst_30 {dimension_numbers = #tpu.dot_dimension_numbers<[1], [0], [0], [1], [0, 0, 1, 1], [], []>} : vector<32x128xf32>, vector<128x64xf32>, vector<32x64xf32> -> vector<32x64xf32>
    %c3_31 = arith.constant 3 : index
    %c0_32 = arith.constant 0 : index
    %c0_33 = arith.constant 0 : index
    %31 = vector.load %arg5[%c3_31, %c0_32, %c0_33] : memref<9x64x128xf32, #tpu.memory_space<vmem>>, vector<1x64x128xf32>
    %32 = vector.shape_cast %31 : vector<1x64x128xf32> to vector<64x128xf32>
    %cst_34 = arith.constant dense<0.000000e+00> : vector<32x128xf32>
    %33 = tpu.matmul %30, %32, %cst_34 {dimension_numbers = #tpu.dot_dimension_numbers<[1], [0], [0], [1], [0, 0, 1, 1], [], []>} : vector<32x64xf32>, vector<64x128xf32>, vector<32x128xf32> -> vector<32x128xf32>
    %34 = arith.addf %27, %33 : vector<32x128xf32>
    %c4 = arith.constant 4 : index
    %c0_35 = arith.constant 0 : index
    %c0_36 = arith.constant 0 : index
    %35 = vector.load %arg4[%c4, %c0_35, %c0_36] : memref<9x32x128xf32, #tpu.memory_space<vmem>>, vector<1x32x128xf32>
    %36 = vector.shape_cast %35 : vector<1x32x128xf32> to vector<32x128xf32>
    %cst_37 = arith.constant dense<0.000000e+00> : vector<32x64xf32>
    %37 = tpu.matmul %36, %7, %cst_37 {dimension_numbers = #tpu.dot_dimension_numbers<[1], [0], [0], [1], [0, 0, 1, 1], [], []>} : vector<32x128xf32>, vector<128x64xf32>, vector<32x64xf32> -> vector<32x64xf32>
    %c4_38 = arith.constant 4 : index
    %c0_39 = arith.constant 0 : index
    %c0_40 = arith.constant 0 : index
    %38 = vector.load %arg5[%c4_38, %c0_39, %c0_40] : memref<9x64x128xf32, #tpu.memory_space<vmem>>, vector<1x64x128xf32>
    %39 = vector.shape_cast %38 : vector<1x64x128xf32> to vector<64x128xf32>
    %cst_41 = arith.constant dense<0.000000e+00> : vector<32x128xf32>
    %40 = tpu.matmul %37, %39, %cst_41 {dimension_numbers = #tpu.dot_dimension_numbers<[1], [0], [0], [1], [0, 0, 1, 1], [], []>} : vector<32x64xf32>, vector<64x128xf32>, vector<32x128xf32> -> vector<32x128xf32>
    %41 = arith.addf %34, %40 : vector<32x128xf32>
    %c5 = arith.constant 5 : index
    %c0_42 = arith.constant 0 : index
    %c0_43 = arith.constant 0 : index
    %42 = vector.load %arg4[%c5, %c0_42, %c0_43] : memref<9x32x128xf32, #tpu.memory_space<vmem>>, vector<1x32x128xf32>
    %43 = vector.shape_cast %42 : vector<1x32x128xf32> to vector<32x128xf32>
    %cst_44 = arith.constant dense<0.000000e+00> : vector<32x64xf32>
    %44 = tpu.matmul %43, %7, %cst_44 {dimension_numbers = #tpu.dot_dimension_numbers<[1], [0], [0], [1], [0, 0, 1, 1], [], []>} : vector<32x128xf32>, vector<128x64xf32>, vector<32x64xf32> -> vector<32x64xf32>
    %c5_45 = arith.constant 5 : index
    %c0_46 = arith.constant 0 : index
    %c0_47 = arith.constant 0 : index
    %45 = vector.load %arg5[%c5_45, %c0_46, %c0_47] : memref<9x64x128xf32, #tpu.memory_space<vmem>>, vector<1x64x128xf32>
    %46 = vector.shape_cast %45 : vector<1x64x128xf32> to vector<64x128xf32>
    %cst_48 = arith.constant dense<0.000000e+00> : vector<32x128xf32>
    %47 = tpu.matmul %44, %46, %cst_48 {dimension_numbers = #tpu.dot_dimension_numbers<[1], [0], [0], [1], [0, 0, 1, 1], [], []>} : vector<32x64xf32>, vector<64x128xf32>, vector<32x128xf32> -> vector<32x128xf32>
    %48 = arith.addf %41, %47 : vector<32x128xf32>
    %c6 = arith.constant 6 : index
    %c0_49 = arith.constant 0 : index
    %c0_50 = arith.constant 0 : index
    %49 = vector.load %arg4[%c6, %c0_49, %c0_50] : memref<9x32x128xf32, #tpu.memory_space<vmem>>, vector<1x32x128xf32>
    %50 = vector.shape_cast %49 : vector<1x32x128xf32> to vector<32x128xf32>
    %cst_51 = arith.constant dense<0.000000e+00> : vector<32x64xf32>
    %51 = tpu.matmul %50, %7, %cst_51 {dimension_numbers = #tpu.dot_dimension_numbers<[1], [0], [0], [1], [0, 0, 1, 1], [], []>} : vector<32x128xf32>, vector<128x64xf32>, vector<32x64xf32> -> vector<32x64xf32>
    %c6_52 = arith.constant 6 : index
    %c0_53 = arith.constant 0 : index
    %c0_54 = arith.constant 0 : index
    %52 = vector.load %arg5[%c6_52, %c0_53, %c0_54] : memref<9x64x128xf32, #tpu.memory_space<vmem>>, vector<1x64x128xf32>
    %53 = vector.shape_cast %52 : vector<1x64x128xf32> to vector<64x128xf32>
    %cst_55 = arith.constant dense<0.000000e+00> : vector<32x128xf32>
    %54 = tpu.matmul %51, %53, %cst_55 {dimension_numbers = #tpu.dot_dimension_numbers<[1], [0], [0], [1], [0, 0, 1, 1], [], []>} : vector<32x64xf32>, vector<64x128xf32>, vector<32x128xf32> -> vector<32x128xf32>
    %55 = arith.addf %48, %54 : vector<32x128xf32>
    %c7 = arith.constant 7 : index
    %c0_56 = arith.constant 0 : index
    %c0_57 = arith.constant 0 : index
    %56 = vector.load %arg4[%c7, %c0_56, %c0_57] : memref<9x32x128xf32, #tpu.memory_space<vmem>>, vector<1x32x128xf32>
    %57 = vector.shape_cast %56 : vector<1x32x128xf32> to vector<32x128xf32>
    %cst_58 = arith.constant dense<0.000000e+00> : vector<32x64xf32>
    %58 = tpu.matmul %57, %7, %cst_58 {dimension_numbers = #tpu.dot_dimension_numbers<[1], [0], [0], [1], [0, 0, 1, 1], [], []>} : vector<32x128xf32>, vector<128x64xf32>, vector<32x64xf32> -> vector<32x64xf32>
    %c7_59 = arith.constant 7 : index
    %c0_60 = arith.constant 0 : index
    %c0_61 = arith.constant 0 : index
    %59 = vector.load %arg5[%c7_59, %c0_60, %c0_61] : memref<9x64x128xf32, #tpu.memory_space<vmem>>, vector<1x64x128xf32>
    %60 = vector.shape_cast %59 : vector<1x64x128xf32> to vector<64x128xf32>
    %cst_62 = arith.constant dense<0.000000e+00> : vector<32x128xf32>
    %61 = tpu.matmul %58, %60, %cst_62 {dimension_numbers = #tpu.dot_dimension_numbers<[1], [0], [0], [1], [0, 0, 1, 1], [], []>} : vector<32x64xf32>, vector<64x128xf32>, vector<32x128xf32> -> vector<32x128xf32>
    %62 = arith.addf %55, %61 : vector<32x128xf32>
    %c8 = arith.constant 8 : index
    %c0_63 = arith.constant 0 : index
    %c0_64 = arith.constant 0 : index
    %63 = vector.load %arg4[%c8, %c0_63, %c0_64] : memref<9x32x128xf32, #tpu.memory_space<vmem>>, vector<1x32x128xf32>
    %64 = vector.shape_cast %63 : vector<1x32x128xf32> to vector<32x128xf32>
    %cst_65 = arith.constant dense<0.000000e+00> : vector<32x64xf32>
    %65 = tpu.matmul %64, %7, %cst_65 {dimension_numbers = #tpu.dot_dimension_numbers<[1], [0], [0], [1], [0, 0, 1, 1], [], []>} : vector<32x128xf32>, vector<128x64xf32>, vector<32x64xf32> -> vector<32x64xf32>
    %c8_66 = arith.constant 8 : index
    %c0_67 = arith.constant 0 : index
    %c0_68 = arith.constant 0 : index
    %66 = vector.load %arg5[%c8_66, %c0_67, %c0_68] : memref<9x64x128xf32, #tpu.memory_space<vmem>>, vector<1x64x128xf32>
    %67 = vector.shape_cast %66 : vector<1x64x128xf32> to vector<64x128xf32>
    %cst_69 = arith.constant dense<0.000000e+00> : vector<32x128xf32>
    %68 = tpu.matmul %65, %67, %cst_69 {dimension_numbers = #tpu.dot_dimension_numbers<[1], [0], [0], [1], [0, 0, 1, 1], [], []>} : vector<32x64xf32>, vector<64x128xf32>, vector<32x128xf32> -> vector<32x128xf32>
    %69 = arith.addf %62, %68 : vector<32x128xf32>
    %c0_70 = arith.constant 0 : index
    %c0_71 = arith.constant 0 : index
    %70 = vector.load %arg6[%c0_70, %c0_71] : memref<1x128xf32, #tpu.memory_space<vmem>>, vector<1x128xf32>
    %71 = vector.broadcast %70 : vector<1x128xf32> to vector<32x128xf32>
    %72 = arith.addf %69, %71 : vector<32x128xf32>
    %cst_72 = arith.constant 0.000000e+00 : f32
    %73 = vector.broadcast %cst_72 : f32 to vector<32x128xf32>
    %74 = arith.maximumf %72, %73 : vector<32x128xf32>
    %c0_73 = arith.constant 0 : index
    %c0_74 = arith.constant 0 : index
    %c0_75 = arith.constant 0 : index
    %75 = vector.load %arg7[%c0_73, %c0_74, %c0_75] : memref<9x8x32xf32, #tpu.memory_space<vmem>>, vector<1x8x32xf32>
    %76 = vector.shape_cast %75 : vector<1x8x32xf32> to vector<8x32xf32>
    %cst_76 = arith.constant dense<0.000000e+00> : vector<8x128xf32>
    %77 = tpu.matmul %76, %74, %cst_76 {dimension_numbers = #tpu.dot_dimension_numbers<[1], [0], [0], [1], [0, 0, 1, 1], [], []>} : vector<8x32xf32>, vector<32x128xf32>, vector<8x128xf32> -> vector<8x128xf32>
    %c0_77 = arith.constant 0 : index
    %c0_78 = arith.constant 0 : index
    %c0_79 = arith.constant 0 : index
    %78 = vector.load %arg8[%c0_77, %c0_78, %c0_79] : memref<9x128x256xf32, #tpu.memory_space<vmem>>, vector<1x128x256xf32>
    %79 = vector.shape_cast %78 : vector<1x128x256xf32> to vector<128x256xf32>
    %cst_80 = arith.constant dense<0.000000e+00> : vector<8x256xf32>
    %80 = tpu.matmul %77, %79, %cst_80 {dimension_numbers = #tpu.dot_dimension_numbers<[1], [0], [0], [1], [0, 0, 1, 1], [], []>} : vector<8x128xf32>, vector<128x256xf32>, vector<8x256xf32> -> vector<8x256xf32>
    %c1_81 = arith.constant 1 : index
    %c0_82 = arith.constant 0 : index
    %c0_83 = arith.constant 0 : index
    %81 = vector.load %arg7[%c1_81, %c0_82, %c0_83] : memref<9x8x32xf32, #tpu.memory_space<vmem>>, vector<1x8x32xf32>
    %82 = vector.shape_cast %81 : vector<1x8x32xf32> to vector<8x32xf32>
    %cst_84 = arith.constant dense<0.000000e+00> : vector<8x128xf32>
    %83 = tpu.matmul %82, %74, %cst_84 {dimension_numbers = #tpu.dot_dimension_numbers<[1], [0], [0], [1], [0, 0, 1, 1], [], []>} : vector<8x32xf32>, vector<32x128xf32>, vector<8x128xf32> -> vector<8x128xf32>
    %c1_85 = arith.constant 1 : index
    %c0_86 = arith.constant 0 : index
    %c0_87 = arith.constant 0 : index
    %84 = vector.load %arg8[%c1_85, %c0_86, %c0_87] : memref<9x128x256xf32, #tpu.memory_space<vmem>>, vector<1x128x256xf32>
    %85 = vector.shape_cast %84 : vector<1x128x256xf32> to vector<128x256xf32>
    %cst_88 = arith.constant dense<0.000000e+00> : vector<8x256xf32>
    %86 = tpu.matmul %83, %85, %cst_88 {dimension_numbers = #tpu.dot_dimension_numbers<[1], [0], [0], [1], [0, 0, 1, 1], [], []>} : vector<8x128xf32>, vector<128x256xf32>, vector<8x256xf32> -> vector<8x256xf32>
    %87 = arith.addf %80, %86 : vector<8x256xf32>
    %c2_89 = arith.constant 2 : index
    %c0_90 = arith.constant 0 : index
    %c0_91 = arith.constant 0 : index
    %88 = vector.load %arg7[%c2_89, %c0_90, %c0_91] : memref<9x8x32xf32, #tpu.memory_space<vmem>>, vector<1x8x32xf32>
    %89 = vector.shape_cast %88 : vector<1x8x32xf32> to vector<8x32xf32>
    %cst_92 = arith.constant dense<0.000000e+00> : vector<8x128xf32>
    %90 = tpu.matmul %89, %74, %cst_92 {dimension_numbers = #tpu.dot_dimension_numbers<[1], [0], [0], [1], [0, 0, 1, 1], [], []>} : vector<8x32xf32>, vector<32x128xf32>, vector<8x128xf32> -> vector<8x128xf32>
    %c2_93 = arith.constant 2 : index
    %c0_94 = arith.constant 0 : index
    %c0_95 = arith.constant 0 : index
    %91 = vector.load %arg8[%c2_93, %c0_94, %c0_95] : memref<9x128x256xf32, #tpu.memory_space<vmem>>, vector<1x128x256xf32>
    %92 = vector.shape_cast %91 : vector<1x128x256xf32> to vector<128x256xf32>
    %cst_96 = arith.constant dense<0.000000e+00> : vector<8x256xf32>
    %93 = tpu.matmul %90, %92, %cst_96 {dimension_numbers = #tpu.dot_dimension_numbers<[1], [0], [0], [1], [0, 0, 1, 1], [], []>} : vector<8x128xf32>, vector<128x256xf32>, vector<8x256xf32> -> vector<8x256xf32>
    %94 = arith.addf %87, %93 : vector<8x256xf32>
    %c3_97 = arith.constant 3 : index
    %c0_98 = arith.constant 0 : index
    %c0_99 = arith.constant 0 : index
    %95 = vector.load %arg7[%c3_97, %c0_98, %c0_99] : memref<9x8x32xf32, #tpu.memory_space<vmem>>, vector<1x8x32xf32>
    %96 = vector.shape_cast %95 : vector<1x8x32xf32> to vector<8x32xf32>
    %cst_100 = arith.constant dense<0.000000e+00> : vector<8x128xf32>
    %97 = tpu.matmul %96, %74, %cst_100 {dimension_numbers = #tpu.dot_dimension_numbers<[1], [0], [0], [1], [0, 0, 1, 1], [], []>} : vector<8x32xf32>, vector<32x128xf32>, vector<8x128xf32> -> vector<8x128xf32>
    %c3_101 = arith.constant 3 : index
    %c0_102 = arith.constant 0 : index
    %c0_103 = arith.constant 0 : index
    %98 = vector.load %arg8[%c3_101, %c0_102, %c0_103] : memref<9x128x256xf32, #tpu.memory_space<vmem>>, vector<1x128x256xf32>
    %99 = vector.shape_cast %98 : vector<1x128x256xf32> to vector<128x256xf32>
    %cst_104 = arith.constant dense<0.000000e+00> : vector<8x256xf32>
    %100 = tpu.matmul %97, %99, %cst_104 {dimension_numbers = #tpu.dot_dimension_numbers<[1], [0], [0], [1], [0, 0, 1, 1], [], []>} : vector<8x128xf32>, vector<128x256xf32>, vector<8x256xf32> -> vector<8x256xf32>
    %101 = arith.addf %94, %100 : vector<8x256xf32>
    %c4_105 = arith.constant 4 : index
    %c0_106 = arith.constant 0 : index
    %c0_107 = arith.constant 0 : index
    %102 = vector.load %arg7[%c4_105, %c0_106, %c0_107] : memref<9x8x32xf32, #tpu.memory_space<vmem>>, vector<1x8x32xf32>
    %103 = vector.shape_cast %102 : vector<1x8x32xf32> to vector<8x32xf32>
    %cst_108 = arith.constant dense<0.000000e+00> : vector<8x128xf32>
    %104 = tpu.matmul %103, %74, %cst_108 {dimension_numbers = #tpu.dot_dimension_numbers<[1], [0], [0], [1], [0, 0, 1, 1], [], []>} : vector<8x32xf32>, vector<32x128xf32>, vector<8x128xf32> -> vector<8x128xf32>
    %c4_109 = arith.constant 4 : index
    %c0_110 = arith.constant 0 : index
    %c0_111 = arith.constant 0 : index
    %105 = vector.load %arg8[%c4_109, %c0_110, %c0_111] : memref<9x128x256xf32, #tpu.memory_space<vmem>>, vector<1x128x256xf32>
    %106 = vector.shape_cast %105 : vector<1x128x256xf32> to vector<128x256xf32>
    %cst_112 = arith.constant dense<0.000000e+00> : vector<8x256xf32>
    %107 = tpu.matmul %104, %106, %cst_112 {dimension_numbers = #tpu.dot_dimension_numbers<[1], [0], [0], [1], [0, 0, 1, 1], [], []>} : vector<8x128xf32>, vector<128x256xf32>, vector<8x256xf32> -> vector<8x256xf32>
    %108 = arith.addf %101, %107 : vector<8x256xf32>
    %c5_113 = arith.constant 5 : index
    %c0_114 = arith.constant 0 : index
    %c0_115 = arith.constant 0 : index
    %109 = vector.load %arg7[%c5_113, %c0_114, %c0_115] : memref<9x8x32xf32, #tpu.memory_space<vmem>>, vector<1x8x32xf32>
    %110 = vector.shape_cast %109 : vector<1x8x32xf32> to vector<8x32xf32>
    %cst_116 = arith.constant dense<0.000000e+00> : vector<8x128xf32>
    %111 = tpu.matmul %110, %74, %cst_116 {dimension_numbers = #tpu.dot_dimension_numbers<[1], [0], [0], [1], [0, 0, 1, 1], [], []>} : vector<8x32xf32>, vector<32x128xf32>, vector<8x128xf32> -> vector<8x128xf32>
    %c5_117 = arith.constant 5 : index
    %c0_118 = arith.constant 0 : index
    %c0_119 = arith.constant 0 : index
    %112 = vector.load %arg8[%c5_117, %c0_118, %c0_119] : memref<9x128x256xf32, #tpu.memory_space<vmem>>, vector<1x128x256xf32>
    %113 = vector.shape_cast %112 : vector<1x128x256xf32> to vector<128x256xf32>
    %cst_120 = arith.constant dense<0.000000e+00> : vector<8x256xf32>
    %114 = tpu.matmul %111, %113, %cst_120 {dimension_numbers = #tpu.dot_dimension_numbers<[1], [0], [0], [1], [0, 0, 1, 1], [], []>} : vector<8x128xf32>, vector<128x256xf32>, vector<8x256xf32> -> vector<8x256xf32>
    %115 = arith.addf %108, %114 : vector<8x256xf32>
    %c6_121 = arith.constant 6 : index
    %c0_122 = arith.constant 0 : index
    %c0_123 = arith.constant 0 : index
    %116 = vector.load %arg7[%c6_121, %c0_122, %c0_123] : memref<9x8x32xf32, #tpu.memory_space<vmem>>, vector<1x8x32xf32>
    %117 = vector.shape_cast %116 : vector<1x8x32xf32> to vector<8x32xf32>
    %cst_124 = arith.constant dense<0.000000e+00> : vector<8x128xf32>
    %118 = tpu.matmul %117, %74, %cst_124 {dimension_numbers = #tpu.dot_dimension_numbers<[1], [0], [0], [1], [0, 0, 1, 1], [], []>} : vector<8x32xf32>, vector<32x128xf32>, vector<8x128xf32> -> vector<8x128xf32>
    %c6_125 = arith.constant 6 : index
    %c0_126 = arith.constant 0 : index
    %c0_127 = arith.constant 0 : index
    %119 = vector.load %arg8[%c6_125, %c0_126, %c0_127] : memref<9x128x256xf32, #tpu.memory_space<vmem>>, vector<1x128x256xf32>
    %120 = vector.shape_cast %119 : vector<1x128x256xf32> to vector<128x256xf32>
    %cst_128 = arith.constant dense<0.000000e+00> : vector<8x256xf32>
    %121 = tpu.matmul %118, %120, %cst_128 {dimension_numbers = #tpu.dot_dimension_numbers<[1], [0], [0], [1], [0, 0, 1, 1], [], []>} : vector<8x128xf32>, vector<128x256xf32>, vector<8x256xf32> -> vector<8x256xf32>
    %122 = arith.addf %115, %121 : vector<8x256xf32>
    %c7_129 = arith.constant 7 : index
    %c0_130 = arith.constant 0 : index
    %c0_131 = arith.constant 0 : index
    %123 = vector.load %arg7[%c7_129, %c0_130, %c0_131] : memref<9x8x32xf32, #tpu.memory_space<vmem>>, vector<1x8x32xf32>
    %124 = vector.shape_cast %123 : vector<1x8x32xf32> to vector<8x32xf32>
    %cst_132 = arith.constant dense<0.000000e+00> : vector<8x128xf32>
    %125 = tpu.matmul %124, %74, %cst_132 {dimension_numbers = #tpu.dot_dimension_numbers<[1], [0], [0], [1], [0, 0, 1, 1], [], []>} : vector<8x32xf32>, vector<32x128xf32>, vector<8x128xf32> -> vector<8x128xf32>
    %c7_133 = arith.constant 7 : index
    %c0_134 = arith.constant 0 : index
    %c0_135 = arith.constant 0 : index
    %126 = vector.load %arg8[%c7_133, %c0_134, %c0_135] : memref<9x128x256xf32, #tpu.memory_space<vmem>>, vector<1x128x256xf32>
    %127 = vector.shape_cast %126 : vector<1x128x256xf32> to vector<128x256xf32>
    %cst_136 = arith.constant dense<0.000000e+00> : vector<8x256xf32>
    %128 = tpu.matmul %125, %127, %cst_136 {dimension_numbers = #tpu.dot_dimension_numbers<[1], [0], [0], [1], [0, 0, 1, 1], [], []>} : vector<8x128xf32>, vector<128x256xf32>, vector<8x256xf32> -> vector<8x256xf32>
    %129 = arith.addf %122, %128 : vector<8x256xf32>
    %c8_137 = arith.constant 8 : index
    %c0_138 = arith.constant 0 : index
    %c0_139 = arith.constant 0 : index
    %130 = vector.load %arg7[%c8_137, %c0_138, %c0_139] : memref<9x8x32xf32, #tpu.memory_space<vmem>>, vector<1x8x32xf32>
    %131 = vector.shape_cast %130 : vector<1x8x32xf32> to vector<8x32xf32>
    %cst_140 = arith.constant dense<0.000000e+00> : vector<8x128xf32>
    %132 = tpu.matmul %131, %74, %cst_140 {dimension_numbers = #tpu.dot_dimension_numbers<[1], [0], [0], [1], [0, 0, 1, 1], [], []>} : vector<8x32xf32>, vector<32x128xf32>, vector<8x128xf32> -> vector<8x128xf32>
    %c8_141 = arith.constant 8 : index
    %c0_142 = arith.constant 0 : index
    %c0_143 = arith.constant 0 : index
    %133 = vector.load %arg8[%c8_141, %c0_142, %c0_143] : memref<9x128x256xf32, #tpu.memory_space<vmem>>, vector<1x128x256xf32>
    %134 = vector.shape_cast %133 : vector<1x128x256xf32> to vector<128x256xf32>
    %cst_144 = arith.constant dense<0.000000e+00> : vector<8x256xf32>
    %135 = tpu.matmul %132, %134, %cst_144 {dimension_numbers = #tpu.dot_dimension_numbers<[1], [0], [0], [1], [0, 0, 1, 1], [], []>} : vector<8x128xf32>, vector<128x256xf32>, vector<8x256xf32> -> vector<8x256xf32>
    %136 = arith.addf %129, %135 : vector<8x256xf32>
    %c0_145 = arith.constant 0 : index
    %c0_146 = arith.constant 0 : index
    %137 = vector.load %arg9[%c0_145, %c0_146] : memref<1x256xf32, #tpu.memory_space<vmem>>, vector<1x256xf32>
    %138 = vector.broadcast %137 : vector<1x256xf32> to vector<8x256xf32>
    %139 = arith.addf %136, %138 : vector<8x256xf32>
    %cst_147 = arith.constant 0.000000e+00 : f32
    %140 = vector.broadcast %cst_147 : f32 to vector<8x256xf32>
    %141 = arith.maximumf %139, %140 : vector<8x256xf32>
    %c0_148 = arith.constant 0 : index
    %c0_149 = arith.constant 0 : index
    %142 = vector.load %arg10[%c0_148, %c0_149] : memref<2x8xf32, #tpu.memory_space<vmem>>, vector<2x8xf32>
    %cst_150 = arith.constant dense<0.000000e+00> : vector<2x256xf32>
    %143 = tpu.matmul %142, %141, %cst_150 {dimension_numbers = #tpu.dot_dimension_numbers<[1], [0], [0], [1], [0, 0, 1, 1], [], []>} : vector<2x8xf32>, vector<8x256xf32>, vector<2x256xf32> -> vector<2x256xf32>
    %c0_151 = arith.constant 0 : index
    %c0_152 = arith.constant 0 : index
    %144 = vector.load %arg11[%c0_151, %c0_152] : memref<256x512xf32, #tpu.memory_space<vmem>>, vector<256x512xf32>
    %cst_153 = arith.constant dense<0.000000e+00> : vector<2x512xf32>
    %145 = tpu.matmul %143, %144, %cst_153 {dimension_numbers = #tpu.dot_dimension_numbers<[1], [0], [0], [1], [0, 0, 1, 1], [], []>} : vector<2x256xf32>, vector<256x512xf32>, vector<2x512xf32> -> vector<2x512xf32>
    %c0_154 = arith.constant 0 : index
    %c0_155 = arith.constant 0 : index
    %146 = vector.load %arg12[%c0_154, %c0_155] : memref<1x512xf32, #tpu.memory_space<vmem>>, vector<1x512xf32>
    %147 = vector.broadcast %146 : vector<1x512xf32> to vector<2x512xf32>
    %148 = arith.addf %145, %147 : vector<2x512xf32>
    %c0_156 = arith.constant 0 : index
    %c0_157 = arith.constant 0 : index
    %149 = vector.load %arg14[%c0_156, %c0_157] : memref<147x512xf32, #tpu.memory_space<vmem>>, vector<147x512xf32>
    %cst_158 = arith.constant dense<0.000000e+00> : vector<128x512xf32>
    %150 = tpu.matmul %0, %149, %cst_158 {dimension_numbers = #tpu.dot_dimension_numbers<[1], [0], [0], [1], [0, 0, 1, 1], [], []>} : vector<128x147xf32>, vector<147x512xf32>, vector<128x512xf32> -> vector<128x512xf32>
    %c0_159 = arith.constant 0 : index
    %c0_160 = arith.constant 0 : index
    %151 = vector.load %arg13[%c0_159, %c0_160] : memref<2x128xf32, #tpu.memory_space<vmem>>, vector<2x128xf32>
    %cst_161 = arith.constant dense<0.000000e+00> : vector<2x512xf32>
    %152 = tpu.matmul %151, %150, %cst_161 {dimension_numbers = #tpu.dot_dimension_numbers<[1], [0], [0], [1], [0, 0, 1, 1], [], []>} : vector<2x128xf32>, vector<128x512xf32>, vector<2x512xf32> -> vector<2x512xf32>
    %c0_162 = arith.constant 0 : index
    %c0_163 = arith.constant 0 : index
    %153 = vector.load %arg15[%c0_162, %c0_163] : memref<1x512xf32, #tpu.memory_space<vmem>>, vector<1x512xf32>
    %154 = vector.broadcast %153 : vector<1x512xf32> to vector<2x512xf32>
    %155 = arith.addf %152, %154 : vector<2x512xf32>
    %c0_164 = arith.constant 0 : index
    %c0_165 = arith.constant 0 : index
    %156 = vector.load %arg16[%c0_164, %c0_165] : memref<2x1024xf32, #tpu.memory_space<vmem>>, vector<2x512xf32>
    tpu.vector_store %arg16[%c0_164, %c0_165], %155 {strides = array<i32>} : memref<2x1024xf32, #tpu.memory_space<vmem>>, vector<2x512xf32>,
    %c0_166 = arith.constant 0 : index
    %c512 = arith.constant 512 : index
    %157 = vector.load %arg16[%c0_166, %c512] : memref<2x1024xf32, #tpu.memory_space<vmem>>, vector<2x512xf32>
    tpu.vector_store %arg16[%c0_166, %c512], %148 {strides = array<i32>} : memref<2x1024xf32, #tpu.memory_space<vmem>>, vector<2x512xf32>,
    return
  }
  func.func @transform_0(%arg0: i32) -> (i32, i32) {
    %c0_i32 = arith.constant 0 : i32
    %c0_i32_0 = arith.constant 0 : i32
    %c0_i32_1 = arith.constant 0 : i32
    return %c0_i32, %c0_i32_0 : i32, i32
  }
  func.func @transform_1(%arg0: i32) -> (i32, i32) {
    %c0_i32 = arith.constant 0 : i32
    %c0_i32_0 = arith.constant 0 : i32
    %c0_i32_1 = arith.constant 0 : i32
    return %c0_i32, %c0_i32_0 : i32, i32
  }
  func.func @transform_2(%arg0: i32) -> (i32, i32) {
    %c0_i32 = arith.constant 0 : i32
    %c0_i32_0 = arith.constant 0 : i32
    %c0_i32_1 = arith.constant 0 : i32
    return %c0_i32, %c0_i32_0 : i32, i32
  }
  func.func @transform_3(%arg0: i32) -> (i32, i32, i32) {
    %c0_i32 = arith.constant 0 : i32
    %c0_i32_0 = arith.constant 0 : i32
    %c0_i32_1 = arith.constant 0 : i32
    %c0_i32_2 = arith.constant 0 : i32
    return %c0_i32, %c0_i32_0, %c0_i32_1 : i32, i32, i32
  }
  func.func @transform_4(%arg0: i32) -> (i32, i32, i32) {
    %c0_i32 = arith.constant 0 : i32
    %c0_i32_0 = arith.constant 0 : i32
    %c0_i32_1 = arith.constant 0 : i32
    %c0_i32_2 = arith.constant 0 : i32
    return %c0_i32, %c0_i32_0, %c0_i32_1 : i32, i32, i32
  }
  func.func @transform_5(%arg0: i32) -> (i32, i32) {
    %c0_i32 = arith.constant 0 : i32
    %c0_i32_0 = arith.constant 0 : i32
    %c0_i32_1 = arith.constant 0 : i32
    return %c0_i32, %c0_i32_0 : i32, i32
  }
  func.func @transform_6(%arg0: i32) -> (i32, i32, i32) {
    %c0_i32 = arith.constant 0 : i32
    %c0_i32_0 = arith.constant 0 : i32
    %c0_i32_1 = arith.constant 0 : i32
    %c0_i32_2 = arith.constant 0 : i32
    return %c0_i32, %c0_i32_0, %c0_i32_1 : i32, i32, i32
  }
  func.func @transform_7(%arg0: i32) -> (i32, i32, i32) {
    %c0_i32 = arith.constant 0 : i32
    %c0_i32_0 = arith.constant 0 : i32
    %c0_i32_1 = arith.constant 0 : i32
    %c0_i32_2 = arith.constant 0 : i32
    return %c0_i32, %c0_i32_0, %c0_i32_1 : i32, i32, i32
  }
  func.func @transform_8(%arg0: i32) -> (i32, i32) {
    %c0_i32 = arith.constant 0 : i32
    %c0_i32_0 = arith.constant 0 : i32
    %c0_i32_1 = arith.constant 0 : i32
    return %c0_i32, %c0_i32_0 : i32, i32
  }
  func.func @transform_9(%arg0: i32) -> (i32, i32) {
    %c0_i32 = arith.constant 0 : i32
    %c0_i32_0 = arith.constant 0 : i32
    %c0_i32_1 = arith.constant 0 : i32
    return %c0_i32, %c0_i32_0 : i32, i32
  }
  func.func @transform_10(%arg0: i32) -> (i32, i32) {
    %c0_i32 = arith.constant 0 : i32
    %c0_i32_0 = arith.constant 0 : i32
    %c0_i32_1 = arith.constant 0 : i32
    return %c0_i32, %c0_i32_0 : i32, i32
  }
  func.func @transform_11(%arg0: i32) -> (i32, i32) {
    %c0_i32 = arith.constant 0 : i32
    %c0_i32_0 = arith.constant 0 : i32
    %c0_i32_1 = arith.constant 0 : i32
    return %c0_i32, %c0_i32_0 : i32, i32
  }
  func.func @transform_12(%arg0: i32) -> (i32, i32) {
    %c0_i32 = arith.constant 0 : i32
    %c0_i32_0 = arith.constant 0 : i32
    %c0_i32_1 = arith.constant 0 : i32
    return %c0_i32, %c0_i32_0 : i32, i32
  }
  func.func @transform_13(%arg0: i32) -> (i32, i32) {
    %c0_i32 = arith.constant 0 : i32
    %c0_i32_0 = arith.constant 0 : i32
    %c0_i32_1 = arith.constant 0 : i32
    return %c0_i32, %c0_i32_0 : i32, i32
  }
  func.func @transform_14(%arg0: i32) -> (i32, i32) {
    %c0_i32 = arith.constant 0 : i32
    %c0_i32_0 = arith.constant 0 : i32
    %c0_i32_1 = arith.constant 0 : i32
    return %c0_i32, %c0_i32_0 : i32, i32
  }
  func.func @transform_15(%arg0: i32) -> (i32, i32) {
    %c0_i32 = arith.constant 0 : i32
    %c0_i32_0 = arith.constant 0 : i32
    %c0_i32_1 = arith.constant 0 : i32
    return %c0_i32, %c0_i32_0 : i32, i32
  }
}

</mosaic_0001>

<llo_original>
// kernel: tpu_custom_call.1
$region0: #{tpu_custom_call.1}
  #allocation0 [shape = 'u32[]', space=smem, size = 0x4, offset = 0x4, fixed_abs, tag = 'smem constant byte address 0x4 - core index']
  #allocation1 [shape = 'u32[144,128]{1,0:T(1,128)}', space=vmem, size = 0x12000, scoped, tag = 'internal scratch']
  %s0 = inlined_call_operand.vmem [shape: f32[128,147], index: 0, kind: input, shape index: {}]
  %s1 = inlined_call_operand.vmem [shape: f32[147,64], index: 1, kind: input, shape index: {}]
  %s2 = inlined_call_operand.hbm [shape: f32[1,64], index: 2, kind: input, shape index: {}]
  %s3 = inlined_call_operand.hbm [shape: f32[9,32,128], index: 3, kind: input, shape index: {}]
  %s4 = inlined_call_operand.hbm [shape: f32[9,64,128], index: 4, kind: input, shape index: {}]
  %s5 = inlined_call_operand.hbm [shape: f32[1,128], index: 5, kind: input, shape index: {}]
  %s6 = inlined_call_operand.hbm [shape: f32[9,8,32], index: 6, kind: input, shape index: {}]
  %s7 = inlined_call_operand.hbm [shape: f32[9,128,256], index: 7, kind: input, shape index: {}]
  %s8 = inlined_call_operand.hbm [shape: f32[1,256], index: 8, kind: input, shape index: {}]
  %s9 = inlined_call_operand.hbm [shape: f32[2,8], index: 9, kind: input, shape index: {}]
  %s10 = inlined_call_operand.hbm [shape: f32[256,512], index: 10, kind: input, shape index: {}]
  %s11 = inlined_call_operand.hbm [shape: f32[1,512], index: 11, kind: input, shape index: {}]
  %s12 = inlined_call_operand.hbm [shape: f32[2,128], index: 12, kind: input, shape index: {}]
  %s13 = inlined_call_operand.hbm [shape: f32[147,512], index: 13, kind: input, shape index: {}]
  %s14 = inlined_call_operand.hbm [shape: f32[1,512], index: 14, kind: input, shape index: {}]
  %s15 = inlined_call_operand.hbm [shape: f32[2,1024], index: 15, kind: output, shape index: {}]
  %s16 = sld [smem:[#allocation0]]
  $region122: #{tpu_custom_call.1} parent=0
    _
  %s18 = ssub.s32 1, %s16
  %s19 = scalar_select 0, %s18, %s16
  $region1: #{tpu_custom_call.1} parent=0
    #allocation2 [shape = 'u8[512]{0}', space=vmem, size = 0x400, scoped, tag = 'input window, operand 2, single buffered']
    #allocation3 [shape = 's32[1]{0}', space=sflag, size = 0x4, scoped, tag = 'scoped memory for tpu_custom_call.1']
    #allocation4 [shape = 's32[1]{0}', space=sflag, size = 0x4, scoped, tag = 'scoped memory for tpu_custom_call.1']
    #allocation5 [shape = 'u8[147456]{0}', space=vmem, size = 0x24000, scoped, tag = 'input window, operand 3, single buffered']
    #allocation6 [shape = 's32[1]{0}', space=sflag, size = 0x4, scoped, tag = 'scoped memory for tpu_custom_call.1']
    #allocation7 [shape = 'u8[294912]{0}', space=vmem, size = 0x48000, scoped, tag = 'input window, operand 4, single buffered']
    #allocation8 [shape = 'u8[512]{0}', space=vmem, size = 0x400, scoped, tag = 'input window, operand 5, single buffered']
    #allocation9 [shape = 's32[1]{0}', space=sflag, size = 0x4, scoped, tag = 'scoped memory for tpu_custom_call.1']
    #allocation10 [shape = 'u8[36864]{0}', space=vmem, size = 0x9000, scoped, tag = 'input window, operand 6, single buffered']
    #allocation11 [shape = 'u8[1179648]{0}', space=vmem, size = 0x120000, scoped, tag = 'input window, operand 7, single buffered']
    #allocation12 [shape = 's32[1]{0}', space=sflag, size = 0x4, scoped, tag = 'scoped memory for tpu_custom_call.1']
    #allocation13 [shape = 'u8[1024]{0}', space=vmem, size = 0x400, scoped, tag = 'input window, operand 8, single buffered']
    #allocation14 [shape = 'u8[1024]{0}', space=vmem, size = 0x400, scoped, tag = 'input window, operand 9, single buffered']
    #allocation15 [shape = 's32[1]{0}', space=sflag, size = 0x4, scoped, tag = 'scoped memory for tpu_custom_call.1']
    #allocation16 [shape = 'u8[524288]{0}', space=vmem, size = 0x80000, scoped, tag = 'input window, operand 10, single buffered']
    #allocation17 [shape = 'u8[2048]{0}', space=vmem, size = 0x800, scoped, tag = 'input window, operand 11, single buffered']
    #allocation18 [shape = 's32[1]{0}', space=sflag, size = 0x4, scoped, tag = 'scoped memory for tpu_custom_call.1']
    #allocation19 [shape = 'u8[1024]{0}', space=vmem, size = 0x400, scoped, tag = 'input window, operand 12, single buffered']
    #allocation20 [shape = 'u8[311296]{0}', space=vmem, size = 0x4c000, scoped, tag = 'input window, operand 13, single buffered']
    #allocation21 [shape = 's32[1]{0}', space=sflag, size = 0x4, scoped, tag = 'scoped memory for tpu_custom_call.1']
    #allocation22 [shape = 'u8[2048]{0}', space=vmem, size = 0x800, scoped, tag = 'input window, operand 14, single buffered']
    #allocation23 [shape = 'u8[8192]{0}', space=vmem, size = 0x2000, scoped, tag = 'output window, operand 0, single buffered']
    %20 = vsyncpa [#allocation3], 0
    %21 = vsyncpa [#allocation6], 0
    %22 = vsyncpa [#allocation9], 0
    %23 = vsyncpa [#allocation12], 0
    %24 = vsyncpa [#allocation15], 0
    %25 = vsyncpa [#allocation18], 0
    %26 = vsyncpa [#allocation21], 0
    %27 = vsyncpa [#allocation4], 0
    // Predicated region
    $region2: #{tpu_custom_call.1} parent=1 // pred_check
      _
    $region3: #{tpu_custom_call.1} parent=1 // pred_check_branch
      %29 = sbr.rel (0) target = $region5
    $region4: #{tpu_custom_call.1} parent=1 // pred_region
      _
    $region5: #{tpu_custom_call.1} parent=1 // pred_fallthru
      _
    // Predicated region
    $region6: #{tpu_custom_call.1} parent=1 // pred_check
      _
    $region7: #{tpu_custom_call.1} parent=1 // pred_check_branch
      %31 = sbr.rel (0) target = $region9
    $region8: #{tpu_custom_call.1} parent=1 // pred_region
      _
    $region9: #{tpu_custom_call.1} parent=1 // pred_fallthru
      _
    // Predicated region
    $region10: #{tpu_custom_call.1} parent=1 // pred_check
      _
    $region11: #{tpu_custom_call.1} parent=1 // pred_check_branch
      %33 = sbr.rel (0) target = $region13
    $region12: #{tpu_custom_call.1} parent=1 // pred_region
      %s35 = ssub.s32 16, 16
      %36 = vsyncadd [#allocation3], %s35
      %s38 = sshll.u32 [#allocation2], 4
      %s39 = int_to_ptr.vmem [resolvable:$true] %s38
      %41 = dma.hbm_to_vmem [thread:$0]  %s2, 16, %s39, [#allocation3]
    $region13: #{tpu_custom_call.1} parent=1 // pred_fallthru
      _
    // Predicated region
    $region14: #{tpu_custom_call.1} parent=1 // pred_check
      _
    $region15: #{tpu_custom_call.1} parent=1 // pred_check_branch
      %43 = sbr.rel (0) target = $region17
    $region16: #{tpu_custom_call.1} parent=1 // pred_region
      %s45 = ssub.s32 4608, 4608
      %46 = vsyncadd [#allocation6], %s45
      %s47 = sshll.u32 [#allocation5], 4
      %s48 = int_to_ptr.vmem [resolvable:$true] %s47
      %53 = dma.hbm_to_vmem [thread:$0]  %s3, 4608, %s48, [#allocation6], 128, 128, 8
    $region17: #{tpu_custom_call.1} parent=1 // pred_fallthru
      _
    // Predicated region
    $region18: #{tpu_custom_call.1} parent=1 // pred_check
      _
    $region19: #{tpu_custom_call.1} parent=1 // pred_check_branch
      %55 = sbr.rel (0) target = $region21
    $region20: #{tpu_custom_call.1} parent=1 // pred_region
      %s57 = ssub.s32 9216, 9216
      %58 = vsyncadd [#allocation6], %s57
      %s59 = sshll.u32 [#allocation7], 4
      %s60 = int_to_ptr.vmem [resolvable:$true] %s59
      %65 = dma.hbm_to_vmem [thread:$0]  %s4, 9216, %s60, [#allocation6], 128, 128, 8
    $region21: #{tpu_custom_call.1} parent=1 // pred_fallthru
      _
    // Predicated region
    $region22: #{tpu_custom_call.1} parent=1 // pred_check
      _
    $region23: #{tpu_custom_call.1} parent=1 // pred_check_branch
      %67 = sbr.rel (0) target = $region25
    $region24: #{tpu_custom_call.1} parent=1 // pred_region
      %s69 = ssub.s32 16, 16
      %70 = vsyncadd [#allocation9], %s69
      %s72 = sshll.u32 [#allocation8], 4
      %s73 = int_to_ptr.vmem [resolvable:$true] %s72
      %75 = dma.hbm_to_vmem [thread:$0]  %s5, 16, %s73, [#allocation9]
    $region25: #{tpu_custom_call.1} parent=1 // pred_fallthru
      _
    // Predicated region
    $region26: #{tpu_custom_call.1} parent=1 // pred_check
      _
    $region27: #{tpu_custom_call.1} parent=1 // pred_check_branch
      %77 = sbr.rel (0) target = $region29
    $region28: #{tpu_custom_call.1} parent=1 // pred_region
      %s79 = ssub.s32 1152, 1152
      %80 = vsyncadd [#allocation9], %s79
      %s81 = sshll.u32 [#allocation10], 4
      %s82 = int_to_ptr.vmem [resolvable:$true] %s81
      %87 = dma.hbm_to_vmem [thread:$0]  %s6, 1152, %s82, [#allocation9], 128, 128, 8
    $region29: #{tpu_custom_call.1} parent=1 // pred_fallthru
      _
    // Predicated region
    $region30: #{tpu_custom_call.1} parent=1 // pred_check
      _
    $region31: #{tpu_custom_call.1} parent=1 // pred_check_branch
      %89 = sbr.rel (0) target = $region33
    $region32: #{tpu_custom_call.1} parent=1 // pred_region
      %s91 = ssub.s32 36864, 36864
      %92 = vsyncadd [#allocation12], %s91
      %s93 = sshll.u32 [#allocation11], 4
      %s94 = int_to_ptr.vmem [resolvable:$true] %s93
      %99 = dma.hbm_to_vmem [thread:$0]  %s7, 36864, %s94, [#allocation12], 256, 256, 16
    $region33: #{tpu_custom_call.1} parent=1 // pred_fallthru
      _
    // Predicated region
    $region34: #{tpu_custom_call.1} parent=1 // pred_check
      _
    $region35: #{tpu_custom_call.1} parent=1 // pred_check_branch
      %101 = sbr.rel (0) target = $region37
    $region36: #{tpu_custom_call.1} parent=1 // pred_region
      %s103 = ssub.s32 32, 32
      %104 = vsyncadd [#allocation12], %s103
      %s106 = sshll.u32 [#allocation13], 4
      %s107 = int_to_ptr.vmem [resolvable:$true] %s106
      %109 = dma.hbm_to_vmem [thread:$0]  %s8, 32, %s107, [#allocation12]
    $region37: #{tpu_custom_call.1} parent=1 // pred_fallthru
      _
    // Predicated region
    $region38: #{tpu_custom_call.1} parent=1 // pred_check
      _
    $region39: #{tpu_custom_call.1} parent=1 // pred_check_branch
      %111 = sbr.rel (0) target = $region41
    $region40: #{tpu_custom_call.1} parent=1 // pred_region
      %s113 = ssub.s32 32, 32
      %114 = vsyncadd [#allocation15], %s113
      %s116 = sshll.u32 [#allocation14], 4
      %s117 = int_to_ptr.vmem [resolvable:$true] %s116
      %119 = dma.hbm_to_vmem [thread:$0]  %s9, 32, %s117, [#allocation15]
    $region41: #{tpu_custom_call.1} parent=1 // pred_fallthru
      _
    // Predicated region
    $region42: #{tpu_custom_call.1} parent=1 // pred_check
      _
    $region43: #{tpu_custom_call.1} parent=1 // pred_check_branch
      %121 = sbr.rel (0) target = $region45
    $region44: #{tpu_custom_call.1} parent=1 // pred_region
      %s123 = ssub.s32 16384, 16384
      %124 = vsyncadd [#allocation15], %s123
      %s125 = sshll.u32 [#allocation16], 4
      %s126 = int_to_ptr.vmem [resolvable:$true] %s125
      %131 = dma.hbm_to_vmem [thread:$0]  %s10, 16384, %s126, [#allocation15], 512, 512, 32
    $region45: #{tpu_custom_call.1} parent=1 // pred_fallthru
      _
    // Predicated region
    $region46: #{tpu_custom_call.1} parent=1 // pred_check
      _
    $region47: #{tpu_custom_call.1} parent=1 // pred_check_branch
      %133 = sbr.rel (0) target = $region49
    $region48: #{tpu_custom_call.1} parent=1 // pred_region
      %s135 = ssub.s32 64, 64
      %136 = vsyncadd [#allocation18], %s135
      %s138 = sshll.u32 [#allocation17], 4
      %s139 = int_to_ptr.vmem [resolvable:$true] %s138
      %141 = dma.hbm_to_vmem [thread:$0]  %s11, 64, %s139, [#allocation18]
    $region49: #{tpu_custom_call.1} parent=1 // pred_fallthru
      _
    // Predicated region
    $region50: #{tpu_custom_call.1} parent=1 // pred_check
      _
    $region51: #{tpu_custom_call.1} parent=1 // pred_check_branch
      %143 = sbr.rel (0) target = $region53
    $region52: #{tpu_custom_call.1} parent=1 // pred_region
      %s145 = ssub.s32 32, 32
      %146 = vsyncadd [#allocation18], %s145
      %s148 = sshll.u32 [#allocation19], 4
      %s149 = int_to_ptr.vmem [resolvable:$true] %s148
      %151 = dma.hbm_to_vmem [thread:$0]  %s12, 32, %s149, [#allocation18]
    $region53: #{tpu_custom_call.1} parent=1 // pred_fallthru
      _
    // Predicated region
    $region54: #{tpu_custom_call.1} parent=1 // pred_check
      _
    $region55: #{tpu_custom_call.1} parent=1 // pred_check_branch
      %153 = sbr.rel (0) target = $region57
    $region56: #{tpu_custom_call.1} parent=1 // pred_region
      %s155 = ssub.s32 9728, 9728
      %156 = vsyncadd [#allocation21], %s155
      %s157 = sshll.u32 [#allocation20], 4
      %s158 = int_to_ptr.vmem [resolvable:$true] %s157
      %163 = dma.hbm_to_vmem [thread:$0]  %s13, 9728, %s158, [#allocation21], 512, 512, 32
    $region57: #{tpu_custom_call.1} parent=1 // pred_fallthru
      _
    // Predicated region
    $region58: #{tpu_custom_call.1} parent=1 // pred_check
      _
    $region59: #{tpu_custom_call.1} parent=1 // pred_check_branch
      %165 = sbr.rel (0) target = $region61
    $region60: #{tpu_custom_call.1} parent=1 // pred_region
      %s167 = ssub.s32 64, 64
      %168 = vsyncadd [#allocation21], %s167
      %s170 = sshll.u32 [#allocation22], 4
      %s171 = int_to_ptr.vmem [resolvable:$true] %s170
      %173 = dma.hbm_to_vmem [thread:$0]  %s14, 64, %s171, [#allocation21]
    $region61: #{tpu_custom_call.1} parent=1 // pred_fallthru
      _
    // Predicated region
    $region62: #{tpu_custom_call.1} parent=1 // pred_check
      _
    $region63: #{tpu_custom_call.1} parent=1 // pred_check_branch
      %175 = sbr.rel (0) target = $region65
    $region64: #{tpu_custom_call.1} parent=1 // pred_region
      %176 = dma.done [#allocation3], 16
    $region65: #{tpu_custom_call.1} parent=1 // pred_fallthru
      _
    // Predicated region
    $region66: #{tpu_custom_call.1} parent=1 // pred_check
      _
    $region67: #{tpu_custom_call.1} parent=1 // pred_check_branch
      %178 = sbr.rel (0) target = $region69
    $region68: #{tpu_custom_call.1} parent=1 // pred_region
      %179 = dma.done [#allocation6], 4608
    $region69: #{tpu_custom_call.1} parent=1 // pred_fallthru
      _
    // Predicated region
    $region70: #{tpu_custom_call.1} parent=1 // pred_check
      _
    $region71: #{tpu_custom_call.1} parent=1 // pred_check_branch
      %181 = sbr.rel (0) target = $region73
    $region72: #{tpu_custom_call.1} parent=1 // pred_region
      %182 = dma.done [#allocation6], 9216
    $region73: #{tpu_custom_call.1} parent=1 // pred_fallthru
      _
    // Predicated region
    $region74: #{tpu_custom_call.1} parent=1 // pred_check
      _
    $region75: #{tpu_custom_call.1} parent=1 // pred_check_branch
      %184 = sbr.rel (0) target = $region77
    $region76: #{tpu_custom_call.1} parent=1 // pred_region
      %185 = dma.done [#allocation9], 16
    $region77: #{tpu_custom_call.1} parent=1 // pred_fallthru
      _
    // Predicated region
    $region78: #{tpu_custom_call.1} parent=1 // pred_check
      _
    $region79: #{tpu_custom_call.1} parent=1 // pred_check_branch
      %187 = sbr.rel (0) target = $region81
    $region80: #{tpu_custom_call.1} parent=1 // pred_region
      %188 = dma.done [#allocation9], 1152
    $region81: #{tpu_custom_call.1} parent=1 // pred_fallthru
      _
    // Predicated region
    $region82: #{tpu_custom_call.1} parent=1 // pred_check
      _
    $region83: #{tpu_custom_call.1} parent=1 // pred_check_branch
      %190 = sbr.rel (0) target = $region85
    $region84: #{tpu_custom_call.1} parent=1 // pred_region
      %191 = dma.done [#allocation12], 36864
    $region85: #{tpu_custom_call.1} parent=1 // pred_fallthru
      _
    // Predicated region
    $region86: #{tpu_custom_call.1} parent=1 // pred_check
      _
    $region87: #{tpu_custom_call.1} parent=1 // pred_check_branch
      %193 = sbr.rel (0) target = $region89
    $region88: #{tpu_custom_call.1} parent=1 // pred_region
      %194 = dma.done [#allocation12], 32
    $region89: #{tpu_custom_call.1} parent=1 // pred_fallthru
      _
    // Predicated region
    $region90: #{tpu_custom_call.1} parent=1 // pred_check
      _
    $region91: #{tpu_custom_call.1} parent=1 // pred_check_branch
      %196 = sbr.rel (0) target = $region93
    $region92: #{tpu_custom_call.1} parent=1 // pred_region
      %197 = dma.done [#allocation15], 32
    $region93: #{tpu_custom_call.1} parent=1 // pred_fallthru
      _
    // Predicated region
    $region94: #{tpu_custom_call.1} parent=1 // pred_check
      _
    $region95: #{tpu_custom_call.1} parent=1 // pred_check_branch
      %199 = sbr.rel (0) target = $region97
    $region96: #{tpu_custom_call.1} parent=1 // pred_region
      %200 = dma.done [#allocation15], 16384
    $region97: #{tpu_custom_call.1} parent=1 // pred_fallthru
      _
    // Predicated region
    $region98: #{tpu_custom_call.1} parent=1 // pred_check
      _
    $region99: #{tpu_custom_call.1} parent=1 // pred_check_branch
      %202 = sbr.rel (0) target = $region101
    $region100: #{tpu_custom_call.1} parent=1 // pred_region
      %203 = dma.done [#allocation18], 64
    $region101: #{tpu_custom_call.1} parent=1 // pred_fallthru
      _
    // Predicated region
    $region102: #{tpu_custom_call.1} parent=1 // pred_check
      _
    $region103: #{tpu_custom_call.1} parent=1 // pred_check_branch
      %205 = sbr.rel (0) target = $region105
    $region104: #{tpu_custom_call.1} parent=1 // pred_region
      %206 = dma.done [#allocation18], 32
    $region105: #{tpu_custom_call.1} parent=1 // pred_fallthru
      _
    // Predicated region
    $region106: #{tpu_custom_call.1} parent=1 // pred_check
      _
    $region107: #{tpu_custom_call.1} parent=1 // pred_check_branch
      %208 = sbr.rel (0) target = $region109
    $region108: #{tpu_custom_call.1} parent=1 // pred_region
      %209 = dma.done [#allocation21], 9728
    $region109: #{tpu_custom_call.1} parent=1 // pred_fallthru
      _
    // Predicated region
    $region110: #{tpu_custom_call.1} parent=1 // pred_check
      _
    $region111: #{tpu_custom_call.1} parent=1 // pred_check_branch
      %211 = sbr.rel (0) target = $region113
    $region112: #{tpu_custom_call.1} parent=1 // pred_region
      %212 = dma.done [#allocation21], 64
    $region113: #{tpu_custom_call.1} parent=1 // pred_fallthru
      _
    %v213 = vld [vmem:[%s0] sm:$0xff]
    %v214 = vld [vmem:[%s0 + $0x8] sm:$0xff]
    %v215 = vld [vmem:[%s0 + $0x10] sm:$0xff]
    %v216 = vld [vmem:[%s0 + $0x18] sm:$0xff]
    %v217 = vld [vmem:[%s0 + $0x20] sm:$0xff]
    %v218 = vld [vmem:[%s0 + $0x28] sm:$0xff]
    %v219 = vld [vmem:[%s0 + $0x30] sm:$0xff]
    %v220 = vld [vmem:[%s0 + $0x38] sm:$0xff]
    %v221 = vld [vmem:[%s0 + $0x40] sm:$0xff]
    %v222 = vld [vmem:[%s0 + $0x48] sm:$0xff]
    %v223 = vld [vmem:[%s0 + $0x50] sm:$0xff]
    %v224 = vld [vmem:[%s0 + $0x58] sm:$0xff]
    %v225 = vld [vmem:[%s0 + $0x60] sm:$0xff]
    %v226 = vld [vmem:[%s0 + $0x68] sm:$0xff]
    %v227 = vld [vmem:[%s0 + $0x70] sm:$0xff]
    %v228 = vld [vmem:[%s0 + $0x78] sm:$0xff]
    %v229 = vld [vmem:[%s0 + $0x80] sm:$0xff]
    %v230 = vld [vmem:[%s0 + $0x88] sm:$0xff]
    %v231 = vld [vmem:[%s0 + $0x90] sm:$0xff]
    %v232 = vld [vmem:[%s0 + $0x98] sm:$0xff]
    %v233 = vld [vmem:[%s0 + $0xa0] sm:$0xff]
    %v234 = vld [vmem:[%s0 + $0xa8] sm:$0xff]
    %v235 = vld [vmem:[%s0 + $0xb0] sm:$0xff]
    %v236 = vld [vmem:[%s0 + $0xb8] sm:$0xff]
    %v237 = vld [vmem:[%s0 + $0xc0] sm:$0xff]
    %v238 = vld [vmem:[%s0 + $0xc8] sm:$0xff]
    %v239 = vld [vmem:[%s0 + $0xd0] sm:$0xff]
    %v240 = vld [vmem:[%s0 + $0xd8] sm:$0xff]
    %v241 = vld [vmem:[%s0 + $0xe0] sm:$0xff]
    %v242 = vld [vmem:[%s0 + $0xe8] sm:$0xff]
    %v243 = vld [vmem:[%s0 + $0xf0] sm:$0xff]
    %v244 = vld [vmem:[%s0 + $0xf8] sm:$0xff]
    %v245 = vld [vmem:[%s1] sm:$0xff]
    %v246 = vld [vmem:[%s1 + $0x8] sm:$0xff]
    %v247 = vld [vmem:[%s1 + $0x10] sm:$0xff]
    %v248 = vld [vmem:[%s1 + $0x18] sm:$0xff]
    %v249 = vld [vmem:[%s1 + $0x20] sm:$0xff]
    %v250 = vld [vmem:[%s1 + $0x28] sm:$0xff]
    %v251 = vld [vmem:[%s1 + $0x30] sm:$0xff]
    %v252 = vld [vmem:[%s1 + $0x38] sm:$0xff]
    %v253 = vld [vmem:[%s1 + $0x40] sm:$0xff]
    %v254 = vld [vmem:[%s1 + $0x48] sm:$0xff]
    %v255 = vld [vmem:[%s1 + $0x50] sm:$0xff]
    %v256 = vld [vmem:[%s1 + $0x58] sm:$0xff]
    %v257 = vld [vmem:[%s1 + $0x60] sm:$0xff]
    %v258 = vld [vmem:[%s1 + $0x68] sm:$0xff]
    %v259 = vld [vmem:[%s1 + $0x70] sm:$0xff]
    %v260 = vld [vmem:[%s1 + $0x78] sm:$0xff]
    %v261 = vld [vmem:[%s1 + $0x80] sm:$0xff]
    %v262 = vld [vmem:[%s1 + $0x88] sm:$0xff]
    %v263 = vld [vmem:[%s1 + $0x90] sm:$0x7]
    %v264 = vld [vmem:[#allocation2] sm:$0x1]
    %v266 = vlaneseq
    %v267 = vshrl.u32 %v266, 7
    %v268 = vsub.s32 0, %v267
    %v269 = vrot.slane %v264, %v268
    %vm271 = vcmask 154624
    %v273 = vsel %vm271, %v214, 0
    %v276 = vsel %vm271, %v216, 0
    %v279 = vsel %vm271, %v218, 0
    %v282 = vsel %vm271, %v220, 0
    %v285 = vsel %vm271, %v222, 0
    %v288 = vsel %vm271, %v224, 0
    %v291 = vsel %vm271, %v226, 0
    %v294 = vsel %vm271, %v228, 0
    %v297 = vsel %vm271, %v230, 0
    %v300 = vsel %vm271, %v232, 0
    %v303 = vsel %vm271, %v234, 0
    %v306 = vsel %vm271, %v236, 0
    %v309 = vsel %vm271, %v238, 0
    %v312 = vsel %vm271, %v240, 0
    %v315 = vsel %vm271, %v242, 0
    %v318 = vsel %vm271, %v244, 0
    %vm320 = vcmask 1042432
    %v322 = vsel %vm320, %v263, 0
    %324 = vmatprep.subr.mxu0 0.0
    %325 = vmatpush1.msra.mxu0 %v260
    %326 = vmatprep.subr.mxu0 0.0
    %327 = vmatpush1.msra.mxu0 %v259
    %328 = vmatprep.subr.mxu0 0.0
    %329 = vmatpush1.msra.mxu0 %v258
    %330 = vmatprep.subr.mxu0 0.0
    %331 = vmatpush1.msra.mxu0 %v257
    %332 = vmatprep.subr.mxu0 0.0
    %333 = vmatpush1.msra.mxu0 %v256
    %334 = vmatprep.subr.mxu0 0.0
    %335 = vmatpush1.msra.mxu0 %v255
    %336 = vmatprep.subr.mxu0 0.0
    %337 = vmatpush1.msra.mxu0 %v254
    %338 = vmatprep.subr.mxu0 0.0
    %339 = vmatpush1.msra.mxu0 %v253
    %340 = vmatprep.subr.mxu0 0.0
    %341 = vmatpush1.msra.mxu0 %v252
    %342 = vmatprep.subr.mxu0 0.0
    %343 = vmatpush1.msra.mxu0 %v251
    %344 = vmatprep.subr.mxu0 0.0
    %345 = vmatpush1.msra.mxu0 %v250
    %346 = vmatprep.subr.mxu0 0.0
    %347 = vmatpush1.msra.mxu0 %v249
    %348 = vmatprep.subr.mxu0 0.0
    %349 = vmatpush1.msra.mxu0 %v248
    %350 = vmatprep.subr.mxu0 0.0
    %351 = vmatpush1.msra.mxu0 %v247
    %352 = vmatprep.subr.mxu0 0.0
    %353 = vmatpush1.msra.mxu0 %v246
    %354 = vmatprep.subr.mxu0 0.0
    %355 = vmatpush1.msra.mxu0 %v245
    %356 = vmatprep.subr.mxu0 0.0
    %357 = vmatpush2.msra.mxu0 0.0
    %358 = vmatprep.subr.mxu0 0.0
    %359 = vmatpush2.msra.mxu0 0.0
    %360 = vmatprep.subr.mxu0 0.0
    %361 = vmatpush2.msra.mxu0 0.0
    %362 = vmatprep.subr.mxu0 0.0
    %363 = vmatpush2.msra.mxu0 0.0
    %364 = vmatprep.subr.mxu0 0.0
    %365 = vmatpush2.msra.mxu0 0.0
    %366 = vmatprep.subr.mxu0 0.0
    %367 = vmatpush2.msra.mxu0 0.0
    %368 = vmatprep.subr.mxu0 0.0
    %369 = vmatpush2.msra.mxu0 0.0
    %370 = vmatprep.subr.mxu0 0.0
    %371 = vmatpush2.msra.mxu0 0.0
    %372 = vmatprep.subr.mxu0 0.0
    %373 = vmatpush2.msra.mxu0 0.0
    %374 = vmatprep.subr.mxu0 0.0
    %375 = vmatpush2.msra.mxu0 0.0
    %376 = vmatprep.subr.mxu0 0.0
    %377 = vmatpush2.msra.mxu0 0.0
    %378 = vmatprep.subr.mxu0 0.0
    %379 = vmatpush2.msra.mxu0 0.0
    %380 = vmatprep.subr.mxu0 0.0
    %381 = vmatpush2.msra.mxu0 0.0
    %382 = vmatprep.subr.mxu0 0.0
    %383 = vmatpush2.msra.mxu0 %v322
    %384 = vmatprep.subr.mxu0 0.0
    %385 = vmatpush2.msra.mxu0 %v262
    %386 = vmatprep.subr.mxu0 0.0
    %387 = vmatpush2.msra.mxu0 %v261
    %388 = vmatprep.mubr.f32.mxu0 %v273
    %389 = vmatmul.mubr.f32.gmra.mxu0 %v213
    %v390 = vpop.f32.mrf.mxu0
    %v391 = vadd.f32 %v269, %v390
    %v392 = vpop.f32.mrf.mxu0
    %393 = vmatprep.mubr.f32.mxu0 %v276
    %394 = vmatmul.mubr.f32.gmra.mxu0 %v215
    %v395 = vpop.f32.mrf.mxu0
    %v396 = vadd.f32 %v269, %v395
    %v397 = vpop.f32.mrf.mxu0
    %398 = vmatprep.mubr.f32.mxu0 %v279
    %399 = vmatmul.mubr.f32.gmra.mxu0 %v217
    %v400 = vpop.f32.mrf.mxu0
    %v401 = vadd.f32 %v269, %v400
    %v402 = vpop.f32.mrf.mxu0
    %403 = vmatprep.mubr.f32.mxu0 %v282
    %404 = vmatmul.mubr.f32.gmra.mxu0 %v219
    %v405 = vpop.f32.mrf.mxu0
    %v406 = vadd.f32 %v269, %v405
    %v407 = vpop.f32.mrf.mxu0
    %408 = vmatprep.mubr.f32.mxu0 %v285
    %409 = vmatmul.mubr.f32.gmra.mxu0 %v221
    %v410 = vpop.f32.mrf.mxu0
    %v411 = vadd.f32 %v269, %v410
    %v412 = vpop.f32.mrf.mxu0
    %413 = vmatprep.mubr.f32.mxu0 %v288
    %414 = vmatmul.mubr.f32.gmra.mxu0 %v223
    %v415 = vpop.f32.mrf.mxu0
    %v416 = vadd.f32 %v269, %v415
    %v417 = vpop.f32.mrf.mxu0
    %418 = vmatprep.mubr.f32.mxu0 %v291
    %419 = vmatmul.mubr.f32.gmra.mxu0 %v225
    %v420 = vpop.f32.mrf.mxu0
    %v421 = vadd.f32 %v269, %v420
    %v422 = vpop.f32.mrf.mxu0
    %423 = vmatprep.mubr.f32.mxu0 %v294
    %424 = vmatmul.mubr.f32.gmra.mxu0 %v227
    %v425 = vpop.f32.mrf.mxu0
    %v426 = vadd.f32 %v269, %v425
    %v427 = vpop.f32.mrf.mxu0
    %428 = vmatprep.mubr.f32.mxu0 %v297
    %429 = vmatmul.mubr.f32.gmra.mxu0 %v229
    %v430 = vpop.f32.mrf.mxu0
    %v431 = vadd.f32 %v269, %v430
    %v432 = vpop.f32.mrf.mxu0
    %433 = vmatprep.mubr.f32.mxu0 %v300
    %434 = vmatmul.mubr.f32.gmra.mxu0 %v231
    %v435 = vpop.f32.mrf.mxu0
    %v436 = vadd.f32 %v269, %v435
    %v437 = vpop.f32.mrf.mxu0
    %438 = vmatprep.mubr.f32.mxu0 %v303
    %439 = vmatmul.mubr.f32.gmra.mxu0 %v233
    %v440 = vpop.f32.mrf.mxu0
    %v441 = vadd.f32 %v269, %v440
    %v442 = vpop.f32.mrf.mxu0
    %443 = vmatprep.mubr.f32.mxu0 %v306
    %444 = vmatmul.mubr.f32.gmra.mxu0 %v235
    %v445 = vpop.f32.mrf.mxu0
    %v446 = vadd.f32 %v269, %v445
    %v447 = vpop.f32.mrf.mxu0
    %448 = vmatprep.mubr.f32.mxu0 %v309
    %449 = vmatmul.mubr.f32.gmra.mxu0 %v237
    %v450 = vpop.f32.mrf.mxu0
    %v451 = vadd.f32 %v269, %v450
    %v452 = vpop.f32.mrf.mxu0
    %453 = vmatprep.mubr.f32.mxu0 %v312
    %454 = vmatmul.mubr.f32.gmra.mxu0 %v239
    %v455 = vpop.f32.mrf.mxu0
    %v456 = vadd.f32 %v269, %v455
    %v457 = vpop.f32.mrf.mxu0
    %458 = vmatprep.mubr.f32.mxu0 %v315
    %459 = vmatmul.mubr.f32.gmra.mxu0 %v241
    %v460 = vpop.f32.mrf.mxu0
    %v461 = vadd.f32 %v269, %v460
    %v462 = vpop.f32.mrf.mxu0
    %463 = vmatprep.mubr.f32.mxu0 %v318
    %464 = vmatmul.mubr.f32.gmra.mxu0 %v243
    %v465 = vpop.f32.mrf.mxu0
    %v466 = vadd.f32 %v269, %v465
    %v467 = vpop.f32.mrf.mxu0
    %468 = vdwg.mxu0
    %v469 = vmax.f32 %v391, 0.0
    %v470 = vmax.f32 %v396, 0.0
    %v471 = vmax.f32 %v401, 0.0
    %v472 = vmax.f32 %v406, 0.0
    %v473 = vmax.f32 %v411, 0.0
    %v474 = vmax.f32 %v416, 0.0
    %v475 = vmax.f32 %v421, 0.0
    %v476 = vmax.f32 %v426, 0.0
    %v477 = vmax.f32 %v431, 0.0
    %v478 = vmax.f32 %v436, 0.0
    %v479 = vmax.f32 %v441, 0.0
    %v480 = vmax.f32 %v446, 0.0
    %v481 = vmax.f32 %v451, 0.0
    %v482 = vmax.f32 %v456, 0.0
    %v483 = vmax.f32 %v461, 0.0
    %v484 = vmax.f32 %v466, 0.0
    %v485 = vld [vmem:[#allocation5] sm:$0xff]
    %v486 = vld [vmem:[#allocation5 + $0x8] sm:$0xff]
    %v487 = vld [vmem:[#allocation5 + $0x10] sm:$0xff]
    %v488 = vld [vmem:[#allocation5 + $0x18] sm:$0xff]
    %489 = vmatprep.subr.mxu0 0.0
    %490 = vmatpush1.msra.mxu0 %v484
    %491 = vmatprep.subr.mxu0 0.0
    %492 = vmatpush1.msra.mxu0 %v483
    %493 = vmatprep.subr.mxu0 0.0
    %494 = vmatpush1.msra.mxu0 %v482
    %495 = vmatprep.subr.mxu0 0.0
    %496 = vmatpush1.msra.mxu0 %v481
    %497 = vmatprep.subr.mxu0 0.0
    %498 = vmatpush1.msra.mxu0 %v480
    %499 = vmatprep.subr.mxu0 0.0
    %500 = vmatpush1.msra.mxu0 %v479
    %501 = vmatprep.subr.mxu0 0.0
    %502 = vmatpush1.msra.mxu0 %v478
    %503 = vmatprep.subr.mxu0 0.0
    %504 = vmatpush1.msra.mxu0 %v477
    %505 = vmatprep.subr.mxu0 0.0
    %506 = vmatpush1.msra.mxu0 %v476
    %507 = vmatprep.subr.mxu0 0.0
    %508 = vmatpush1.msra.mxu0 %v475
    %509 = vmatprep.subr.mxu0 0.0
    %510 = vmatpush1.msra.mxu0 %v474
    %511 = vmatprep.subr.mxu0 0.0
    %512 = vmatpush1.msra.mxu0 %v473
    %513 = vmatprep.subr.mxu0 0.0
    %514 = vmatpush1.msra.mxu0 %v472
    %515 = vmatprep.subr.mxu0 0.0
    %516 = vmatpush1.msra.mxu0 %v471
    %517 = vmatprep.subr.mxu0 0.0
    %518 = vmatpush1.msra.mxu0 %v470
    %519 = vmatprep.subr.mxu0 0.0
    %520 = vmatpush1.msra.mxu0 %v469
    %521 = vmatprep.subr.mxu0 0.0
    %522 = vmatpush2.msra.mxu0 0.0
    %523 = vmatprep.subr.mxu0 0.0
    %524 = vmatpush2.msra.mxu0 0.0
    %525 = vmatprep.subr.mxu0 0.0
    %526 = vmatpush2.msra.mxu0 0.0
    %527 = vmatprep.subr.mxu0 0.0
    %528 = vmatpush2.msra.mxu0 0.0
    %529 = vmatprep.subr.mxu0 0.0
    %530 = vmatpush2.msra.mxu0 0.0
    %531 = vmatprep.subr.mxu0 0.0
    %532 = vmatpush2.msra.mxu0 0.0
    %533 = vmatprep.subr.mxu0 0.0
    %534 = vmatpush2.msra.mxu0 0.0
    %535 = vmatprep.subr.mxu0 0.0
    %536 = vmatpush2.msra.mxu0 0.0
    %537 = vmatprep.subr.mxu0 0.0
    %538 = vmatpush2.msra.mxu0 0.0
    %539 = vmatprep.subr.mxu0 0.0
    %540 = vmatpush2.msra.mxu0 0.0
    %541 = vmatprep.subr.mxu0 0.0
    %542 = vmatpush2.msra.mxu0 0.0
    %543 = vmatprep.subr.mxu0 0.0
    %544 = vmatpush2.msra.mxu0 0.0
    %545 = vmatprep.subr.mxu0 0.0
    %546 = vmatpush2.msra.mxu0 0.0
    %547 = vmatprep.subr.mxu0 0.0
    %548 = vmatpush2.msra.mxu0 0.0
    %549 = vmatprep.subr.mxu0 0.0
    %550 = vmatpush2.msra.mxu0 0.0
    %551 = vmatprep.subr.mxu0 0.0
    %552 = vmatpush2.msra.mxu0 0.0
    %553 = vmatprep.mubr.f32.mxu0 0.0
    %554 = vmatmul.mubr.f32.gmra.mxu0 %v485
    %v555 = vpop.f32.mrf.mxu0
    %v556 = vadd.f32 0.0, %v555
    %v557 = vpop.f32.mrf.mxu0
    %558 = vmatprep.mubr.f32.mxu0 0.0
    %559 = vmatmul.mubr.f32.gmra.mxu0 %v486
    %v560 = vpop.f32.mrf.mxu0
    %v561 = vadd.f32 0.0, %v560
    %v562 = vpop.f32.mrf.mxu0
    %563 = vmatprep.mubr.f32.mxu0 0.0
    %564 = vmatmul.mubr.f32.gmra.mxu0 %v487
    %v565 = vpop.f32.mrf.mxu0
    %v566 = vadd.f32 0.0, %v565
    %v567 = vpop.f32.mrf.mxu0
    %568 = vmatprep.mubr.f32.mxu0 0.0
    %569 = vmatmul.mubr.f32.gmra.mxu0 %v488
    %v570 = vpop.f32.mrf.mxu0
    %v571 = vadd.f32 0.0, %v570
    %v572 = vpop.f32.mrf.mxu0
    %573 = vdwg.mxu0
    %v574 = vld [vmem:[#allocation7] sm:$0xff]
    %v575 = vld [vmem:[#allocation7 + $0x8] sm:$0xff]
    %v576 = vld [vmem:[#allocation7 + $0x10] sm:$0xff]
    %v577 = vld [vmem:[#allocation7 + $0x18] sm:$0xff]
    %v578 = vld [vmem:[#allocation7 + $0x20] sm:$0xff]
    %v579 = vld [vmem:[#allocation7 + $0x28] sm:$0xff]
    %v580 = vld [vmem:[#allocation7 + $0x30] sm:$0xff]
    %v581 = vld [vmem:[#allocation7 + $0x38] sm:$0xff]
    %s582 = scalar_lea.vmem [#allocation5], 32
    %v583 = vld [vmem:[%s582] sm:$0xff]
    %v584 = vld [vmem:[%s582 + $0x8] sm:$0xff]
    %v585 = vld [vmem:[%s582 + $0x10] sm:$0xff]
    %v586 = vld [vmem:[%s582 + $0x18] sm:$0xff]
    %587 = vmatprep.subr.mxu0 0.0
    %588 = vmatpush1.msra.mxu0 %v484
    %589 = vmatprep.subr.mxu0 0.0
    %590 = vmatpush1.msra.mxu0 %v483
    %591 = vmatprep.subr.mxu0 0.0
    %592 = vmatpush1.msra.mxu0 %v482
    %593 = vmatprep.subr.mxu0 0.0
    %594 = vmatpush1.msra.mxu0 %v481
    %595 = vmatprep.subr.mxu0 0.0
    %596 = vmatpush1.msra.mxu0 %v480
    %597 = vmatprep.subr.mxu0 0.0
    %598 = vmatpush1.msra.mxu0 %v479
    %599 = vmatprep.subr.mxu0 0.0
    %600 = vmatpush1.msra.mxu0 %v478
    %601 = vmatprep.subr.mxu0 0.0
    %602 = vmatpush1.msra.mxu0 %v477
    %603 = vmatprep.subr.mxu0 0.0
    %604 = vmatpush1.msra.mxu0 %v476
    %605 = vmatprep.subr.mxu0 0.0
    %606 = vmatpush1.msra.mxu0 %v475
    %607 = vmatprep.subr.mxu0 0.0
    %608 = vmatpush1.msra.mxu0 %v474
    %609 = vmatprep.subr.mxu0 0.0
    %610 = vmatpush1.msra.mxu0 %v473
    %611 = vmatprep.subr.mxu0 0.0
    %612 = vmatpush1.msra.mxu0 %v472
    %613 = vmatprep.subr.mxu0 0.0
    %614 = vmatpush1.msra.mxu0 %v471
    %615 = vmatprep.subr.mxu0 0.0
    %616 = vmatpush1.msra.mxu0 %v470
    %617 = vmatprep.subr.mxu0 0.0
    %618 = vmatpush1.msra.mxu0 %v469
    %619 = vmatprep.subr.mxu0 0.0
    %620 = vmatpush2.msra.mxu0 0.0
    %621 = vmatprep.subr.mxu0 0.0
    %622 = vmatpush2.msra.mxu0 0.0
    %623 = vmatprep.subr.mxu0 0.0
    %624 = vmatpush2.msra.mxu0 0.0
    %625 = vmatprep.subr.mxu0 0.0
    %626 = vmatpush2.msra.mxu0 0.0
    %627 = vmatprep.subr.mxu0 0.0
    %628 = vmatpush2.msra.mxu0 0.0
    %629 = vmatprep.subr.mxu0 0.0
    %630 = vmatpush2.msra.mxu0 0.0
    %631 = vmatprep.subr.mxu0 0.0
    %632 = vmatpush2.msra.mxu0 0.0
    %633 = vmatprep.subr.mxu0 0.0
    %634 = vmatpush2.msra.mxu0 0.0
    %635 = vmatprep.subr.mxu0 0.0
    %636 = vmatpush2.msra.mxu0 0.0
    %637 = vmatprep.subr.mxu0 0.0
    %638 = vmatpush2.msra.mxu0 0.0
    %639 = vmatprep.subr.mxu0 0.0
    %640 = vmatpush2.msra.mxu0 0.0
    %641 = vmatprep.subr.mxu0 0.0
    %642 = vmatpush2.msra.mxu0 0.0
    %643 = vmatprep.subr.mxu0 0.0
    %644 = vmatpush2.msra.mxu0 0.0
    %645 = vmatprep.subr.mxu0 0.0
    %646 = vmatpush2.msra.mxu0 0.0
    %647 = vmatprep.subr.mxu0 0.0
    %648 = vmatpush2.msra.mxu0 0.0
    %649 = vmatprep.subr.mxu0 0.0
    %650 = vmatpush2.msra.mxu0 0.0
    %651 = vmatprep.mubr.f32.mxu0 0.0
    %652 = vmatmul.mubr.f32.gmra.mxu0 %v583
    %v653 = vpop.f32.mrf.mxu0
    %v654 = vadd.f32 0.0, %v653
    %v655 = vpop.f32.mrf.mxu0
    %656 = vmatprep.mubr.f32.mxu0 0.0
    %657 = vmatmul.mubr.f32.gmra.mxu0 %v584
    %v658 = vpop.f32.mrf.mxu0
    %v659 = vadd.f32 0.0, %v658
    %v660 = vpop.f32.mrf.mxu0
    %661 = vmatprep.mubr.f32.mxu0 0.0
    %662 = vmatmul.mubr.f32.gmra.mxu0 %v585
    %v663 = vpop.f32.mrf.mxu0
    %v664 = vadd.f32 0.0, %v663
    %v665 = vpop.f32.mrf.mxu0
    %666 = vmatprep.mubr.f32.mxu0 0.0
    %667 = vmatmul.mubr.f32.gmra.mxu0 %v586
    %v668 = vpop.f32.mrf.mxu0
    %v669 = vadd.f32 0.0, %v668
    %v670 = vpop.f32.mrf.mxu0
    %671 = vdwg.mxu0
    %s672 = scalar_lea.vmem [#allocation7], 64
    %v673 = vld [vmem:[%s672] sm:$0xff]
    %v674 = vld [vmem:[%s672 + $0x8] sm:$0xff]
    %v675 = vld [vmem:[%s672 + $0x10] sm:$0xff]
    %v676 = vld [vmem:[%s672 + $0x18] sm:$0xff]
    %v677 = vld [vmem:[%s672 + $0x20] sm:$0xff]
    %v678 = vld [vmem:[%s672 + $0x28] sm:$0xff]
    %v679 = vld [vmem:[%s672 + $0x30] sm:$0xff]
    %v680 = vld [vmem:[%s672 + $0x38] sm:$0xff]
    %vm681 = vcmask 523264
    %v683 = vsel %vm681, %v654, 0
    %v686 = vsel %vm681, %v659, 0
    %v689 = vsel %vm681, %v664, 0
    %v692 = vsel %vm681, %v669, 0
    %694 = vmatprep.subr.mxu0 0.0
    %695 = vmatpush1.msra.mxu0 0.0
    %696 = vmatprep.subr.mxu0 0.0
    %697 = vmatpush1.msra.mxu0 0.0
    %698 = vmatprep.subr.mxu0 0.0
    %699 = vmatpush1.msra.mxu0 0.0
    %700 = vmatprep.subr.mxu0 0.0
    %701 = vmatpush1.msra.mxu0 0.0
    %702 = vmatprep.subr.mxu0 0.0
    %703 = vmatpush1.msra.mxu0 0.0
    %704 = vmatprep.subr.mxu0 0.0
    %705 = vmatpush1.msra.mxu0 0.0
    %706 = vmatprep.subr.mxu0 0.0
    %707 = vmatpush1.msra.mxu0 0.0
    %708 = vmatprep.subr.mxu0 0.0
    %709 = vmatpush1.msra.mxu0 0.0
    %710 = vmatprep.subr.mxu0 0.0
    %711 = vmatpush1.msra.mxu0 %v680
    %712 = vmatprep.subr.mxu0 0.0
    %713 = vmatpush1.msra.mxu0 %v679
    %714 = vmatprep.subr.mxu0 0.0
    %715 = vmatpush1.msra.mxu0 %v678
    %716 = vmatprep.subr.mxu0 0.0
    %717 = vmatpush1.msra.mxu0 %v677
    %718 = vmatprep.subr.mxu0 0.0
    %719 = vmatpush1.msra.mxu0 %v676
    %720 = vmatprep.subr.mxu0 0.0
    %721 = vmatpush1.msra.mxu0 %v675
    %722 = vmatprep.subr.mxu0 0.0
    %723 = vmatpush1.msra.mxu0 %v674
    %724 = vmatprep.subr.mxu0 0.0
    %725 = vmatpush1.msra.mxu0 %v673
    %726 = vmatprep.subr.mxu0 0.0
    %727 = vmatpush2.msra.mxu0 0.0
    %728 = vmatprep.subr.mxu0 0.0
    %729 = vmatpush2.msra.mxu0 0.0
    %730 = vmatprep.subr.mxu0 0.0
    %731 = vmatpush2.msra.mxu0 0.0
    %732 = vmatprep.subr.mxu0 0.0
    %733 = vmatpush2.msra.mxu0 0.0
    %734 = vmatprep.subr.mxu0 0.0
    %735 = vmatpush2.msra.mxu0 0.0
    %736 = vmatprep.subr.mxu0 0.0
    %737 = vmatpush2.msra.mxu0 0.0
    %738 = vmatprep.subr.mxu0 0.0
    %739 = vmatpush2.msra.mxu0 0.0
    %740 = vmatprep.subr.mxu0 0.0
    %741 = vmatpush2.msra.mxu0 0.0
    %742 = vmatprep.subr.mxu0 0.0
    %743 = vmatpush2.msra.mxu0 0.0
    %744 = vmatprep.subr.mxu0 0.0
    %745 = vmatpush2.msra.mxu0 0.0
    %746 = vmatprep.subr.mxu0 0.0
    %747 = vmatpush2.msra.mxu0 0.0
    %748 = vmatprep.subr.mxu0 0.0
    %749 = vmatpush2.msra.mxu0 0.0
    %750 = vmatprep.subr.mxu0 0.0
    %751 = vmatpush2.msra.mxu0 0.0
    %752 = vmatprep.subr.mxu0 0.0
    %753 = vmatpush2.msra.mxu0 0.0
    %754 = vmatprep.subr.mxu0 0.0
    %755 = vmatpush2.msra.mxu0 0.0
    %756 = vmatprep.subr.mxu0 0.0
    %757 = vmatpush2.msra.mxu0 0.0
    %758 = vmatprep.mubr.f32.mxu0 0.0
    %759 = vmatmul.mubr.f32.gmra.mxu0 %v683
    %v760 = vpop.f32.mrf.mxu0
    %v761 = vadd.f32 0.0, %v760
    %v762 = vpop.f32.mrf.mxu0
    %763 = vmatprep.mubr.f32.mxu0 0.0
    %764 = vmatmul.mubr.f32.gmra.mxu0 %v686
    %v765 = vpop.f32.mrf.mxu0
    %v766 = vadd.f32 0.0, %v765
    %v767 = vpop.f32.mrf.mxu0
    %768 = vmatprep.mubr.f32.mxu0 0.0
    %769 = vmatmul.mubr.f32.gmra.mxu0 %v689
    %v770 = vpop.f32.mrf.mxu0
    %v771 = vadd.f32 0.0, %v770
    %v772 = vpop.f32.mrf.mxu0
    %773 = vmatprep.mubr.f32.mxu0 0.0
    %774 = vmatmul.mubr.f32.gmra.mxu0 %v692
    %v775 = vpop.f32.mrf.mxu0
    %v776 = vadd.f32 0.0, %v775
    %v777 = vpop.f32.mrf.mxu0
    %778 = vdwg.mxu0
    %v780 = vsel %vm681, %v556, 0
    %v783 = vsel %vm681, %v561, 0
    %v786 = vsel %vm681, %v566, 0
    %v789 = vsel %vm681, %v571, 0
    %791 = vmatprep.subr.mxu0 0.0
    %792 = vmatpush1.msra.mxu0 0.0
    %793 = vmatprep.subr.mxu0 0.0
    %794 = vmatpush1.msra.mxu0 0.0
    %795 = vmatprep.subr.mxu0 0.0
    %796 = vmatpush1.msra.mxu0 0.0
    %797 = vmatprep.subr.mxu0 0.0
    %798 = vmatpush1.msra.mxu0 0.0
    %799 = vmatprep.subr.mxu0 0.0
    %800 = vmatpush1.msra.mxu0 0.0
    %801 = vmatprep.subr.mxu0 0.0
    %802 = vmatpush1.msra.mxu0 0.0
    %803 = vmatprep.subr.mxu0 0.0
    %804 = vmatpush1.msra.mxu0 0.0
    %805 = vmatprep.subr.mxu0 0.0
    %806 = vmatpush1.msra.mxu0 0.0
    %807 = vmatprep.subr.mxu0 0.0
    %808 = vmatpush1.msra.mxu0 %v581
    %809 = vmatprep.subr.mxu0 0.0
    %810 = vmatpush1.msra.mxu0 %v580
    %811 = vmatprep.subr.mxu0 0.0
    %812 = vmatpush1.msra.mxu0 %v579
    %813 = vmatprep.subr.mxu0 0.0
    %814 = vmatpush1.msra.mxu0 %v578
    %815 = vmatprep.subr.mxu0 0.0
    %816 = vmatpush1.msra.mxu0 %v577
    %817 = vmatprep.subr.mxu0 0.0
    %818 = vmatpush1.msra.mxu0 %v576
    %819 = vmatprep.subr.mxu0 0.0
    %820 = vmatpush1.msra.mxu0 %v575
    %821 = vmatprep.subr.mxu0 0.0
    %822 = vmatpush1.msra.mxu0 %v574
    %823 = vmatprep.subr.mxu0 0.0
    %824 = vmatpush2.msra.mxu0 0.0
    %825 = vmatprep.subr.mxu0 0.0
    %826 = vmatpush2.msra.mxu0 0.0
    %827 = vmatprep.subr.mxu0 0.0
    %828 = vmatpush2.msra.mxu0 0.0
    %829 = vmatprep.subr.mxu0 0.0
    %830 = vmatpush2.msra.mxu0 0.0
    %831 = vmatprep.subr.mxu0 0.0
    %832 = vmatpush2.msra.mxu0 0.0
    %833 = vmatprep.subr.mxu0 0.0
    %834 = vmatpush2.msra.mxu0 0.0
    %835 = vmatprep.subr.mxu0 0.0
    %836 = vmatpush2.msra.mxu0 0.0
    %837 = vmatprep.subr.mxu0 0.0
    %838 = vmatpush2.msra.mxu0 0.0
    %839 = vmatprep.subr.mxu0 0.0
    %840 = vmatpush2.msra.mxu0 0.0
    %841 = vmatprep.subr.mxu0 0.0
    %842 = vmatpush2.msra.mxu0 0.0
    %843 = vmatprep.subr.mxu0 0.0
    %844 = vmatpush2.msra.mxu0 0.0
    %845 = vmatprep.subr.mxu0 0.0
    %846 = vmatpush2.msra.mxu0 0.0
    %847 = vmatprep.subr.mxu0 0.0
    %848 = vmatpush2.msra.mxu0 0.0
    %849 = vmatprep.subr.mxu0 0.0
    %850 = vmatpush2.msra.mxu0 0.0
    %851 = vmatprep.subr.mxu0 0.0
    %852 = vmatpush2.msra.mxu0 0.0
    %853 = vmatprep.subr.mxu0 0.0
    %854 = vmatpush2.msra.mxu0 0.0
    %855 = vmatprep.mubr.f32.mxu0 0.0
    %856 = vmatmul.mubr.f32.gmra.mxu0 %v780
    %v857 = vpop.f32.mrf.mxu0
    %v858 = vadd.f32 %v761, %v857
    %v859 = vpop.f32.mrf.mxu0
    %860 = vmatprep.mubr.f32.mxu0 0.0
    %861 = vmatmul.mubr.f32.gmra.mxu0 %v783
    %v862 = vpop.f32.mrf.mxu0
    %v863 = vadd.f32 %v766, %v862
    %v864 = vpop.f32.mrf.mxu0
    %865 = vmatprep.mubr.f32.mxu0 0.0
    %866 = vmatmul.mubr.f32.gmra.mxu0 %v786
    %v867 = vpop.f32.mrf.mxu0
    %v868 = vadd.f32 %v771, %v867
    %v869 = vpop.f32.mrf.mxu0
    %870 = vmatprep.mubr.f32.mxu0 0.0
    %871 = vmatmul.mubr.f32.gmra.mxu0 %v789
    %v872 = vpop.f32.mrf.mxu0
    %v873 = vadd.f32 %v776, %v872
    %v874 = vpop.f32.mrf.mxu0
    %875 = vdwg.mxu0
    %s876 = scalar_lea.vmem [#allocation5], 64
    %v877 = vld [vmem:[%s876] sm:$0xff]
    %v878 = vld [vmem:[%s876 + $0x8] sm:$0xff]
    %v879 = vld [vmem:[%s876 + $0x10] sm:$0xff]
    %v880 = vld [vmem:[%s876 + $0x18] sm:$0xff]
    %881 = vmatprep.subr.mxu0 0.0
    %882 = vmatpush1.msra.mxu0 %v484
    %883 = vmatprep.subr.mxu0 0.0
    %884 = vmatpush1.msra.mxu0 %v483
    %885 = vmatprep.subr.mxu0 0.0
    %886 = vmatpush1.msra.mxu0 %v482
    %887 = vmatprep.subr.mxu0 0.0
    %888 = vmatpush1.msra.mxu0 %v481
    %889 = vmatprep.subr.mxu0 0.0
    %890 = vmatpush1.msra.mxu0 %v480
    %891 = vmatprep.subr.mxu0 0.0
    %892 = vmatpush1.msra.mxu0 %v479
    %893 = vmatprep.subr.mxu0 0.0
    %894 = vmatpush1.msra.mxu0 %v478
    %895 = vmatprep.subr.mxu0 0.0
    %896 = vmatpush1.msra.mxu0 %v477
    %897 = vmatprep.subr.mxu0 0.0
    %898 = vmatpush1.msra.mxu0 %v476
    %899 = vmatprep.subr.mxu0 0.0
    %900 = vmatpush1.msra.mxu0 %v475
    %901 = vmatprep.subr.mxu0 0.0
    %902 = vmatpush1.msra.mxu0 %v474
    %903 = vmatprep.subr.mxu0 0.0
    %904 = vmatpush1.msra.mxu0 %v473
    %905 = vmatprep.subr.mxu0 0.0
    %906 = vmatpush1.msra.mxu0 %v472
    %907 = vmatprep.subr.mxu0 0.0
    %908 = vmatpush1.msra.mxu0 %v471
    %909 = vmatprep.subr.mxu0 0.0
    %910 = vmatpush1.msra.mxu0 %v470
    %911 = vmatprep.subr.mxu0 0.0
    %912 = vmatpush1.msra.mxu0 %v469
    %913 = vmatprep.subr.mxu0 0.0
    %914 = vmatpush2.msra.mxu0 0.0
    %915 = vmatprep.subr.mxu0 0.0
    %916 = vmatpush2.msra.mxu0 0.0
    %917 = vmatprep.subr.mxu0 0.0
    %918 = vmatpush2.msra.mxu0 0.0
    %919 = vmatprep.subr.mxu0 0.0
    %920 = vmatpush2.msra.mxu0 0.0
    %921 = vmatprep.subr.mxu0 0.0
    %922 = vmatpush2.msra.mxu0 0.0
    %923 = vmatprep.subr.mxu0 0.0
    %924 = vmatpush2.msra.mxu0 0.0
    %925 = vmatprep.subr.mxu0 0.0
    %926 = vmatpush2.msra.mxu0 0.0
    %927 = vmatprep.subr.mxu0 0.0
    %928 = vmatpush2.msra.mxu0 0.0
    %929 = vmatprep.subr.mxu0 0.0
    %930 = vmatpush2.msra.mxu0 0.0
    %931 = vmatprep.subr.mxu0 0.0
    %932 = vmatpush2.msra.mxu0 0.0
    %933 = vmatprep.subr.mxu0 0.0
    %934 = vmatpush2.msra.mxu0 0.0
    %935 = vmatprep.subr.mxu0 0.0
    %936 = vmatpush2.msra.mxu0 0.0
    %937 = vmatprep.subr.mxu0 0.0
    %938 = vmatpush2.msra.mxu0 0.0
    %939 = vmatprep.subr.mxu0 0.0
    %940 = vmatpush2.msra.mxu0 0.0
    %941 = vmatprep.subr.mxu0 0.0
    %942 = vmatpush2.msra.mxu0 0.0
    %943 = vmatprep.subr.mxu0 0.0
    %944 = vmatpush2.msra.mxu0 0.0
    %945 = vmatprep.mubr.f32.mxu0 0.0
    %946 = vmatmul.mubr.f32.gmra.mxu0 %v877
    %v947 = vpop.f32.mrf.mxu0
    %v948 = vadd.f32 0.0, %v947
    %v949 = vpop.f32.mrf.mxu0
    %950 = vmatprep.mubr.f32.mxu0 0.0
    %951 = vmatmul.mubr.f32.gmra.mxu0 %v878
    %v952 = vpop.f32.mrf.mxu0
    %v953 = vadd.f32 0.0, %v952
    %v954 = vpop.f32.mrf.mxu0
    %955 = vmatprep.mubr.f32.mxu0 0.0
    %956 = vmatmul.mubr.f32.gmra.mxu0 %v879
    %v957 = vpop.f32.mrf.mxu0
    %v958 = vadd.f32 0.0, %v957
    %v959 = vpop.f32.mrf.mxu0
    %960 = vmatprep.mubr.f32.mxu0 0.0
    %961 = vmatmul.mubr.f32.gmra.mxu0 %v880
    %v962 = vpop.f32.mrf.mxu0
    %v963 = vadd.f32 0.0, %v962
    %v964 = vpop.f32.mrf.mxu0
    %965 = vdwg.mxu0
    %s966 = scalar_lea.vmem [#allocation7], 128
    %v967 = vld [vmem:[%s966] sm:$0xff]
    %v968 = vld [vmem:[%s966 + $0x8] sm:$0xff]
    %v969 = vld [vmem:[%s966 + $0x10] sm:$0xff]
    %v970 = vld [vmem:[%s966 + $0x18] sm:$0xff]
    %v971 = vld [vmem:[%s966 + $0x20] sm:$0xff]
    %v972 = vld [vmem:[%s966 + $0x28] sm:$0xff]
    %v973 = vld [vmem:[%s966 + $0x30] sm:$0xff]
    %v974 = vld [vmem:[%s966 + $0x38] sm:$0xff]
    %v976 = vsel %vm681, %v948, 0
    %v979 = vsel %vm681, %v953, 0
    %v982 = vsel %vm681, %v958, 0
    %v985 = vsel %vm681, %v963, 0
    %987 = vmatprep.subr.mxu0 0.0
    %988 = vmatpush1.msra.mxu0 0.0
    %989 = vmatprep.subr.mxu0 0.0
    %990 = vmatpush1.msra.mxu0 0.0
    %991 = vmatprep.subr.mxu0 0.0
    %992 = vmatpush1.msra.mxu0 0.0
    %993 = vmatprep.subr.mxu0 0.0
    %994 = vmatpush1.msra.mxu0 0.0
    %995 = vmatprep.subr.mxu0 0.0
    %996 = vmatpush1.msra.mxu0 0.0
    %997 = vmatprep.subr.mxu0 0.0
    %998 = vmatpush1.msra.mxu0 0.0
    %999 = vmatprep.subr.mxu0 0.0
    %1000 = vmatpush1.msra.mxu0 0.0
    %1001 = vmatprep.subr.mxu0 0.0
    %1002 = vmatpush1.msra.mxu0 0.0
    %1003 = vmatprep.subr.mxu0 0.0
    %1004 = vmatpush1.msra.mxu0 %v974
    %1005 = vmatprep.subr.mxu0 0.0
    %1006 = vmatpush1.msra.mxu0 %v973
    %1007 = vmatprep.subr.mxu0 0.0
    %1008 = vmatpush1.msra.mxu0 %v972
    %1009 = vmatprep.subr.mxu0 0.0
    %1010 = vmatpush1.msra.mxu0 %v971
    %1011 = vmatprep.subr.mxu0 0.0
    %1012 = vmatpush1.msra.mxu0 %v970
    %1013 = vmatprep.subr.mxu0 0.0
    %1014 = vmatpush1.msra.mxu0 %v969
    %1015 = vmatprep.subr.mxu0 0.0
    %1016 = vmatpush1.msra.mxu0 %v968
    %1017 = vmatprep.subr.mxu0 0.0
    %1018 = vmatpush1.msra.mxu0 %v967
    %1019 = vmatprep.subr.mxu0 0.0
    %1020 = vmatpush2.msra.mxu0 0.0
    %1021 = vmatprep.subr.mxu0 0.0
    %1022 = vmatpush2.msra.mxu0 0.0
    %1023 = vmatprep.subr.mxu0 0.0
    %1024 = vmatpush2.msra.mxu0 0.0
    %1025 = vmatprep.subr.mxu0 0.0
    %1026 = vmatpush2.msra.mxu0 0.0
    %1027 = vmatprep.subr.mxu0 0.0
    %1028 = vmatpush2.msra.mxu0 0.0
    %1029 = vmatprep.subr.mxu0 0.0
    %1030 = vmatpush2.msra.mxu0 0.0
    %1031 = vmatprep.subr.mxu0 0.0
    %1032 = vmatpush2.msra.mxu0 0.0
    %1033 = vmatprep.subr.mxu0 0.0
    %1034 = vmatpush2.msra.mxu0 0.0
    %1035 = vmatprep.subr.mxu0 0.0
    %1036 = vmatpush2.msra.mxu0 0.0
    %1037 = vmatprep.subr.mxu0 0.0
    %1038 = vmatpush2.msra.mxu0 0.0
    %1039 = vmatprep.subr.mxu0 0.0
    %1040 = vmatpush2.msra.mxu0 0.0
    %1041 = vmatprep.subr.mxu0 0.0
    %1042 = vmatpush2.msra.mxu0 0.0
    %1043 = vmatprep.subr.mxu0 0.0
    %1044 = vmatpush2.msra.mxu0 0.0
    %1045 = vmatprep.subr.mxu0 0.0
    %1046 = vmatpush2.msra.mxu0 0.0
    %1047 = vmatprep.subr.mxu0 0.0
    %1048 = vmatpush2.msra.mxu0 0.0
    %1049 = vmatprep.subr.mxu0 0.0
    %1050 = vmatpush2.msra.mxu0 0.0
    %1051 = vmatprep.mubr.f32.mxu0 0.0
    %1052 = vmatmul.mubr.f32.gmra.mxu0 %v976
    %v1053 = vpop.f32.mrf.mxu0
    %v1054 = vadd.f32 0.0, %v1053
    %v1055 = vpop.f32.mrf.mxu0
    %1056 = vmatprep.mubr.f32.mxu0 0.0
    %1057 = vmatmul.mubr.f32.gmra.mxu0 %v979
    %v1058 = vpop.f32.mrf.mxu0
    %v1059 = vadd.f32 0.0, %v1058
    %v1060 = vpop.f32.mrf.mxu0
    %1061 = vmatprep.mubr.f32.mxu0 0.0
    %1062 = vmatmul.mubr.f32.gmra.mxu0 %v982
    %v1063 = vpop.f32.mrf.mxu0
    %v1064 = vadd.f32 0.0, %v1063
    %v1065 = vpop.f32.mrf.mxu0
    %1066 = vmatprep.mubr.f32.mxu0 0.0
    %1067 = vmatmul.mubr.f32.gmra.mxu0 %v985
    %v1068 = vpop.f32.mrf.mxu0
    %v1069 = vadd.f32 0.0, %v1068
    %v1070 = vpop.f32.mrf.mxu0
    %1071 = vdwg.mxu0
    %v1072 = vadd.f32 %v858, %v1054
    %v1073 = vadd.f32 %v863, %v1059
    %v1074 = vadd.f32 %v868, %v1064
    %v1075 = vadd.f32 %v873, %v1069
    %s1076 = scalar_lea.vmem [#allocation5], 96
    %v1077 = vld [vmem:[%s1076] sm:$0xff]
    %v1078 = vld [vmem:[%s1076 + $0x8] sm:$0xff]
    %v1079 = vld [vmem:[%s1076 + $0x10] sm:$0xff]
    %v1080 = vld [vmem:[%s1076 + $0x18] sm:$0xff]
    %1081 = vmatprep.subr.mxu0 0.0
    %1082 = vmatpush1.msra.mxu0 %v484
    %1083 = vmatprep.subr.mxu0 0.0
    %1084 = vmatpush1.msra.mxu0 %v483
    %1085 = vmatprep.subr.mxu0 0.0
    %1086 = vmatpush1.msra.mxu0 %v482
    %1087 = vmatprep.subr.mxu0 0.0
    %1088 = vmatpush1.msra.mxu0 %v481
    %1089 = vmatprep.subr.mxu0 0.0
    %1090 = vmatpush1.msra.mxu0 %v480
    %1091 = vmatprep.subr.mxu0 0.0
    %1092 = vmatpush1.msra.mxu0 %v479
    %1093 = vmatprep.subr.mxu0 0.0
    %1094 = vmatpush1.msra.mxu0 %v478
    %1095 = vmatprep.subr.mxu0 0.0
    %1096 = vmatpush1.msra.mxu0 %v477
    %1097 = vmatprep.subr.mxu0 0.0
    %1098 = vmatpush1.msra.mxu0 %v476
    %1099 = vmatprep.subr.mxu0 0.0
    %1100 = vmatpush1.msra.mxu0 %v475
    %1101 = vmatprep.subr.mxu0 0.0
    %1102 = vmatpush1.msra.mxu0 %v474
    %1103 = vmatprep.subr.mxu0 0.0
    %1104 = vmatpush1.msra.mxu0 %v473
    %1105 = vmatprep.subr.mxu0 0.0
    %1106 = vmatpush1.msra.mxu0 %v472
    %1107 = vmatprep.subr.mxu0 0.0
    %1108 = vmatpush1.msra.mxu0 %v471
    %1109 = vmatprep.subr.mxu0 0.0
    %1110 = vmatpush1.msra.mxu0 %v470
    %1111 = vmatprep.subr.mxu0 0.0
    %1112 = vmatpush1.msra.mxu0 %v469
    %1113 = vmatprep.subr.mxu0 0.0
    %1114 = vmatpush2.msra.mxu0 0.0
    %1115 = vmatprep.subr.mxu0 0.0
    %1116 = vmatpush2.msra.mxu0 0.0
    %1117 = vmatprep.subr.mxu0 0.0
    %1118 = vmatpush2.msra.mxu0 0.0
    %1119 = vmatprep.subr.mxu0 0.0
    %1120 = vmatpush2.msra.mxu0 0.0
    %1121 = vmatprep.subr.mxu0 0.0
    %1122 = vmatpush2.msra.mxu0 0.0
    %1123 = vmatprep.subr.mxu0 0.0
    %1124 = vmatpush2.msra.mxu0 0.0
    %1125 = vmatprep.subr.mxu0 0.0
    %1126 = vmatpush2.msra.mxu0 0.0
    %1127 = vmatprep.subr.mxu0 0.0
    %1128 = vmatpush2.msra.mxu0 0.0
    %1129 = vmatprep.subr.mxu0 0.0
    %1130 = vmatpush2.msra.mxu0 0.0
    %1131 = vmatprep.subr.mxu0 0.0
    %1132 = vmatpush2.msra.mxu0 0.0
    %1133 = vmatprep.subr.mxu0 0.0
    %1134 = vmatpush2.msra.mxu0 0.0
    %1135 = vmatprep.subr.mxu0 0.0
    %1136 = vmatpush2.msra.mxu0 0.0
    %1137 = vmatprep.subr.mxu0 0.0
    %1138 = vmatpush2.msra.mxu0 0.0
    %1139 = vmatprep.subr.mxu0 0.0
    %1140 = vmatpush2.msra.mxu0 0.0
    %1141 = vmatprep.subr.mxu0 0.0
    %1142 = vmatpush2.msra.mxu0 0.0
    %1143 = vmatprep.subr.mxu0 0.0
    %1144 = vmatpush2.msra.mxu0 0.0
    %1145 = vmatprep.mubr.f32.mxu0 0.0
    %1146 = vmatmul.mubr.f32.gmra.mxu0 %v1077
    %v1147 = vpop.f32.mrf.mxu0
    %v1148 = vadd.f32 0.0, %v1147
    %v1149 = vpop.f32.mrf.mxu0
    %1150 = vmatprep.mubr.f32.mxu0 0.0
    %1151 = vmatmul.mubr.f32.gmra.mxu0 %v1078
    %v1152 = vpop.f32.mrf.mxu0
    %v1153 = vadd.f32 0.0, %v1152
    %v1154 = vpop.f32.mrf.mxu0
    %1155 = vmatprep.mubr.f32.mxu0 0.0
    %1156 = vmatmul.mubr.f32.gmra.mxu0 %v1079
    %v1157 = vpop.f32.mrf.mxu0
    %v1158 = vadd.f32 0.0, %v1157
    %v1159 = vpop.f32.mrf.mxu0
    %1160 = vmatprep.mubr.f32.mxu0 0.0
    %1161 = vmatmul.mubr.f32.gmra.mxu0 %v1080
    %v1162 = vpop.f32.mrf.mxu0
    %v1163 = vadd.f32 0.0, %v1162
    %v1164 = vpop.f32.mrf.mxu0
    %1165 = vdwg.mxu0
    %s1166 = scalar_lea.vmem [#allocation7], 192
    %v1167 = vld [vmem:[%s1166] sm:$0xff]
    %v1168 = vld [vmem:[%s1166 + $0x8] sm:$0xff]
    %v1169 = vld [vmem:[%s1166 + $0x10] sm:$0xff]
    %v1170 = vld [vmem:[%s1166 + $0x18] sm:$0xff]
    %v1171 = vld [vmem:[%s1166 + $0x20] sm:$0xff]
    %v1172 = vld [vmem:[%s1166 + $0x28] sm:$0xff]
    %v1173 = vld [vmem:[%s1166 + $0x30] sm:$0xff]
    %v1174 = vld [vmem:[%s1166 + $0x38] sm:$0xff]
    %v1176 = vsel %vm681, %v1148, 0
    %v1179 = vsel %vm681, %v1153, 0
    %v1182 = vsel %vm681, %v1158, 0
    %v1185 = vsel %vm681, %v1163, 0
    %1187 = vmatprep.subr.mxu0 0.0
    %1188 = vmatpush1.msra.mxu0 0.0
    %1189 = vmatprep.subr.mxu0 0.0
    %1190 = vmatpush1.msra.mxu0 0.0
    %1191 = vmatprep.subr.mxu0 0.0
    %1192 = vmatpush1.msra.mxu0 0.0
    %1193 = vmatprep.subr.mxu0 0.0
    %1194 = vmatpush1.msra.mxu0 0.0
    %1195 = vmatprep.subr.mxu0 0.0
    %1196 = vmatpush1.msra.mxu0 0.0
    %1197 = vmatprep.subr.mxu0 0.0
    %1198 = vmatpush1.msra.mxu0 0.0
    %1199 = vmatprep.subr.mxu0 0.0
    %1200 = vmatpush1.msra.mxu0 0.0
    %1201 = vmatprep.subr.mxu0 0.0
    %1202 = vmatpush1.msra.mxu0 0.0
    %1203 = vmatprep.subr.mxu0 0.0
    %1204 = vmatpush1.msra.mxu0 %v1174
    %1205 = vmatprep.subr.mxu0 0.0
    %1206 = vmatpush1.msra.mxu0 %v1173
    %1207 = vmatprep.subr.mxu0 0.0
    %1208 = vmatpush1.msra.mxu0 %v1172
    %1209 = vmatprep.subr.mxu0 0.0
    %1210 = vmatpush1.msra.mxu0 %v1171
    %1211 = vmatprep.subr.mxu0 0.0
    %1212 = vmatpush1.msra.mxu0 %v1170
    %1213 = vmatprep.subr.mxu0 0.0
    %1214 = vmatpush1.msra.mxu0 %v1169
    %1215 = vmatprep.subr.mxu0 0.0
    %1216 = vmatpush1.msra.mxu0 %v1168
    %1217 = vmatprep.subr.mxu0 0.0
    %1218 = vmatpush1.msra.mxu0 %v1167
    %1219 = vmatprep.subr.mxu0 0.0
    %1220 = vmatpush2.msra.mxu0 0.0
    %1221 = vmatprep.subr.mxu0 0.0
    %1222 = vmatpush2.msra.mxu0 0.0
    %1223 = vmatprep.subr.mxu0 0.0
    %1224 = vmatpush2.msra.mxu0 0.0
    %1225 = vmatprep.subr.mxu0 0.0
    %1226 = vmatpush2.msra.mxu0 0.0
    %1227 = vmatprep.subr.mxu0 0.0
    %1228 = vmatpush2.msra.mxu0 0.0
    %1229 = vmatprep.subr.mxu0 0.0
    %1230 = vmatpush2.msra.mxu0 0.0
    %1231 = vmatprep.subr.mxu0 0.0
    %1232 = vmatpush2.msra.mxu0 0.0
    %1233 = vmatprep.subr.mxu0 0.0
    %1234 = vmatpush2.msra.mxu0 0.0
    %1235 = vmatprep.subr.mxu0 0.0
    %1236 = vmatpush2.msra.mxu0 0.0
    %1237 = vmatprep.subr.mxu0 0.0
    %1238 = vmatpush2.msra.mxu0 0.0
    %1239 = vmatprep.subr.mxu0 0.0
    %1240 = vmatpush2.msra.mxu0 0.0
    %1241 = vmatprep.subr.mxu0 0.0
    %1242 = vmatpush2.msra.mxu0 0.0
    %1243 = vmatprep.subr.mxu0 0.0
    %1244 = vmatpush2.msra.mxu0 0.0
    %1245 = vmatprep.subr.mxu0 0.0
    %1246 = vmatpush2.msra.mxu0 0.0
    %1247 = vmatprep.subr.mxu0 0.0
    %1248 = vmatpush2.msra.mxu0 0.0
    %1249 = vmatprep.subr.mxu0 0.0
    %1250 = vmatpush2.msra.mxu0 0.0
    %1251 = vmatprep.mubr.f32.mxu0 0.0
    %1252 = vmatmul.mubr.f32.gmra.mxu0 %v1176
    %v1253 = vpop.f32.mrf.mxu0
    %v1254 = vadd.f32 0.0, %v1253
    %v1255 = vpop.f32.mrf.mxu0
    %1256 = vmatprep.mubr.f32.mxu0 0.0
    %1257 = vmatmul.mubr.f32.gmra.mxu0 %v1179
    %v1258 = vpop.f32.mrf.mxu0
    %v1259 = vadd.f32 0.0, %v1258
    %v1260 = vpop.f32.mrf.mxu0
    %1261 = vmatprep.mubr.f32.mxu0 0.0
    %1262 = vmatmul.mubr.f32.gmra.mxu0 %v1182
    %v1263 = vpop.f32.mrf.mxu0
    %v1264 = vadd.f32 0.0, %v1263
    %v1265 = vpop.f32.mrf.mxu0
    %1266 = vmatprep.mubr.f32.mxu0 0.0
    %1267 = vmatmul.mubr.f32.gmra.mxu0 %v1185
    %v1268 = vpop.f32.mrf.mxu0
    %v1269 = vadd.f32 0.0, %v1268
    %v1270 = vpop.f32.mrf.mxu0
    %1271 = vdwg.mxu0
    %v1272 = vadd.f32 %v1072, %v1254
    %v1273 = vadd.f32 %v1073, %v1259
    %v1274 = vadd.f32 %v1074, %v1264
    %v1275 = vadd.f32 %v1075, %v1269
    %s1276 = scalar_lea.vmem [#allocation5], 128
    %v1277 = vld [vmem:[%s1276] sm:$0xff]
    %v1278 = vld [vmem:[%s1276 + $0x8] sm:$0xff]
    %v1279 = vld [vmem:[%s1276 + $0x10] sm:$0xff]
    %v1280 = vld [vmem:[%s1276 + $0x18] sm:$0xff]
    %1281 = vmatprep.subr.mxu0 0.0
    %1282 = vmatpush1.msra.mxu0 %v484
    %1283 = vmatprep.subr.mxu0 0.0
    %1284 = vmatpush1.msra.mxu0 %v483
    %1285 = vmatprep.subr.mxu0 0.0
    %1286 = vmatpush1.msra.mxu0 %v482
    %1287 = vmatprep.subr.mxu0 0.0
    %1288 = vmatpush1.msra.mxu0 %v481
    %1289 = vmatprep.subr.mxu0 0.0
    %1290 = vmatpush1.msra.mxu0 %v480
    %1291 = vmatprep.subr.mxu0 0.0
    %1292 = vmatpush1.msra.mxu0 %v479
    %1293 = vmatprep.subr.mxu0 0.0
    %1294 = vmatpush1.msra.mxu0 %v478
    %1295 = vmatprep.subr.mxu0 0.0
    %1296 = vmatpush1.msra.mxu0 %v477
    %1297 = vmatprep.subr.mxu0 0.0
    %1298 = vmatpush1.msra.mxu0 %v476
    %1299 = vmatprep.subr.mxu0 0.0
    %1300 = vmatpush1.msra.mxu0 %v475
    %1301 = vmatprep.subr.mxu0 0.0
    %1302 = vmatpush1.msra.mxu0 %v474
    %1303 = vmatprep.subr.mxu0 0.0
    %1304 = vmatpush1.msra.mxu0 %v473
    %1305 = vmatprep.subr.mxu0 0.0
    %1306 = vmatpush1.msra.mxu0 %v472
    %1307 = vmatprep.subr.mxu0 0.0
    %1308 = vmatpush1.msra.mxu0 %v471
    %1309 = vmatprep.subr.mxu0 0.0
    %1310 = vmatpush1.msra.mxu0 %v470
    %1311 = vmatprep.subr.mxu0 0.0
    %1312 = vmatpush1.msra.mxu0 %v469
    %1313 = vmatprep.subr.mxu0 0.0
    %1314 = vmatpush2.msra.mxu0 0.0
    %1315 = vmatprep.subr.mxu0 0.0
    %1316 = vmatpush2.msra.mxu0 0.0
    %1317 = vmatprep.subr.mxu0 0.0
    %1318 = vmatpush2.msra.mxu0 0.0
    %1319 = vmatprep.subr.mxu0 0.0
    %1320 = vmatpush2.msra.mxu0 0.0
    %1321 = vmatprep.subr.mxu0 0.0
    %1322 = vmatpush2.msra.mxu0 0.0
    %1323 = vmatprep.subr.mxu0 0.0
    %1324 = vmatpush2.msra.mxu0 0.0
    %1325 = vmatprep.subr.mxu0 0.0
    %1326 = vmatpush2.msra.mxu0 0.0
    %1327 = vmatprep.subr.mxu0 0.0
    %1328 = vmatpush2.msra.mxu0 0.0
    %1329 = vmatprep.subr.mxu0 0.0
    %1330 = vmatpush2.msra.mxu0 0.0
    %1331 = vmatprep.subr.mxu0 0.0
    %1332 = vmatpush2.msra.mxu0 0.0
    %1333 = vmatprep.subr.mxu0 0.0
    %1334 = vmatpush2.msra.mxu0 0.0
    %1335 = vmatprep.subr.mxu0 0.0
    %1336 = vmatpush2.msra.mxu0 0.0
    %1337 = vmatprep.subr.mxu0 0.0
    %1338 = vmatpush2.msra.mxu0 0.0
    %1339 = vmatprep.subr.mxu0 0.0
    %1340 = vmatpush2.msra.mxu0 0.0
    %1341 = vmatprep.subr.mxu0 0.0
    %1342 = vmatpush2.msra.mxu0 0.0
    %1343 = vmatprep.subr.mxu0 0.0
    %1344 = vmatpush2.msra.mxu0 0.0
    %1345 = vmatprep.mubr.f32.mxu0 0.0
    %1346 = vmatmul.mubr.f32.gmra.mxu0 %v1277
    %v1347 = vpop.f32.mrf.mxu0
    %v1348 = vadd.f32 0.0, %v1347
    %v1349 = vpop.f32.mrf.mxu0
    %1350 = vmatprep.mubr.f32.mxu0 0.0
    %1351 = vmatmul.mubr.f32.gmra.mxu0 %v1278
    %v1352 = vpop.f32.mrf.mxu0
    %v1353 = vadd.f32 0.0, %v1352
    %v1354 = vpop.f32.mrf.mxu0
    %1355 = vmatprep.mubr.f32.mxu0 0.0
    %1356 = vmatmul.mubr.f32.gmra.mxu0 %v1279
    %v1357 = vpop.f32.mrf.mxu0
    %v1358 = vadd.f32 0.0, %v1357
    %v1359 = vpop.f32.mrf.mxu0
    %1360 = vmatprep.mubr.f32.mxu0 0.0
    %1361 = vmatmul.mubr.f32.gmra.mxu0 %v1280
    %v1362 = vpop.f32.mrf.mxu0
    %v1363 = vadd.f32 0.0, %v1362
    %v1364 = vpop.f32.mrf.mxu0
    %1365 = vdwg.mxu0
    %s1366 = scalar_lea.vmem [#allocation7], 256
    %v1367 = vld [vmem:[%s1366] sm:$0xff]
    %v1368 = vld [vmem:[%s1366 + $0x8] sm:$0xff]
    %v1369 = vld [vmem:[%s1366 + $0x10] sm:$0xff]
    %v1370 = vld [vmem:[%s1366 + $0x18] sm:$0xff]
    %v1371 = vld [vmem:[%s1366 + $0x20] sm:$0xff]
    %v1372 = vld [vmem:[%s1366 + $0x28] sm:$0xff]
    %v1373 = vld [vmem:[%s1366 + $0x30] sm:$0xff]
    %v1374 = vld [vmem:[%s1366 + $0x38] sm:$0xff]
    %v1376 = vsel %vm681, %v1348, 0
    %v1379 = vsel %vm681, %v1353, 0
    %v1382 = vsel %vm681, %v1358, 0
    %v1385 = vsel %vm681, %v1363, 0
    %1387 = vmatprep.subr.mxu0 0.0
    %1388 = vmatpush1.msra.mxu0 0.0
    %1389 = vmatprep.subr.mxu0 0.0
    %1390 = vmatpush1.msra.mxu0 0.0
    %1391 = vmatprep.subr.mxu0 0.0
    %1392 = vmatpush1.msra.mxu0 0.0
    %1393 = vmatprep.subr.mxu0 0.0
    %1394 = vmatpush1.msra.mxu0 0.0
    %1395 = vmatprep.subr.mxu0 0.0
    %1396 = vmatpush1.msra.mxu0 0.0
    %1397 = vmatprep.subr.mxu0 0.0
    %1398 = vmatpush1.msra.mxu0 0.0
    %1399 = vmatprep.subr.mxu0 0.0
    %1400 = vmatpush1.msra.mxu0 0.0
    %1401 = vmatprep.subr.mxu0 0.0
    %1402 = vmatpush1.msra.mxu0 0.0
    %1403 = vmatprep.subr.mxu0 0.0
    %1404 = vmatpush1.msra.mxu0 %v1374
    %1405 = vmatprep.subr.mxu0 0.0
    %1406 = vmatpush1.msra.mxu0 %v1373
    %1407 = vmatprep.subr.mxu0 0.0
    %1408 = vmatpush1.msra.mxu0 %v1372
    %1409 = vmatprep.subr.mxu0 0.0
    %1410 = vmatpush1.msra.mxu0 %v1371
    %1411 = vmatprep.subr.mxu0 0.0
    %1412 = vmatpush1.msra.mxu0 %v1370
    %1413 = vmatprep.subr.mxu0 0.0
    %1414 = vmatpush1.msra.mxu0 %v1369
    %1415 = vmatprep.subr.mxu0 0.0
    %1416 = vmatpush1.msra.mxu0 %v1368
    %1417 = vmatprep.subr.mxu0 0.0
    %1418 = vmatpush1.msra.mxu0 %v1367
    %1419 = vmatprep.subr.mxu0 0.0
    %1420 = vmatpush2.msra.mxu0 0.0
    %1421 = vmatprep.subr.mxu0 0.0
    %1422 = vmatpush2.msra.mxu0 0.0
    %1423 = vmatprep.subr.mxu0 0.0
    %1424 = vmatpush2.msra.mxu0 0.0
    %1425 = vmatprep.subr.mxu0 0.0
    %1426 = vmatpush2.msra.mxu0 0.0
    %1427 = vmatprep.subr.mxu0 0.0
    %1428 = vmatpush2.msra.mxu0 0.0
    %1429 = vmatprep.subr.mxu0 0.0
    %1430 = vmatpush2.msra.mxu0 0.0
    %1431 = vmatprep.subr.mxu0 0.0
    %1432 = vmatpush2.msra.mxu0 0.0
    %1433 = vmatprep.subr.mxu0 0.0
    %1434 = vmatpush2.msra.mxu0 0.0
    %1435 = vmatprep.subr.mxu0 0.0
    %1436 = vmatpush2.msra.mxu0 0.0
    %1437 = vmatprep.subr.mxu0 0.0
    %1438 = vmatpush2.msra.mxu0 0.0
    %1439 = vmatprep.subr.mxu0 0.0
    %1440 = vmatpush2.msra.mxu0 0.0
    %1441 = vmatprep.subr.mxu0 0.0
    %1442 = vmatpush2.msra.mxu0 0.0
    %1443 = vmatprep.subr.mxu0 0.0
    %1444 = vmatpush2.msra.mxu0 0.0
    %1445 = vmatprep.subr.mxu0 0.0
    %1446 = vmatpush2.msra.mxu0 0.0
    %1447 = vmatprep.subr.mxu0 0.0
    %1448 = vmatpush2.msra.mxu0 0.0
    %1449 = vmatprep.subr.mxu0 0.0
    %1450 = vmatpush2.msra.mxu0 0.0
    %1451 = vmatprep.mubr.f32.mxu0 0.0
    %1452 = vmatmul.mubr.f32.gmra.mxu0 %v1376
    %v1453 = vpop.f32.mrf.mxu0
    %v1454 = vadd.f32 0.0, %v1453
    %v1455 = vpop.f32.mrf.mxu0
    %1456 = vmatprep.mubr.f32.mxu0 0.0
    %1457 = vmatmul.mubr.f32.gmra.mxu0 %v1379
    %v1458 = vpop.f32.mrf.mxu0
    %v1459 = vadd.f32 0.0, %v1458
    %v1460 = vpop.f32.mrf.mxu0
    %1461 = vmatprep.mubr.f32.mxu0 0.0
    %1462 = vmatmul.mubr.f32.gmra.mxu0 %v1382
    %v1463 = vpop.f32.mrf.mxu0
    %v1464 = vadd.f32 0.0, %v1463
    %v1465 = vpop.f32.mrf.mxu0
    %1466 = vmatprep.mubr.f32.mxu0 0.0
    %1467 = vmatmul.mubr.f32.gmra.mxu0 %v1385
    %v1468 = vpop.f32.mrf.mxu0
    %v1469 = vadd.f32 0.0, %v1468
    %v1470 = vpop.f32.mrf.mxu0
    %1471 = vdwg.mxu0
    %v1472 = vadd.f32 %v1272, %v1454
    %v1473 = vadd.f32 %v1273, %v1459
    %v1474 = vadd.f32 %v1274, %v1464
    %v1475 = vadd.f32 %v1275, %v1469
    %s1476 = scalar_lea.vmem [#allocation5], 160
    %v1477 = vld [vmem:[%s1476] sm:$0xff]
    %v1478 = vld [vmem:[%s1476 + $0x8] sm:$0xff]
    %v1479 = vld [vmem:[%s1476 + $0x10] sm:$0xff]
    %v1480 = vld [vmem:[%s1476 + $0x18] sm:$0xff]
    %1481 = vmatprep.subr.mxu0 0.0
    %1482 = vmatpush1.msra.mxu0 %v484
    %1483 = vmatprep.subr.mxu0 0.0
    %1484 = vmatpush1.msra.mxu0 %v483
    %1485 = vmatprep.subr.mxu0 0.0
    %1486 = vmatpush1.msra.mxu0 %v482
    %1487 = vmatprep.subr.mxu0 0.0
    %1488 = vmatpush1.msra.mxu0 %v481
    %1489 = vmatprep.subr.mxu0 0.0
    %1490 = vmatpush1.msra.mxu0 %v480
    %1491 = vmatprep.subr.mxu0 0.0
    %1492 = vmatpush1.msra.mxu0 %v479
    %1493 = vmatprep.subr.mxu0 0.0
    %1494 = vmatpush1.msra.mxu0 %v478
    %1495 = vmatprep.subr.mxu0 0.0
    %1496 = vmatpush1.msra.mxu0 %v477
    %1497 = vmatprep.subr.mxu0 0.0
    %1498 = vmatpush1.msra.mxu0 %v476
    %1499 = vmatprep.subr.mxu0 0.0
    %1500 = vmatpush1.msra.mxu0 %v475
    %1501 = vmatprep.subr.mxu0 0.0
    %1502 = vmatpush1.msra.mxu0 %v474
    %1503 = vmatprep.subr.mxu0 0.0
    %1504 = vmatpush1.msra.mxu0 %v473
    %1505 = vmatprep.subr.mxu0 0.0
    %1506 = vmatpush1.msra.mxu0 %v472
    %1507 = vmatprep.subr.mxu0 0.0
    %1508 = vmatpush1.msra.mxu0 %v471
    %1509 = vmatprep.subr.mxu0 0.0
    %1510 = vmatpush1.msra.mxu0 %v470
    %1511 = vmatprep.subr.mxu0 0.0
    %1512 = vmatpush1.msra.mxu0 %v469
    %1513 = vmatprep.subr.mxu0 0.0
    %1514 = vmatpush2.msra.mxu0 0.0
    %1515 = vmatprep.subr.mxu0 0.0
    %1516 = vmatpush2.msra.mxu0 0.0
    %1517 = vmatprep.subr.mxu0 0.0
    %1518 = vmatpush2.msra.mxu0 0.0
    %1519 = vmatprep.subr.mxu0 0.0
    %1520 = vmatpush2.msra.mxu0 0.0
    %1521 = vmatprep.subr.mxu0 0.0
    %1522 = vmatpush2.msra.mxu0 0.0
    %1523 = vmatprep.subr.mxu0 0.0
    %1524 = vmatpush2.msra.mxu0 0.0
    %1525 = vmatprep.subr.mxu0 0.0
    %1526 = vmatpush2.msra.mxu0 0.0
    %1527 = vmatprep.subr.mxu0 0.0
    %1528 = vmatpush2.msra.mxu0 0.0
    %1529 = vmatprep.subr.mxu0 0.0
    %1530 = vmatpush2.msra.mxu0 0.0
    %1531 = vmatprep.subr.mxu0 0.0
    %1532 = vmatpush2.msra.mxu0 0.0
    %1533 = vmatprep.subr.mxu0 0.0
    %1534 = vmatpush2.msra.mxu0 0.0
    %1535 = vmatprep.subr.mxu0 0.0
    %1536 = vmatpush2.msra.mxu0 0.0
    %1537 = vmatprep.subr.mxu0 0.0
    %1538 = vmatpush2.msra.mxu0 0.0
    %1539 = vmatprep.subr.mxu0 0.0
    %1540 = vmatpush2.msra.mxu0 0.0
    %1541 = vmatprep.subr.mxu0 0.0
    %1542 = vmatpush2.msra.mxu0 0.0
    %1543 = vmatprep.subr.mxu0 0.0
    %1544 = vmatpush2.msra.mxu0 0.0
    %1545 = vmatprep.mubr.f32.mxu0 0.0
    %1546 = vmatmul.mubr.f32.gmra.mxu0 %v1477
    %v1547 = vpop.f32.mrf.mxu0
    %v1548 = vadd.f32 0.0, %v1547
    %v1549 = vpop.f32.mrf.mxu0
    %1550 = vmatprep.mubr.f32.mxu0 0.0
    %1551 = vmatmul.mubr.f32.gmra.mxu0 %v1478
    %v1552 = vpop.f32.mrf.mxu0
    %v1553 = vadd.f32 0.0, %v1552
    %v1554 = vpop.f32.mrf.mxu0
    %1555 = vmatprep.mubr.f32.mxu0 0.0
    %1556 = vmatmul.mubr.f32.gmra.mxu0 %v1479
    %v1557 = vpop.f32.mrf.mxu0
    %v1558 = vadd.f32 0.0, %v1557
    %v1559 = vpop.f32.mrf.mxu0
    %1560 = vmatprep.mubr.f32.mxu0 0.0
    %1561 = vmatmul.mubr.f32.gmra.mxu0 %v1480
    %v1562 = vpop.f32.mrf.mxu0
    %v1563 = vadd.f32 0.0, %v1562
    %v1564 = vpop.f32.mrf.mxu0
    %1565 = vdwg.mxu0
    %s1566 = scalar_lea.vmem [#allocation7], 320
    %v1567 = vld [vmem:[%s1566] sm:$0xff]
    %v1568 = vld [vmem:[%s1566 + $0x8] sm:$0xff]
    %v1569 = vld [vmem:[%s1566 + $0x10] sm:$0xff]
    %v1570 = vld [vmem:[%s1566 + $0x18] sm:$0xff]
    %v1571 = vld [vmem:[%s1566 + $0x20] sm:$0xff]
    %v1572 = vld [vmem:[%s1566 + $0x28] sm:$0xff]
    %v1573 = vld [vmem:[%s1566 + $0x30] sm:$0xff]
    %v1574 = vld [vmem:[%s1566 + $0x38] sm:$0xff]
    %v1576 = vsel %vm681, %v1548, 0
    %v1579 = vsel %vm681, %v1553, 0
    %v1582 = vsel %vm681, %v1558, 0
    %v1585 = vsel %vm681, %v1563, 0
    %1587 = vmatprep.subr.mxu0 0.0
    %1588 = vmatpush1.msra.mxu0 0.0
    %1589 = vmatprep.subr.mxu0 0.0
    %1590 = vmatpush1.msra.mxu0 0.0
    %1591 = vmatprep.subr.mxu0 0.0
    %1592 = vmatpush1.msra.mxu0 0.0
    %1593 = vmatprep.subr.mxu0 0.0
    %1594 = vmatpush1.msra.mxu0 0.0
    %1595 = vmatprep.subr.mxu0 0.0
    %1596 = vmatpush1.msra.mxu0 0.0
    %1597 = vmatprep.subr.mxu0 0.0
    %1598 = vmatpush1.msra.mxu0 0.0
    %1599 = vmatprep.subr.mxu0 0.0
    %1600 = vmatpush1.msra.mxu0 0.0
    %1601 = vmatprep.subr.mxu0 0.0
    %1602 = vmatpush1.msra.mxu0 0.0
    %1603 = vmatprep.subr.mxu0 0.0
    %1604 = vmatpush1.msra.mxu0 %v1574
    %1605 = vmatprep.subr.mxu0 0.0
    %1606 = vmatpush1.msra.mxu0 %v1573
    %1607 = vmatprep.subr.mxu0 0.0
    %1608 = vmatpush1.msra.mxu0 %v1572
    %1609 = vmatprep.subr.mxu0 0.0
    %1610 = vmatpush1.msra.mxu0 %v1571
    %1611 = vmatprep.subr.mxu0 0.0
    %1612 = vmatpush1.msra.mxu0 %v1570
    %1613 = vmatprep.subr.mxu0 0.0
    %1614 = vmatpush1.msra.mxu0 %v1569
    %1615 = vmatprep.subr.mxu0 0.0
    %1616 = vmatpush1.msra.mxu0 %v1568
    %1617 = vmatprep.subr.mxu0 0.0
    %1618 = vmatpush1.msra.mxu0 %v1567
    %1619 = vmatprep.subr.mxu0 0.0
    %1620 = vmatpush2.msra.mxu0 0.0
    %1621 = vmatprep.subr.mxu0 0.0
    %1622 = vmatpush2.msra.mxu0 0.0
    %1623 = vmatprep.subr.mxu0 0.0
    %1624 = vmatpush2.msra.mxu0 0.0
    %1625 = vmatprep.subr.mxu0 0.0
    %1626 = vmatpush2.msra.mxu0 0.0
    %1627 = vmatprep.subr.mxu0 0.0
    %1628 = vmatpush2.msra.mxu0 0.0
    %1629 = vmatprep.subr.mxu0 0.0
    %1630 = vmatpush2.msra.mxu0 0.0
    %1631 = vmatprep.subr.mxu0 0.0
    %1632 = vmatpush2.msra.mxu0 0.0
    %1633 = vmatprep.subr.mxu0 0.0
    %1634 = vmatpush2.msra.mxu0 0.0
    %1635 = vmatprep.subr.mxu0 0.0
    %1636 = vmatpush2.msra.mxu0 0.0
    %1637 = vmatprep.subr.mxu0 0.0
    %1638 = vmatpush2.msra.mxu0 0.0
    %1639 = vmatprep.subr.mxu0 0.0
    %1640 = vmatpush2.msra.mxu0 0.0
    %1641 = vmatprep.subr.mxu0 0.0
    %1642 = vmatpush2.msra.mxu0 0.0
    %1643 = vmatprep.subr.mxu0 0.0
    %1644 = vmatpush2.msra.mxu0 0.0
    %1645 = vmatprep.subr.mxu0 0.0
    %1646 = vmatpush2.msra.mxu0 0.0
    %1647 = vmatprep.subr.mxu0 0.0
    %1648 = vmatpush2.msra.mxu0 0.0
    %1649 = vmatprep.subr.mxu0 0.0
    %1650 = vmatpush2.msra.mxu0 0.0
    %1651 = vmatprep.mubr.f32.mxu0 0.0
    %1652 = vmatmul.mubr.f32.gmra.mxu0 %v1576
    %v1653 = vpop.f32.mrf.mxu0
    %v1654 = vadd.f32 0.0, %v1653
    %v1655 = vpop.f32.mrf.mxu0
    %1656 = vmatprep.mubr.f32.mxu0 0.0
    %1657 = vmatmul.mubr.f32.gmra.mxu0 %v1579
    %v1658 = vpop.f32.mrf.mxu0
    %v1659 = vadd.f32 0.0, %v1658
    %v1660 = vpop.f32.mrf.mxu0
    %1661 = vmatprep.mubr.f32.mxu0 0.0
    %1662 = vmatmul.mubr.f32.gmra.mxu0 %v1582
    %v1663 = vpop.f32.mrf.mxu0
    %v1664 = vadd.f32 0.0, %v1663
    %v1665 = vpop.f32.mrf.mxu0
    %1666 = vmatprep.mubr.f32.mxu0 0.0
    %1667 = vmatmul.mubr.f32.gmra.mxu0 %v1585
    %v1668 = vpop.f32.mrf.mxu0
    %v1669 = vadd.f32 0.0, %v1668
    %v1670 = vpop.f32.mrf.mxu0
    %1671 = vdwg.mxu0
    %v1672 = vadd.f32 %v1472, %v1654
    %v1673 = vadd.f32 %v1473, %v1659
    %v1674 = vadd.f32 %v1474, %v1664
    %v1675 = vadd.f32 %v1475, %v1669
    %s1676 = scalar_lea.vmem [#allocation5], 192
    %v1677 = vld [vmem:[%s1676] sm:$0xff]
    %v1678 = vld [vmem:[%s1676 + $0x8] sm:$0xff]
    %v1679 = vld [vmem:[%s1676 + $0x10] sm:$0xff]
    %v1680 = vld [vmem:[%s1676 + $0x18] sm:$0xff]
    %1681 = vmatprep.subr.mxu0 0.0
    %1682 = vmatpush1.msra.mxu0 %v484
    %1683 = vmatprep.subr.mxu0 0.0
    %1684 = vmatpush1.msra.mxu0 %v483
    %1685 = vmatprep.subr.mxu0 0.0
    %1686 = vmatpush1.msra.mxu0 %v482
    %1687 = vmatprep.subr.mxu0 0.0
    %1688 = vmatpush1.msra.mxu0 %v481
    %1689 = vmatprep.subr.mxu0 0.0
    %1690 = vmatpush1.msra.mxu0 %v480
    %1691 = vmatprep.subr.mxu0 0.0
    %1692 = vmatpush1.msra.mxu0 %v479
    %1693 = vmatprep.subr.mxu0 0.0
    %1694 = vmatpush1.msra.mxu0 %v478
    %1695 = vmatprep.subr.mxu0 0.0
    %1696 = vmatpush1.msra.mxu0 %v477
    %1697 = vmatprep.subr.mxu0 0.0
    %1698 = vmatpush1.msra.mxu0 %v476
    %1699 = vmatprep.subr.mxu0 0.0
    %1700 = vmatpush1.msra.mxu0 %v475
    %1701 = vmatprep.subr.mxu0 0.0
    %1702 = vmatpush1.msra.mxu0 %v474
    %1703 = vmatprep.subr.mxu0 0.0
    %1704 = vmatpush1.msra.mxu0 %v473
    %1705 = vmatprep.subr.mxu0 0.0
    %1706 = vmatpush1.msra.mxu0 %v472
    %1707 = vmatprep.subr.mxu0 0.0
    %1708 = vmatpush1.msra.mxu0 %v471
    %1709 = vmatprep.subr.mxu0 0.0
    %1710 = vmatpush1.msra.mxu0 %v470
    %1711 = vmatprep.subr.mxu0 0.0
    %1712 = vmatpush1.msra.mxu0 %v469
    %1713 = vmatprep.subr.mxu0 0.0
    %1714 = vmatpush2.msra.mxu0 0.0
    %1715 = vmatprep.subr.mxu0 0.0
    %1716 = vmatpush2.msra.mxu0 0.0
    %1717 = vmatprep.subr.mxu0 0.0
    %1718 = vmatpush2.msra.mxu0 0.0
    %1719 = vmatprep.subr.mxu0 0.0
    %1720 = vmatpush2.msra.mxu0 0.0
    %1721 = vmatprep.subr.mxu0 0.0
    %1722 = vmatpush2.msra.mxu0 0.0
    %1723 = vmatprep.subr.mxu0 0.0
    %1724 = vmatpush2.msra.mxu0 0.0
    %1725 = vmatprep.subr.mxu0 0.0
    %1726 = vmatpush2.msra.mxu0 0.0
    %1727 = vmatprep.subr.mxu0 0.0
    %1728 = vmatpush2.msra.mxu0 0.0
    %1729 = vmatprep.subr.mxu0 0.0
    %1730 = vmatpush2.msra.mxu0 0.0
    %1731 = vmatprep.subr.mxu0 0.0
    %1732 = vmatpush2.msra.mxu0 0.0
    %1733 = vmatprep.subr.mxu0 0.0
    %1734 = vmatpush2.msra.mxu0 0.0
    %1735 = vmatprep.subr.mxu0 0.0
    %1736 = vmatpush2.msra.mxu0 0.0
    %1737 = vmatprep.subr.mxu0 0.0
    %1738 = vmatpush2.msra.mxu0 0.0
    %1739 = vmatprep.subr.mxu0 0.0
    %1740 = vmatpush2.msra.mxu0 0.0
    %1741 = vmatprep.subr.mxu0 0.0
    %1742 = vmatpush2.msra.mxu0 0.0
    %1743 = vmatprep.subr.mxu0 0.0
    %1744 = vmatpush2.msra.mxu0 0.0
    %1745 = vmatprep.mubr.f32.mxu0 0.0
    %1746 = vmatmul.mubr.f32.gmra.mxu0 %v1677
    %v1747 = vpop.f32.mrf.mxu0
    %v1748 = vadd.f32 0.0, %v1747
    %v1749 = vpop.f32.mrf.mxu0
    %1750 = vmatprep.mubr.f32.mxu0 0.0
    %1751 = vmatmul.mubr.f32.gmra.mxu0 %v1678
    %v1752 = vpop.f32.mrf.mxu0
    %v1753 = vadd.f32 0.0, %v1752
    %v1754 = vpop.f32.mrf.mxu0
    %1755 = vmatprep.mubr.f32.mxu0 0.0
    %1756 = vmatmul.mubr.f32.gmra.mxu0 %v1679
    %v1757 = vpop.f32.mrf.mxu0
    %v1758 = vadd.f32 0.0, %v1757
    %v1759 = vpop.f32.mrf.mxu0
    %1760 = vmatprep.mubr.f32.mxu0 0.0
    %1761 = vmatmul.mubr.f32.gmra.mxu0 %v1680
    %v1762 = vpop.f32.mrf.mxu0
    %v1763 = vadd.f32 0.0, %v1762
    %v1764 = vpop.f32.mrf.mxu0
    %1765 = vdwg.mxu0
    %s1766 = scalar_lea.vmem [#allocation7], 384
    %v1767 = vld [vmem:[%s1766] sm:$0xff]
    %v1768 = vld [vmem:[%s1766 + $0x8] sm:$0xff]
    %v1769 = vld [vmem:[%s1766 + $0x10] sm:$0xff]
    %v1770 = vld [vmem:[%s1766 + $0x18] sm:$0xff]
    %v1771 = vld [vmem:[%s1766 + $0x20] sm:$0xff]
    %v1772 = vld [vmem:[%s1766 + $0x28] sm:$0xff]
    %v1773 = vld [vmem:[%s1766 + $0x30] sm:$0xff]
    %v1774 = vld [vmem:[%s1766 + $0x38] sm:$0xff]
    %v1776 = vsel %vm681, %v1748, 0
    %v1779 = vsel %vm681, %v1753, 0
    %v1782 = vsel %vm681, %v1758, 0
    %v1785 = vsel %vm681, %v1763, 0
    %1787 = vmatprep.subr.mxu0 0.0
    %1788 = vmatpush1.msra.mxu0 0.0
    %1789 = vmatprep.subr.mxu0 0.0
    %1790 = vmatpush1.msra.mxu0 0.0
    %1791 = vmatprep.subr.mxu0 0.0
    %1792 = vmatpush1.msra.mxu0 0.0
    %1793 = vmatprep.subr.mxu0 0.0
    %1794 = vmatpush1.msra.mxu0 0.0
    %1795 = vmatprep.subr.mxu0 0.0
    %1796 = vmatpush1.msra.mxu0 0.0
    %1797 = vmatprep.subr.mxu0 0.0
    %1798 = vmatpush1.msra.mxu0 0.0
    %1799 = vmatprep.subr.mxu0 0.0
    %1800 = vmatpush1.msra.mxu0 0.0
    %1801 = vmatprep.subr.mxu0 0.0
    %1802 = vmatpush1.msra.mxu0 0.0
    %1803 = vmatprep.subr.mxu0 0.0
    %1804 = vmatpush1.msra.mxu0 %v1774
    %1805 = vmatprep.subr.mxu0 0.0
    %1806 = vmatpush1.msra.mxu0 %v1773
    %1807 = vmatprep.subr.mxu0 0.0
    %1808 = vmatpush1.msra.mxu0 %v1772
    %1809 = vmatprep.subr.mxu0 0.0
    %1810 = vmatpush1.msra.mxu0 %v1771
    %1811 = vmatprep.subr.mxu0 0.0
    %1812 = vmatpush1.msra.mxu0 %v1770
    %1813 = vmatprep.subr.mxu0 0.0
    %1814 = vmatpush1.msra.mxu0 %v1769
    %1815 = vmatprep.subr.mxu0 0.0
    %1816 = vmatpush1.msra.mxu0 %v1768
    %1817 = vmatprep.subr.mxu0 0.0
    %1818 = vmatpush1.msra.mxu0 %v1767
    %1819 = vmatprep.subr.mxu0 0.0
    %1820 = vmatpush2.msra.mxu0 0.0
    %1821 = vmatprep.subr.mxu0 0.0
    %1822 = vmatpush2.msra.mxu0 0.0
    %1823 = vmatprep.subr.mxu0 0.0
    %1824 = vmatpush2.msra.mxu0 0.0
    %1825 = vmatprep.subr.mxu0 0.0
    %1826 = vmatpush2.msra.mxu0 0.0
    %1827 = vmatprep.subr.mxu0 0.0
    %1828 = vmatpush2.msra.mxu0 0.0
    %1829 = vmatprep.subr.mxu0 0.0
    %1830 = vmatpush2.msra.mxu0 0.0
    %1831 = vmatprep.subr.mxu0 0.0
    %1832 = vmatpush2.msra.mxu0 0.0
    %1833 = vmatprep.subr.mxu0 0.0
    %1834 = vmatpush2.msra.mxu0 0.0
    %1835 = vmatprep.subr.mxu0 0.0
    %1836 = vmatpush2.msra.mxu0 0.0
    %1837 = vmatprep.subr.mxu0 0.0
    %1838 = vmatpush2.msra.mxu0 0.0
    %1839 = vmatprep.subr.mxu0 0.0
    %1840 = vmatpush2.msra.mxu0 0.0
    %1841 = vmatprep.subr.mxu0 0.0
    %1842 = vmatpush2.msra.mxu0 0.0
    %1843 = vmatprep.subr.mxu0 0.0
    %1844 = vmatpush2.msra.mxu0 0.0
    %1845 = vmatprep.subr.mxu0 0.0
    %1846 = vmatpush2.msra.mxu0 0.0
    %1847 = vmatprep.subr.mxu0 0.0
    %1848 = vmatpush2.msra.mxu0 0.0
    %1849 = vmatprep.subr.mxu0 0.0
    %1850 = vmatpush2.msra.mxu0 0.0
    %1851 = vmatprep.mubr.f32.mxu0 0.0
    %1852 = vmatmul.mubr.f32.gmra.mxu0 %v1776
    %v1853 = vpop.f32.mrf.mxu0
    %v1854 = vadd.f32 0.0, %v1853
    %v1855 = vpop.f32.mrf.mxu0
    %1856 = vmatprep.mubr.f32.mxu0 0.0
    %1857 = vmatmul.mubr.f32.gmra.mxu0 %v1779
    %v1858 = vpop.f32.mrf.mxu0
    %v1859 = vadd.f32 0.0, %v1858
    %v1860 = vpop.f32.mrf.mxu0
    %1861 = vmatprep.mubr.f32.mxu0 0.0
    %1862 = vmatmul.mubr.f32.gmra.mxu0 %v1782
    %v1863 = vpop.f32.mrf.mxu0
    %v1864 = vadd.f32 0.0, %v1863
    %v1865 = vpop.f32.mrf.mxu0
    %1866 = vmatprep.mubr.f32.mxu0 0.0
    %1867 = vmatmul.mubr.f32.gmra.mxu0 %v1785
    %v1868 = vpop.f32.mrf.mxu0
    %v1869 = vadd.f32 0.0, %v1868
    %v1870 = vpop.f32.mrf.mxu0
    %1871 = vdwg.mxu0
    %v1872 = vadd.f32 %v1672, %v1854
    %v1873 = vadd.f32 %v1673, %v1859
    %v1874 = vadd.f32 %v1674, %v1864
    %v1875 = vadd.f32 %v1675, %v1869
    %s1876 = scalar_lea.vmem [#allocation5], 224
    %v1877 = vld [vmem:[%s1876] sm:$0xff]
    %v1878 = vld [vmem:[%s1876 + $0x8] sm:$0xff]
    %v1879 = vld [vmem:[%s1876 + $0x10] sm:$0xff]
    %v1880 = vld [vmem:[%s1876 + $0x18] sm:$0xff]
    %1881 = vmatprep.subr.mxu0 0.0
    %1882 = vmatpush1.msra.mxu0 %v484
    %1883 = vmatprep.subr.mxu0 0.0
    %1884 = vmatpush1.msra.mxu0 %v483
    %1885 = vmatprep.subr.mxu0 0.0
    %1886 = vmatpush1.msra.mxu0 %v482
    %1887 = vmatprep.subr.mxu0 0.0
    %1888 = vmatpush1.msra.mxu0 %v481
    %1889 = vmatprep.subr.mxu0 0.0
    %1890 = vmatpush1.msra.mxu0 %v480
    %1891 = vmatprep.subr.mxu0 0.0
    %1892 = vmatpush1.msra.mxu0 %v479
    %1893 = vmatprep.subr.mxu0 0.0
    %1894 = vmatpush1.msra.mxu0 %v478
    %1895 = vmatprep.subr.mxu0 0.0
    %1896 = vmatpush1.msra.mxu0 %v477
    %1897 = vmatprep.subr.mxu0 0.0
    %1898 = vmatpush1.msra.mxu0 %v476
    %1899 = vmatprep.subr.mxu0 0.0
    %1900 = vmatpush1.msra.mxu0 %v475
    %1901 = vmatprep.subr.mxu0 0.0
    %1902 = vmatpush1.msra.mxu0 %v474
    %1903 = vmatprep.subr.mxu0 0.0
    %1904 = vmatpush1.msra.mxu0 %v473
    %1905 = vmatprep.subr.mxu0 0.0
    %1906 = vmatpush1.msra.mxu0 %v472
    %1907 = vmatprep.subr.mxu0 0.0
    %1908 = vmatpush1.msra.mxu0 %v471
    %1909 = vmatprep.subr.mxu0 0.0
    %1910 = vmatpush1.msra.mxu0 %v470
    %1911 = vmatprep.subr.mxu0 0.0
    %1912 = vmatpush1.msra.mxu0 %v469
    %1913 = vmatprep.subr.mxu0 0.0
    %1914 = vmatpush2.msra.mxu0 0.0
    %1915 = vmatprep.subr.mxu0 0.0
    %1916 = vmatpush2.msra.mxu0 0.0
    %1917 = vmatprep.subr.mxu0 0.0
    %1918 = vmatpush2.msra.mxu0 0.0
    %1919 = vmatprep.subr.mxu0 0.0
    %1920 = vmatpush2.msra.mxu0 0.0
    %1921 = vmatprep.subr.mxu0 0.0
    %1922 = vmatpush2.msra.mxu0 0.0
    %1923 = vmatprep.subr.mxu0 0.0
    %1924 = vmatpush2.msra.mxu0 0.0
    %1925 = vmatprep.subr.mxu0 0.0
    %1926 = vmatpush2.msra.mxu0 0.0
    %1927 = vmatprep.subr.mxu0 0.0
    %1928 = vmatpush2.msra.mxu0 0.0
    %1929 = vmatprep.subr.mxu0 0.0
    %1930 = vmatpush2.msra.mxu0 0.0
    %1931 = vmatprep.subr.mxu0 0.0
    %1932 = vmatpush2.msra.mxu0 0.0
    %1933 = vmatprep.subr.mxu0 0.0
    %1934 = vmatpush2.msra.mxu0 0.0
    %1935 = vmatprep.subr.mxu0 0.0
    %1936 = vmatpush2.msra.mxu0 0.0
    %1937 = vmatprep.subr.mxu0 0.0
    %1938 = vmatpush2.msra.mxu0 0.0
    %1939 = vmatprep.subr.mxu0 0.0
    %1940 = vmatpush2.msra.mxu0 0.0
    %1941 = vmatprep.subr.mxu0 0.0
    %1942 = vmatpush2.msra.mxu0 0.0
    %1943 = vmatprep.subr.mxu0 0.0
    %1944 = vmatpush2.msra.mxu0 0.0
    %1945 = vmatprep.mubr.f32.mxu0 0.0
    %1946 = vmatmul.mubr.f32.gmra.mxu0 %v1877
    %v1947 = vpop.f32.mrf.mxu0
    %v1948 = vadd.f32 0.0, %v1947
    %v1949 = vpop.f32.mrf.mxu0
    %1950 = vmatprep.mubr.f32.mxu0 0.0
    %1951 = vmatmul.mubr.f32.gmra.mxu0 %v1878
    %v1952 = vpop.f32.mrf.mxu0
    %v1953 = vadd.f32 0.0, %v1952
    %v1954 = vpop.f32.mrf.mxu0
    %1955 = vmatprep.mubr.f32.mxu0 0.0
    %1956 = vmatmul.mubr.f32.gmra.mxu0 %v1879
    %v1957 = vpop.f32.mrf.mxu0
    %v1958 = vadd.f32 0.0, %v1957
    %v1959 = vpop.f32.mrf.mxu0
    %1960 = vmatprep.mubr.f32.mxu0 0.0
    %1961 = vmatmul.mubr.f32.gmra.mxu0 %v1880
    %v1962 = vpop.f32.mrf.mxu0
    %v1963 = vadd.f32 0.0, %v1962
    %v1964 = vpop.f32.mrf.mxu0
    %1965 = vdwg.mxu0
    %s1966 = scalar_lea.vmem [#allocation7], 448
    %v1967 = vld [vmem:[%s1966] sm:$0xff]
    %v1968 = vld [vmem:[%s1966 + $0x8] sm:$0xff]
    %v1969 = vld [vmem:[%s1966 + $0x10] sm:$0xff]
    %v1970 = vld [vmem:[%s1966 + $0x18] sm:$0xff]
    %v1971 = vld [vmem:[%s1966 + $0x20] sm:$0xff]
    %v1972 = vld [vmem:[%s1966 + $0x28] sm:$0xff]
    %v1973 = vld [vmem:[%s1966 + $0x30] sm:$0xff]
    %v1974 = vld [vmem:[%s1966 + $0x38] sm:$0xff]
    %v1976 = vsel %vm681, %v1948, 0
    %v1979 = vsel %vm681, %v1953, 0
    %v1982 = vsel %vm681, %v1958, 0
    %v1985 = vsel %vm681, %v1963, 0
    %1987 = vmatprep.subr.mxu0 0.0
    %1988 = vmatpush1.msra.mxu0 0.0
    %1989 = vmatprep.subr.mxu0 0.0
    %1990 = vmatpush1.msra.mxu0 0.0
    %1991 = vmatprep.subr.mxu0 0.0
    %1992 = vmatpush1.msra.mxu0 0.0
    %1993 = vmatprep.subr.mxu0 0.0
    %1994 = vmatpush1.msra.mxu0 0.0
    %1995 = vmatprep.subr.mxu0 0.0
    %1996 = vmatpush1.msra.mxu0 0.0
    %1997 = vmatprep.subr.mxu0 0.0
    %1998 = vmatpush1.msra.mxu0 0.0
    %1999 = vmatprep.subr.mxu0 0.0
    %2000 = vmatpush1.msra.mxu0 0.0
    %2001 = vmatprep.subr.mxu0 0.0
    %2002 = vmatpush1.msra.mxu0 0.0
    %2003 = vmatprep.subr.mxu0 0.0
    %2004 = vmatpush1.msra.mxu0 %v1974
    %2005 = vmatprep.subr.mxu0 0.0
    %2006 = vmatpush1.msra.mxu0 %v1973
    %2007 = vmatprep.subr.mxu0 0.0
    %2008 = vmatpush1.msra.mxu0 %v1972
    %2009 = vmatprep.subr.mxu0 0.0
    %2010 = vmatpush1.msra.mxu0 %v1971
    %2011 = vmatprep.subr.mxu0 0.0
    %2012 = vmatpush1.msra.mxu0 %v1970
    %2013 = vmatprep.subr.mxu0 0.0
    %2014 = vmatpush1.msra.mxu0 %v1969
    %2015 = vmatprep.subr.mxu0 0.0
    %2016 = vmatpush1.msra.mxu0 %v1968
    %2017 = vmatprep.subr.mxu0 0.0
    %2018 = vmatpush1.msra.mxu0 %v1967
    %2019 = vmatprep.subr.mxu0 0.0
    %2020 = vmatpush2.msra.mxu0 0.0
    %2021 = vmatprep.subr.mxu0 0.0
    %2022 = vmatpush2.msra.mxu0 0.0
    %2023 = vmatprep.subr.mxu0 0.0
    %2024 = vmatpush2.msra.mxu0 0.0
    %2025 = vmatprep.subr.mxu0 0.0
    %2026 = vmatpush2.msra.mxu0 0.0
    %2027 = vmatprep.subr.mxu0 0.0
    %2028 = vmatpush2.msra.mxu0 0.0
    %2029 = vmatprep.subr.mxu0 0.0
    %2030 = vmatpush2.msra.mxu0 0.0
    %2031 = vmatprep.subr.mxu0 0.0
    %2032 = vmatpush2.msra.mxu0 0.0
    %2033 = vmatprep.subr.mxu0 0.0
    %2034 = vmatpush2.msra.mxu0 0.0
    %2035 = vmatprep.subr.mxu0 0.0
    %2036 = vmatpush2.msra.mxu0 0.0
    %2037 = vmatprep.subr.mxu0 0.0
    %2038 = vmatpush2.msra.mxu0 0.0
    %2039 = vmatprep.subr.mxu0 0.0
    %2040 = vmatpush2.msra.mxu0 0.0
    %2041 = vmatprep.subr.mxu0 0.0
    %2042 = vmatpush2.msra.mxu0 0.0
    %2043 = vmatprep.subr.mxu0 0.0
    %2044 = vmatpush2.msra.mxu0 0.0
    %2045 = vmatprep.subr.mxu0 0.0
    %2046 = vmatpush2.msra.mxu0 0.0
    %2047 = vmatprep.subr.mxu0 0.0
    %2048 = vmatpush2.msra.mxu0 0.0
    %2049 = vmatprep.subr.mxu0 0.0
    %2050 = vmatpush2.msra.mxu0 0.0
    %2051 = vmatprep.mubr.f32.mxu0 0.0
    %2052 = vmatmul.mubr.f32.gmra.mxu0 %v1976
    %v2053 = vpop.f32.mrf.mxu0
    %v2054 = vadd.f32 0.0, %v2053
    %v2055 = vpop.f32.mrf.mxu0
    %2056 = vmatprep.mubr.f32.mxu0 0.0
    %2057 = vmatmul.mubr.f32.gmra.mxu0 %v1979
    %v2058 = vpop.f32.mrf.mxu0
    %v2059 = vadd.f32 0.0, %v2058
    %v2060 = vpop.f32.mrf.mxu0
    %2061 = vmatprep.mubr.f32.mxu0 0.0
    %2062 = vmatmul.mubr.f32.gmra.mxu0 %v1982
    %v2063 = vpop.f32.mrf.mxu0
    %v2064 = vadd.f32 0.0, %v2063
    %v2065 = vpop.f32.mrf.mxu0
    %2066 = vmatprep.mubr.f32.mxu0 0.0
    %2067 = vmatmul.mubr.f32.gmra.mxu0 %v1985
    %v2068 = vpop.f32.mrf.mxu0
    %v2069 = vadd.f32 0.0, %v2068
    %v2070 = vpop.f32.mrf.mxu0
    %2071 = vdwg.mxu0
    %v2072 = vadd.f32 %v1872, %v2054
    %v2073 = vadd.f32 %v1873, %v2059
    %v2074 = vadd.f32 %v1874, %v2064
    %v2075 = vadd.f32 %v1875, %v2069
    %s2076 = scalar_lea.vmem [#allocation5], 256
    %v2077 = vld [vmem:[%s2076] sm:$0xff]
    %v2078 = vld [vmem:[%s2076 + $0x8] sm:$0xff]
    %v2079 = vld [vmem:[%s2076 + $0x10] sm:$0xff]
    %v2080 = vld [vmem:[%s2076 + $0x18] sm:$0xff]
    %2081 = vmatprep.subr.mxu0 0.0
    %2082 = vmatpush1.msra.mxu0 %v484
    %2083 = vmatprep.subr.mxu0 0.0
    %2084 = vmatpush1.msra.mxu0 %v483
    %2085 = vmatprep.subr.mxu0 0.0
    %2086 = vmatpush1.msra.mxu0 %v482
    %2087 = vmatprep.subr.mxu0 0.0
    %2088 = vmatpush1.msra.mxu0 %v481
    %2089 = vmatprep.subr.mxu0 0.0
    %2090 = vmatpush1.msra.mxu0 %v480
    %2091 = vmatprep.subr.mxu0 0.0
    %2092 = vmatpush1.msra.mxu0 %v479
    %2093 = vmatprep.subr.mxu0 0.0
    %2094 = vmatpush1.msra.mxu0 %v478
    %2095 = vmatprep.subr.mxu0 0.0
    %2096 = vmatpush1.msra.mxu0 %v477
    %2097 = vmatprep.subr.mxu0 0.0
    %2098 = vmatpush1.msra.mxu0 %v476
    %2099 = vmatprep.subr.mxu0 0.0
    %2100 = vmatpush1.msra.mxu0 %v475
    %2101 = vmatprep.subr.mxu0 0.0
    %2102 = vmatpush1.msra.mxu0 %v474
    %2103 = vmatprep.subr.mxu0 0.0
    %2104 = vmatpush1.msra.mxu0 %v473
    %2105 = vmatprep.subr.mxu0 0.0
    %2106 = vmatpush1.msra.mxu0 %v472
    %2107 = vmatprep.subr.mxu0 0.0
    %2108 = vmatpush1.msra.mxu0 %v471
    %2109 = vmatprep.subr.mxu0 0.0
    %2110 = vmatpush1.msra.mxu0 %v470
    %2111 = vmatprep.subr.mxu0 0.0
    %2112 = vmatpush1.msra.mxu0 %v469
    %2113 = vmatprep.subr.mxu0 0.0
    %2114 = vmatpush2.msra.mxu0 0.0
    %2115 = vmatprep.subr.mxu0 0.0
    %2116 = vmatpush2.msra.mxu0 0.0
    %2117 = vmatprep.subr.mxu0 0.0
    %2118 = vmatpush2.msra.mxu0 0.0
    %2119 = vmatprep.subr.mxu0 0.0
    %2120 = vmatpush2.msra.mxu0 0.0
    %2121 = vmatprep.subr.mxu0 0.0
    %2122 = vmatpush2.msra.mxu0 0.0
    %2123 = vmatprep.subr.mxu0 0.0
    %2124 = vmatpush2.msra.mxu0 0.0
    %2125 = vmatprep.subr.mxu0 0.0
    %2126 = vmatpush2.msra.mxu0 0.0
    %2127 = vmatprep.subr.mxu0 0.0
    %2128 = vmatpush2.msra.mxu0 0.0
    %2129 = vmatprep.subr.mxu0 0.0
    %2130 = vmatpush2.msra.mxu0 0.0
    %2131 = vmatprep.subr.mxu0 0.0
    %2132 = vmatpush2.msra.mxu0 0.0
    %2133 = vmatprep.subr.mxu0 0.0
    %2134 = vmatpush2.msra.mxu0 0.0
    %2135 = vmatprep.subr.mxu0 0.0
    %2136 = vmatpush2.msra.mxu0 0.0
    %2137 = vmatprep.subr.mxu0 0.0
    %2138 = vmatpush2.msra.mxu0 0.0
    %2139 = vmatprep.subr.mxu0 0.0
    %2140 = vmatpush2.msra.mxu0 0.0
    %2141 = vmatprep.subr.mxu0 0.0
    %2142 = vmatpush2.msra.mxu0 0.0
    %2143 = vmatprep.subr.mxu0 0.0
    %2144 = vmatpush2.msra.mxu0 0.0
    %2145 = vmatprep.mubr.f32.mxu0 0.0
    %2146 = vmatmul.mubr.f32.gmra.mxu0 %v2077
    %v2147 = vpop.f32.mrf.mxu0
    %v2148 = vadd.f32 0.0, %v2147
    %v2149 = vpop.f32.mrf.mxu0
    %2150 = vmatprep.mubr.f32.mxu0 0.0
    %2151 = vmatmul.mubr.f32.gmra.mxu0 %v2078
    %v2152 = vpop.f32.mrf.mxu0
    %v2153 = vadd.f32 0.0, %v2152
    %v2154 = vpop.f32.mrf.mxu0
    %2155 = vmatprep.mubr.f32.mxu0 0.0
    %2156 = vmatmul.mubr.f32.gmra.mxu0 %v2079
    %v2157 = vpop.f32.mrf.mxu0
    %v2158 = vadd.f32 0.0, %v2157
    %v2159 = vpop.f32.mrf.mxu0
    %2160 = vmatprep.mubr.f32.mxu0 0.0
    %2161 = vmatmul.mubr.f32.gmra.mxu0 %v2080
    %v2162 = vpop.f32.mrf.mxu0
    %v2163 = vadd.f32 0.0, %v2162
    %v2164 = vpop.f32.mrf.mxu0
    %2165 = vdwg.mxu0
    %s2166 = scalar_lea.vmem [#allocation7], 512
    %v2167 = vld [vmem:[%s2166] sm:$0xff]
    %v2168 = vld [vmem:[%s2166 + $0x8] sm:$0xff]
    %v2169 = vld [vmem:[%s2166 + $0x10] sm:$0xff]
    %v2170 = vld [vmem:[%s2166 + $0x18] sm:$0xff]
    %v2171 = vld [vmem:[%s2166 + $0x20] sm:$0xff]
    %v2172 = vld [vmem:[%s2166 + $0x28] sm:$0xff]
    %v2173 = vld [vmem:[%s2166 + $0x30] sm:$0xff]
    %v2174 = vld [vmem:[%s2166 + $0x38] sm:$0xff]
    %v2176 = vsel %vm681, %v2148, 0
    %v2179 = vsel %vm681, %v2153, 0
    %v2182 = vsel %vm681, %v2158, 0
    %v2185 = vsel %vm681, %v2163, 0
    %2187 = vmatprep.subr.mxu0 0.0
    %2188 = vmatpush1.msra.mxu0 0.0
    %2189 = vmatprep.subr.mxu0 0.0
    %2190 = vmatpush1.msra.mxu0 0.0
    %2191 = vmatprep.subr.mxu0 0.0
    %2192 = vmatpush1.msra.mxu0 0.0
    %2193 = vmatprep.subr.mxu0 0.0
    %2194 = vmatpush1.msra.mxu0 0.0
    %2195 = vmatprep.subr.mxu0 0.0
    %2196 = vmatpush1.msra.mxu0 0.0
    %2197 = vmatprep.subr.mxu0 0.0
    %2198 = vmatpush1.msra.mxu0 0.0
    %2199 = vmatprep.subr.mxu0 0.0
    %2200 = vmatpush1.msra.mxu0 0.0
    %2201 = vmatprep.subr.mxu0 0.0
    %2202 = vmatpush1.msra.mxu0 0.0
    %2203 = vmatprep.subr.mxu0 0.0
    %2204 = vmatpush1.msra.mxu0 %v2174
    %2205 = vmatprep.subr.mxu0 0.0
    %2206 = vmatpush1.msra.mxu0 %v2173
    %2207 = vmatprep.subr.mxu0 0.0
    %2208 = vmatpush1.msra.mxu0 %v2172
    %2209 = vmatprep.subr.mxu0 0.0
    %2210 = vmatpush1.msra.mxu0 %v2171
    %2211 = vmatprep.subr.mxu0 0.0
    %2212 = vmatpush1.msra.mxu0 %v2170
    %2213 = vmatprep.subr.mxu0 0.0
    %2214 = vmatpush1.msra.mxu0 %v2169
    %2215 = vmatprep.subr.mxu0 0.0
    %2216 = vmatpush1.msra.mxu0 %v2168
    %2217 = vmatprep.subr.mxu0 0.0
    %2218 = vmatpush1.msra.mxu0 %v2167
    %2219 = vmatprep.subr.mxu0 0.0
    %2220 = vmatpush2.msra.mxu0 0.0
    %2221 = vmatprep.subr.mxu0 0.0
    %2222 = vmatpush2.msra.mxu0 0.0
    %2223 = vmatprep.subr.mxu0 0.0
    %2224 = vmatpush2.msra.mxu0 0.0
    %2225 = vmatprep.subr.mxu0 0.0
    %2226 = vmatpush2.msra.mxu0 0.0
    %2227 = vmatprep.subr.mxu0 0.0
    %2228 = vmatpush2.msra.mxu0 0.0
    %2229 = vmatprep.subr.mxu0 0.0
    %2230 = vmatpush2.msra.mxu0 0.0
    %2231 = vmatprep.subr.mxu0 0.0
    %2232 = vmatpush2.msra.mxu0 0.0
    %2233 = vmatprep.subr.mxu0 0.0
    %2234 = vmatpush2.msra.mxu0 0.0
    %2235 = vmatprep.subr.mxu0 0.0
    %2236 = vmatpush2.msra.mxu0 0.0
    %2237 = vmatprep.subr.mxu0 0.0
    %2238 = vmatpush2.msra.mxu0 0.0
    %2239 = vmatprep.subr.mxu0 0.0
    %2240 = vmatpush2.msra.mxu0 0.0
    %2241 = vmatprep.subr.mxu0 0.0
    %2242 = vmatpush2.msra.mxu0 0.0
    %2243 = vmatprep.subr.mxu0 0.0
    %2244 = vmatpush2.msra.mxu0 0.0
    %2245 = vmatprep.subr.mxu0 0.0
    %2246 = vmatpush2.msra.mxu0 0.0
    %2247 = vmatprep.subr.mxu0 0.0
    %2248 = vmatpush2.msra.mxu0 0.0
    %2249 = vmatprep.subr.mxu0 0.0
    %2250 = vmatpush2.msra.mxu0 0.0
    %2251 = vmatprep.mubr.f32.mxu0 0.0
    %2252 = vmatmul.mubr.f32.gmra.mxu0 %v2176
    %v2253 = vpop.f32.mrf.mxu0
    %v2254 = vadd.f32 0.0, %v2253
    %v2255 = vpop.f32.mrf.mxu0
    %2256 = vmatprep.mubr.f32.mxu0 0.0
    %2257 = vmatmul.mubr.f32.gmra.mxu0 %v2179
    %v2258 = vpop.f32.mrf.mxu0
    %v2259 = vadd.f32 0.0, %v2258
    %v2260 = vpop.f32.mrf.mxu0
    %2261 = vmatprep.mubr.f32.mxu0 0.0
    %2262 = vmatmul.mubr.f32.gmra.mxu0 %v2182
    %v2263 = vpop.f32.mrf.mxu0
    %v2264 = vadd.f32 0.0, %v2263
    %v2265 = vpop.f32.mrf.mxu0
    %2266 = vmatprep.mubr.f32.mxu0 0.0
    %2267 = vmatmul.mubr.f32.gmra.mxu0 %v2185
    %v2268 = vpop.f32.mrf.mxu0
    %v2269 = vadd.f32 0.0, %v2268
    %v2270 = vpop.f32.mrf.mxu0
    %2271 = vdwg.mxu0
    %v2272 = vadd.f32 %v2072, %v2254
    %v2273 = vadd.f32 %v2073, %v2259
    %v2274 = vadd.f32 %v2074, %v2264
    %v2275 = vadd.f32 %v2075, %v2269
    %v2276 = vld [vmem:[#allocation8] sm:$0x1]
    %v2278 = vlaneseq
    %v2279 = vshrl.u32 %v2278, 7
    %v2280 = vsub.s32 0, %v2279
    %v2281 = vrot.slane %v2276, %v2280
    %v2283 = vadd.f32 %v2272, %v2281
    %v2284 = vadd.f32 %v2273, %v2281
    %v2285 = vadd.f32 %v2274, %v2281
    %v2286 = vadd.f32 %v2275, %v2281
    %v2287 = vmax.f32 %v2283, 0.0
    %v2288 = vmax.f32 %v2284, 0.0
    %v2289 = vmax.f32 %v2285, 0.0
    %v2290 = vmax.f32 %v2286, 0.0
    %v2291 = vld [vmem:[#allocation10] sm:$0xff]
    %vm2292 = vcmask 261120
    %v2294 = vsel %vm2292, %v2291, 0
    %2296 = vmatprep.subr.mxu0 0.0
    %2297 = vmatpush1.msra.mxu0 0.0
    %2298 = vmatprep.subr.mxu0 0.0
    %2299 = vmatpush1.msra.mxu0 0.0
    %2300 = vmatprep.subr.mxu0 0.0
    %2301 = vmatpush1.msra.mxu0 0.0
    %2302 = vmatprep.subr.mxu0 0.0
    %2303 = vmatpush1.msra.mxu0 0.0
    %2304 = vmatprep.subr.mxu0 0.0
    %2305 = vmatpush1.msra.mxu0 0.0
    %2306 = vmatprep.subr.mxu0 0.0
    %2307 = vmatpush1.msra.mxu0 0.0
    %2308 = vmatprep.subr.mxu0 0.0
    %2309 = vmatpush1.msra.mxu0 0.0
    %2310 = vmatprep.subr.mxu0 0.0
    %2311 = vmatpush1.msra.mxu0 0.0
    %2312 = vmatprep.subr.mxu0 0.0
    %2313 = vmatpush1.msra.mxu0 0.0
    %2314 = vmatprep.subr.mxu0 0.0
    %2315 = vmatpush1.msra.mxu0 0.0
    %2316 = vmatprep.subr.mxu0 0.0
    %2317 = vmatpush1.msra.mxu0 0.0
    %2318 = vmatprep.subr.mxu0 0.0
    %2319 = vmatpush1.msra.mxu0 0.0
    %2320 = vmatprep.subr.mxu0 0.0
    %2321 = vmatpush1.msra.mxu0 %v2290
    %2322 = vmatprep.subr.mxu0 0.0
    %2323 = vmatpush1.msra.mxu0 %v2289
    %2324 = vmatprep.subr.mxu0 0.0
    %2325 = vmatpush1.msra.mxu0 %v2288
    %2326 = vmatprep.subr.mxu0 0.0
    %2327 = vmatpush1.msra.mxu0 %v2287
    %2328 = vmatprep.subr.mxu0 0.0
    %2329 = vmatpush2.msra.mxu0 0.0
    %2330 = vmatprep.subr.mxu0 0.0
    %2331 = vmatpush2.msra.mxu0 0.0
    %2332 = vmatprep.subr.mxu0 0.0
    %2333 = vmatpush2.msra.mxu0 0.0
    %2334 = vmatprep.subr.mxu0 0.0
    %2335 = vmatpush2.msra.mxu0 0.0
    %2336 = vmatprep.subr.mxu0 0.0
    %2337 = vmatpush2.msra.mxu0 0.0
    %2338 = vmatprep.subr.mxu0 0.0
    %2339 = vmatpush2.msra.mxu0 0.0
    %2340 = vmatprep.subr.mxu0 0.0
    %2341 = vmatpush2.msra.mxu0 0.0
    %2342 = vmatprep.subr.mxu0 0.0
    %2343 = vmatpush2.msra.mxu0 0.0
    %2344 = vmatprep.subr.mxu0 0.0
    %2345 = vmatpush2.msra.mxu0 0.0
    %2346 = vmatprep.subr.mxu0 0.0
    %2347 = vmatpush2.msra.mxu0 0.0
    %2348 = vmatprep.subr.mxu0 0.0
    %2349 = vmatpush2.msra.mxu0 0.0
    %2350 = vmatprep.subr.mxu0 0.0
    %2351 = vmatpush2.msra.mxu0 0.0
    %2352 = vmatprep.subr.mxu0 0.0
    %2353 = vmatpush2.msra.mxu0 0.0
    %2354 = vmatprep.subr.mxu0 0.0
    %2355 = vmatpush2.msra.mxu0 0.0
    %2356 = vmatprep.subr.mxu0 0.0
    %2357 = vmatpush2.msra.mxu0 0.0
    %2358 = vmatprep.subr.mxu0 0.0
    %2359 = vmatpush2.msra.mxu0 0.0
    %2360 = vmatprep.mubr.f32.mxu0 0.0
    %2361 = vmatmul.mubr.f32.gmra.mxu0 %v2294
    %v2362 = vpop.f32.mrf.mxu0
    %v2363 = vadd.f32 0.0, %v2362
    %v2364 = vpop.f32.mrf.mxu0
    %2365 = vdwg.mxu0
    %v2366 = vld [vmem:[#allocation11] sm:$0xff]
    %v2367 = vld [vmem:[#allocation11 + $0x8] sm:$0xff]
    %v2368 = vld [vmem:[#allocation11 + $0x10] sm:$0xff]
    %v2369 = vld [vmem:[#allocation11 + $0x18] sm:$0xff]
    %v2370 = vld [vmem:[#allocation11 + $0x20] sm:$0xff]
    %v2371 = vld [vmem:[#allocation11 + $0x28] sm:$0xff]
    %v2372 = vld [vmem:[#allocation11 + $0x30] sm:$0xff]
    %v2373 = vld [vmem:[#allocation11 + $0x38] sm:$0xff]
    %v2374 = vld [vmem:[#allocation11 + $0x40] sm:$0xff]
    %v2375 = vld [vmem:[#allocation11 + $0x48] sm:$0xff]
    %v2376 = vld [vmem:[#allocation11 + $0x50] sm:$0xff]
    %v2377 = vld [vmem:[#allocation11 + $0x58] sm:$0xff]
    %v2378 = vld [vmem:[#allocation11 + $0x60] sm:$0xff]
    %v2379 = vld [vmem:[#allocation11 + $0x68] sm:$0xff]
    %v2380 = vld [vmem:[#allocation11 + $0x70] sm:$0xff]
    %v2381 = vld [vmem:[#allocation11 + $0x78] sm:$0xff]
    %v2382 = vld [vmem:[#allocation11 + $0x80] sm:$0xff]
    %v2383 = vld [vmem:[#allocation11 + $0x88] sm:$0xff]
    %v2384 = vld [vmem:[#allocation11 + $0x90] sm:$0xff]
    %v2385 = vld [vmem:[#allocation11 + $0x98] sm:$0xff]
    %v2386 = vld [vmem:[#allocation11 + $0xa0] sm:$0xff]
    %v2387 = vld [vmem:[#allocation11 + $0xa8] sm:$0xff]
    %v2388 = vld [vmem:[#allocation11 + $0xb0] sm:$0xff]
    %v2389 = vld [vmem:[#allocation11 + $0xb8] sm:$0xff]
    %v2390 = vld [vmem:[#allocation11 + $0xc0] sm:$0xff]
    %v2391 = vld [vmem:[#allocation11 + $0xc8] sm:$0xff]
    %v2392 = vld [vmem:[#allocation11 + $0xd0] sm:$0xff]
    %v2393 = vld [vmem:[#allocation11 + $0xd8] sm:$0xff]
    %v2394 = vld [vmem:[#allocation11 + $0xe0] sm:$0xff]
    %v2395 = vld [vmem:[#allocation11 + $0xe8] sm:$0xff]
    %v2396 = vld [vmem:[#allocation11 + $0xf0] sm:$0xff]
    %v2397 = vld [vmem:[#allocation11 + $0xf8] sm:$0xff]
    %s2398 = scalar_lea.vmem [#allocation10], 8
    %v2399 = vld [vmem:[%s2398] sm:$0xff]
    %v2401 = vsel %vm2292, %v2399, 0
    %2403 = vmatprep.subr.mxu0 0.0
    %2404 = vmatpush1.msra.mxu0 0.0
    %2405 = vmatprep.subr.mxu0 0.0
    %2406 = vmatpush1.msra.mxu0 0.0
    %2407 = vmatprep.subr.mxu0 0.0
    %2408 = vmatpush1.msra.mxu0 0.0
    %2409 = vmatprep.subr.mxu0 0.0
    %2410 = vmatpush1.msra.mxu0 0.0
    %2411 = vmatprep.subr.mxu0 0.0
    %2412 = vmatpush1.msra.mxu0 0.0
    %2413 = vmatprep.subr.mxu0 0.0
    %2414 = vmatpush1.msra.mxu0 0.0
    %2415 = vmatprep.subr.mxu0 0.0
    %2416 = vmatpush1.msra.mxu0 0.0
    %2417 = vmatprep.subr.mxu0 0.0
    %2418 = vmatpush1.msra.mxu0 0.0
    %2419 = vmatprep.subr.mxu0 0.0
    %2420 = vmatpush1.msra.mxu0 0.0
    %2421 = vmatprep.subr.mxu0 0.0
    %2422 = vmatpush1.msra.mxu0 0.0
    %2423 = vmatprep.subr.mxu0 0.0
    %2424 = vmatpush1.msra.mxu0 0.0
    %2425 = vmatprep.subr.mxu0 0.0
    %2426 = vmatpush1.msra.mxu0 0.0
    %2427 = vmatprep.subr.mxu0 0.0
    %2428 = vmatpush1.msra.mxu0 %v2290
    %2429 = vmatprep.subr.mxu0 0.0
    %2430 = vmatpush1.msra.mxu0 %v2289
    %2431 = vmatprep.subr.mxu0 0.0
    %2432 = vmatpush1.msra.mxu0 %v2288
    %2433 = vmatprep.subr.mxu0 0.0
    %2434 = vmatpush1.msra.mxu0 %v2287
    %2435 = vmatprep.subr.mxu0 0.0
    %2436 = vmatpush2.msra.mxu0 0.0
    %2437 = vmatprep.subr.mxu0 0.0
    %2438 = vmatpush2.msra.mxu0 0.0
    %2439 = vmatprep.subr.mxu0 0.0
    %2440 = vmatpush2.msra.mxu0 0.0
    %2441 = vmatprep.subr.mxu0 0.0
    %2442 = vmatpush2.msra.mxu0 0.0
    %2443 = vmatprep.subr.mxu0 0.0
    %2444 = vmatpush2.msra.mxu0 0.0
    %2445 = vmatprep.subr.mxu0 0.0
    %2446 = vmatpush2.msra.mxu0 0.0
    %2447 = vmatprep.subr.mxu0 0.0
    %2448 = vmatpush2.msra.mxu0 0.0
    %2449 = vmatprep.subr.mxu0 0.0
    %2450 = vmatpush2.msra.mxu0 0.0
    %2451 = vmatprep.subr.mxu0 0.0
    %2452 = vmatpush2.msra.mxu0 0.0
    %2453 = vmatprep.subr.mxu0 0.0
    %2454 = vmatpush2.msra.mxu0 0.0
    %2455 = vmatprep.subr.mxu0 0.0
    %2456 = vmatpush2.msra.mxu0 0.0
    %2457 = vmatprep.subr.mxu0 0.0
    %2458 = vmatpush2.msra.mxu0 0.0
    %2459 = vmatprep.subr.mxu0 0.0
    %2460 = vmatpush2.msra.mxu0 0.0
    %2461 = vmatprep.subr.mxu0 0.0
    %2462 = vmatpush2.msra.mxu0 0.0
    %2463 = vmatprep.subr.mxu0 0.0
    %2464 = vmatpush2.msra.mxu0 0.0
    %2465 = vmatprep.subr.mxu0 0.0
    %2466 = vmatpush2.msra.mxu0 0.0
    %2467 = vmatprep.mubr.f32.mxu0 0.0
    %2468 = vmatmul.mubr.f32.gmra.mxu0 %v2401
    %v2469 = vpop.f32.mrf.mxu0
    %v2470 = vadd.f32 0.0, %v2469
    %v2471 = vpop.f32.mrf.mxu0
    %2472 = vdwg.mxu0
    %s2473 = scalar_lea.vmem [#allocation11], 256
    %v2474 = vld [vmem:[%s2473] sm:$0xff]
    %v2475 = vld [vmem:[%s2473 + $0x8] sm:$0xff]
    %v2476 = vld [vmem:[%s2473 + $0x10] sm:$0xff]
    %v2477 = vld [vmem:[%s2473 + $0x18] sm:$0xff]
    %v2478 = vld [vmem:[%s2473 + $0x20] sm:$0xff]
    %v2479 = vld [vmem:[%s2473 + $0x28] sm:$0xff]
    %v2480 = vld [vmem:[%s2473 + $0x30] sm:$0xff]
    %v2481 = vld [vmem:[%s2473 + $0x38] sm:$0xff]
    %v2482 = vld [vmem:[%s2473 + $0x40] sm:$0xff]
    %v2483 = vld [vmem:[%s2473 + $0x48] sm:$0xff]
    %v2484 = vld [vmem:[%s2473 + $0x50] sm:$0xff]
    %v2485 = vld [vmem:[%s2473 + $0x58] sm:$0xff]
    %v2486 = vld [vmem:[%s2473 + $0x60] sm:$0xff]
    %v2487 = vld [vmem:[%s2473 + $0x68] sm:$0xff]
    %v2488 = vld [vmem:[%s2473 + $0x70] sm:$0xff]
    %v2489 = vld [vmem:[%s2473 + $0x78] sm:$0xff]
    %v2490 = vld [vmem:[%s2473 + $0x80] sm:$0xff]
    %v2491 = vld [vmem:[%s2473 + $0x88] sm:$0xff]
    %v2492 = vld [vmem:[%s2473 + $0x90] sm:$0xff]
    %v2493 = vld [vmem:[%s2473 + $0x98] sm:$0xff]
    %v2494 = vld [vmem:[%s2473 + $0xa0] sm:$0xff]
    %v2495 = vld [vmem:[%s2473 + $0xa8] sm:$0xff]
    %v2496 = vld [vmem:[%s2473 + $0xb0] sm:$0xff]
    %v2497 = vld [vmem:[%s2473 + $0xb8] sm:$0xff]
    %v2498 = vld [vmem:[%s2473 + $0xc0] sm:$0xff]
    %v2499 = vld [vmem:[%s2473 + $0xc8] sm:$0xff]
    %v2500 = vld [vmem:[%s2473 + $0xd0] sm:$0xff]
    %v2501 = vld [vmem:[%s2473 + $0xd8] sm:$0xff]
    %v2502 = vld [vmem:[%s2473 + $0xe0] sm:$0xff]
    %v2503 = vld [vmem:[%s2473 + $0xe8] sm:$0xff]
    %v2504 = vld [vmem:[%s2473 + $0xf0] sm:$0xff]
    %v2505 = vld [vmem:[%s2473 + $0xf8] sm:$0xff]
    %2506 = vmatprep.subr.mxu0 %v2505
    %2507 = vmatpush1.msra.mxu0 %v2504
    %2508 = vmatprep.subr.mxu0 %v2503
    %2509 = vmatpush1.msra.mxu0 %v2502
    %2510 = vmatprep.subr.mxu0 %v2501
    %2511 = vmatpush1.msra.mxu0 %v2500
    %2512 = vmatprep.subr.mxu0 %v2499
    %2513 = vmatpush1.msra.mxu0 %v2498
    %2514 = vmatprep.subr.mxu0 %v2497
    %2515 = vmatpush1.msra.mxu0 %v2496
    %2516 = vmatprep.subr.mxu0 %v2495
    %2517 = vmatpush1.msra.mxu0 %v2494
    %2518 = vmatprep.subr.mxu0 %v2493
    %2519 = vmatpush1.msra.mxu0 %v2492
    %2520 = vmatprep.subr.mxu0 %v2491
    %2521 = vmatpush1.msra.mxu0 %v2490
    %2522 = vmatprep.subr.mxu0 %v2489
    %2523 = vmatpush1.msra.mxu0 %v2488
    %2524 = vmatprep.subr.mxu0 %v2487
    %2525 = vmatpush1.msra.mxu0 %v2486
    %2526 = vmatprep.subr.mxu0 %v2485
    %2527 = vmatpush1.msra.mxu0 %v2484
    %2528 = vmatprep.subr.mxu0 %v2483
    %2529 = vmatpush1.msra.mxu0 %v2482
    %2530 = vmatprep.subr.mxu0 %v2481
    %2531 = vmatpush1.msra.mxu0 %v2480
    %2532 = vmatprep.subr.mxu0 %v2479
    %2533 = vmatpush1.msra.mxu0 %v2478
    %2534 = vmatprep.subr.mxu0 %v2477
    %2535 = vmatpush1.msra.mxu0 %v2476
    %2536 = vmatprep.subr.mxu0 %v2475
    %2537 = vmatpush1.msra.mxu0 %v2474
    %2538 = vmatprep.subr.mxu0 0.0
    %2539 = vmatpush2.msra.mxu0 0.0
    %2540 = vmatprep.subr.mxu0 0.0
    %2541 = vmatpush2.msra.mxu0 0.0
    %2542 = vmatprep.subr.mxu0 0.0
    %2543 = vmatpush2.msra.mxu0 0.0
    %2544 = vmatprep.subr.mxu0 0.0
    %2545 = vmatpush2.msra.mxu0 0.0
    %2546 = vmatprep.subr.mxu0 0.0
    %2547 = vmatpush2.msra.mxu0 0.0
    %2548 = vmatprep.subr.mxu0 0.0
    %2549 = vmatpush2.msra.mxu0 0.0
    %2550 = vmatprep.subr.mxu0 0.0
    %2551 = vmatpush2.msra.mxu0 0.0
    %2552 = vmatprep.subr.mxu0 0.0
    %2553 = vmatpush2.msra.mxu0 0.0
    %2554 = vmatprep.subr.mxu0 0.0
    %2555 = vmatpush2.msra.mxu0 0.0
    %2556 = vmatprep.subr.mxu0 0.0
    %2557 = vmatpush2.msra.mxu0 0.0
    %2558 = vmatprep.subr.mxu0 0.0
    %2559 = vmatpush2.msra.mxu0 0.0
    %2560 = vmatprep.subr.mxu0 0.0
    %2561 = vmatpush2.msra.mxu0 0.0
    %2562 = vmatprep.subr.mxu0 0.0
    %2563 = vmatpush2.msra.mxu0 0.0
    %2564 = vmatprep.subr.mxu0 0.0
    %2565 = vmatpush2.msra.mxu0 0.0
    %2566 = vmatprep.subr.mxu0 0.0
    %2567 = vmatpush2.msra.mxu0 0.0
    %2568 = vmatprep.subr.mxu0 0.0
    %2569 = vmatpush2.msra.mxu0 0.0
    %2570 = vmatprep.mubr.f32.mxu0 0.0
    %2571 = vmatmul.mubr.f32.gmra.mxu0 %v2470
    %v2572 = vpop.f32.mrf.mxu0
    %v2573 = vadd.f32 0.0, %v2572
    %v2574 = vpop.f32.mrf.mxu0
    %v2575 = vadd.f32 0.0, %v2574
    %2576 = vdwg.mxu0
    %2577 = vmatprep.subr.mxu0 %v2397
    %2578 = vmatpush1.msra.mxu0 %v2396
    %2579 = vmatprep.subr.mxu0 %v2395
    %2580 = vmatpush1.msra.mxu0 %v2394
    %2581 = vmatprep.subr.mxu0 %v2393
    %2582 = vmatpush1.msra.mxu0 %v2392
    %2583 = vmatprep.subr.mxu0 %v2391
    %2584 = vmatpush1.msra.mxu0 %v2390
    %2585 = vmatprep.subr.mxu0 %v2389
    %2586 = vmatpush1.msra.mxu0 %v2388
    %2587 = vmatprep.subr.mxu0 %v2387
    %2588 = vmatpush1.msra.mxu0 %v2386
    %2589 = vmatprep.subr.mxu0 %v2385
    %2590 = vmatpush1.msra.mxu0 %v2384
    %2591 = vmatprep.subr.mxu0 %v2383
    %2592 = vmatpush1.msra.mxu0 %v2382
    %2593 = vmatprep.subr.mxu0 %v2381
    %2594 = vmatpush1.msra.mxu0 %v2380
    %2595 = vmatprep.subr.mxu0 %v2379
    %2596 = vmatpush1.msra.mxu0 %v2378
    %2597 = vmatprep.subr.mxu0 %v2377
    %2598 = vmatpush1.msra.mxu0 %v2376
    %2599 = vmatprep.subr.mxu0 %v2375
    %2600 = vmatpush1.msra.mxu0 %v2374
    %2601 = vmatprep.subr.mxu0 %v2373
    %2602 = vmatpush1.msra.mxu0 %v2372
    %2603 = vmatprep.subr.mxu0 %v2371
    %2604 = vmatpush1.msra.mxu0 %v2370
    %2605 = vmatprep.subr.mxu0 %v2369
    %2606 = vmatpush1.msra.mxu0 %v2368
    %2607 = vmatprep.subr.mxu0 %v2367
    %2608 = vmatpush1.msra.mxu0 %v2366
    %2609 = vmatprep.subr.mxu0 0.0
    %2610 = vmatpush2.msra.mxu0 0.0
    %2611 = vmatprep.subr.mxu0 0.0
    %2612 = vmatpush2.msra.mxu0 0.0
    %2613 = vmatprep.subr.mxu0 0.0
    %2614 = vmatpush2.msra.mxu0 0.0
    %2615 = vmatprep.subr.mxu0 0.0
    %2616 = vmatpush2.msra.mxu0 0.0
    %2617 = vmatprep.subr.mxu0 0.0
    %2618 = vmatpush2.msra.mxu0 0.0
    %2619 = vmatprep.subr.mxu0 0.0
    %2620 = vmatpush2.msra.mxu0 0.0
    %2621 = vmatprep.subr.mxu0 0.0
    %2622 = vmatpush2.msra.mxu0 0.0
    %2623 = vmatprep.subr.mxu0 0.0
    %2624 = vmatpush2.msra.mxu0 0.0
    %2625 = vmatprep.subr.mxu0 0.0
    %2626 = vmatpush2.msra.mxu0 0.0
    %2627 = vmatprep.subr.mxu0 0.0
    %2628 = vmatpush2.msra.mxu0 0.0
    %2629 = vmatprep.subr.mxu0 0.0
    %2630 = vmatpush2.msra.mxu0 0.0
    %2631 = vmatprep.subr.mxu0 0.0
    %2632 = vmatpush2.msra.mxu0 0.0
    %2633 = vmatprep.subr.mxu0 0.0
    %2634 = vmatpush2.msra.mxu0 0.0
    %2635 = vmatprep.subr.mxu0 0.0
    %2636 = vmatpush2.msra.mxu0 0.0
    %2637 = vmatprep.subr.mxu0 0.0
    %2638 = vmatpush2.msra.mxu0 0.0
    %2639 = vmatprep.subr.mxu0 0.0
    %2640 = vmatpush2.msra.mxu0 0.0
    %2641 = vmatprep.mubr.f32.mxu0 0.0
    %2642 = vmatmul.mubr.f32.gmra.mxu0 %v2363
    %v2643 = vpop.f32.mrf.mxu0
    %v2644 = vadd.f32 %v2573, %v2643
    %v2645 = vpop.f32.mrf.mxu0
    %v2646 = vadd.f32 %v2575, %v2645
    %2647 = vdwg.mxu0
    %s2648 = scalar_lea.vmem [#allocation10], 16
    %v2649 = vld [vmem:[%s2648] sm:$0xff]
    %v2651 = vsel %vm2292, %v2649, 0
    %2653 = vmatprep.subr.mxu0 0.0
    %2654 = vmatpush1.msra.mxu0 0.0
    %2655 = vmatprep.subr.mxu0 0.0
    %2656 = vmatpush1.msra.mxu0 0.0
    %2657 = vmatprep.subr.mxu0 0.0
    %2658 = vmatpush1.msra.mxu0 0.0
    %2659 = vmatprep.subr.mxu0 0.0
    %2660 = vmatpush1.msra.mxu0 0.0
    %2661 = vmatprep.subr.mxu0 0.0
    %2662 = vmatpush1.msra.mxu0 0.0
    %2663 = vmatprep.subr.mxu0 0.0
    %2664 = vmatpush1.msra.mxu0 0.0
    %2665 = vmatprep.subr.mxu0 0.0
    %2666 = vmatpush1.msra.mxu0 0.0
    %2667 = vmatprep.subr.mxu0 0.0
    %2668 = vmatpush1.msra.mxu0 0.0
    %2669 = vmatprep.subr.mxu0 0.0
    %2670 = vmatpush1.msra.mxu0 0.0
    %2671 = vmatprep.subr.mxu0 0.0
    %2672 = vmatpush1.msra.mxu0 0.0
    %2673 = vmatprep.subr.mxu0 0.0
    %2674 = vmatpush1.msra.mxu0 0.0
    %2675 = vmatprep.subr.mxu0 0.0
    %2676 = vmatpush1.msra.mxu0 0.0
    %2677 = vmatprep.subr.mxu0 0.0
    %2678 = vmatpush1.msra.mxu0 %v2290
    %2679 = vmatprep.subr.mxu0 0.0
    %2680 = vmatpush1.msra.mxu0 %v2289
    %2681 = vmatprep.subr.mxu0 0.0
    %2682 = vmatpush1.msra.mxu0 %v2288
    %2683 = vmatprep.subr.mxu0 0.0
    %2684 = vmatpush1.msra.mxu0 %v2287
    %2685 = vmatprep.subr.mxu0 0.0
    %2686 = vmatpush2.msra.mxu0 0.0
    %2687 = vmatprep.subr.mxu0 0.0
    %2688 = vmatpush2.msra.mxu0 0.0
    %2689 = vmatprep.subr.mxu0 0.0
    %2690 = vmatpush2.msra.mxu0 0.0
    %2691 = vmatprep.subr.mxu0 0.0
    %2692 = vmatpush2.msra.mxu0 0.0
    %2693 = vmatprep.subr.mxu0 0.0
    %2694 = vmatpush2.msra.mxu0 0.0
    %2695 = vmatprep.subr.mxu0 0.0
    %2696 = vmatpush2.msra.mxu0 0.0
    %2697 = vmatprep.subr.mxu0 0.0
    %2698 = vmatpush2.msra.mxu0 0.0
    %2699 = vmatprep.subr.mxu0 0.0
    %2700 = vmatpush2.msra.mxu0 0.0
    %2701 = vmatprep.subr.mxu0 0.0
    %2702 = vmatpush2.msra.mxu0 0.0
    %2703 = vmatprep.subr.mxu0 0.0
    %2704 = vmatpush2.msra.mxu0 0.0
    %2705 = vmatprep.subr.mxu0 0.0
    %2706 = vmatpush2.msra.mxu0 0.0
    %2707 = vmatprep.subr.mxu0 0.0
    %2708 = vmatpush2.msra.mxu0 0.0
    %2709 = vmatprep.subr.mxu0 0.0
    %2710 = vmatpush2.msra.mxu0 0.0
    %2711 = vmatprep.subr.mxu0 0.0
    %2712 = vmatpush2.msra.mxu0 0.0
    %2713 = vmatprep.subr.mxu0 0.0
    %2714 = vmatpush2.msra.mxu0 0.0
    %2715 = vmatprep.subr.mxu0 0.0
    %2716 = vmatpush2.msra.mxu0 0.0
    %2717 = vmatprep.mubr.f32.mxu0 0.0
    %2718 = vmatmul.mubr.f32.gmra.mxu0 %v2651
    %v2719 = vpop.f32.mrf.mxu0
    %v2720 = vadd.f32 0.0, %v2719
    %v2721 = vpop.f32.mrf.mxu0
    %2722 = vdwg.mxu0
    %s2723 = scalar_lea.vmem [#allocation11], 512
    %v2724 = vld [vmem:[%s2723] sm:$0xff]
    %v2725 = vld [vmem:[%s2723 + $0x8] sm:$0xff]
    %v2726 = vld [vmem:[%s2723 + $0x10] sm:$0xff]
    %v2727 = vld [vmem:[%s2723 + $0x18] sm:$0xff]
    %v2728 = vld [vmem:[%s2723 + $0x20] sm:$0xff]
    %v2729 = vld [vmem:[%s2723 + $0x28] sm:$0xff]
    %v2730 = vld [vmem:[%s2723 + $0x30] sm:$0xff]
    %v2731 = vld [vmem:[%s2723 + $0x38] sm:$0xff]
    %v2732 = vld [vmem:[%s2723 + $0x40] sm:$0xff]
    %v2733 = vld [vmem:[%s2723 + $0x48] sm:$0xff]
    %v2734 = vld [vmem:[%s2723 + $0x50] sm:$0xff]
    %v2735 = vld [vmem:[%s2723 + $0x58] sm:$0xff]
    %v2736 = vld [vmem:[%s2723 + $0x60] sm:$0xff]
    %v2737 = vld [vmem:[%s2723 + $0x68] sm:$0xff]
    %v2738 = vld [vmem:[%s2723 + $0x70] sm:$0xff]
    %v2739 = vld [vmem:[%s2723 + $0x78] sm:$0xff]
    %v2740 = vld [vmem:[%s2723 + $0x80] sm:$0xff]
    %v2741 = vld [vmem:[%s2723 + $0x88] sm:$0xff]
    %v2742 = vld [vmem:[%s2723 + $0x90] sm:$0xff]
    %v2743 = vld [vmem:[%s2723 + $0x98] sm:$0xff]
    %v2744 = vld [vmem:[%s2723 + $0xa0] sm:$0xff]
    %v2745 = vld [vmem:[%s2723 + $0xa8] sm:$0xff]
    %v2746 = vld [vmem:[%s2723 + $0xb0] sm:$0xff]
    %v2747 = vld [vmem:[%s2723 + $0xb8] sm:$0xff]
    %v2748 = vld [vmem:[%s2723 + $0xc0] sm:$0xff]
    %v2749 = vld [vmem:[%s2723 + $0xc8] sm:$0xff]
    %v2750 = vld [vmem:[%s2723 + $0xd0] sm:$0xff]
    %v2751 = vld [vmem:[%s2723 + $0xd8] sm:$0xff]
    %v2752 = vld [vmem:[%s2723 + $0xe0] sm:$0xff]
    %v2753 = vld [vmem:[%s2723 + $0xe8] sm:$0xff]
    %v2754 = vld [vmem:[%s2723 + $0xf0] sm:$0xff]
    %v2755 = vld [vmem:[%s2723 + $0xf8] sm:$0xff]
    %2756 = vmatprep.subr.mxu0 %v2755
    %2757 = vmatpush1.msra.mxu0 %v2754
    %2758 = vmatprep.subr.mxu0 %v2753
    %2759 = vmatpush1.msra.mxu0 %v2752
    %2760 = vmatprep.subr.mxu0 %v2751
    %2761 = vmatpush1.msra.mxu0 %v2750
    %2762 = vmatprep.subr.mxu0 %v2749
    %2763 = vmatpush1.msra.mxu0 %v2748
    %2764 = vmatprep.subr.mxu0 %v2747
    %2765 = vmatpush1.msra.mxu0 %v2746
    %2766 = vmatprep.subr.mxu0 %v2745
    %2767 = vmatpush1.msra.mxu0 %v2744
    %2768 = vmatprep.subr.mxu0 %v2743
    %2769 = vmatpush1.msra.mxu0 %v2742
    %2770 = vmatprep.subr.mxu0 %v2741
    %2771 = vmatpush1.msra.mxu0 %v2740
    %2772 = vmatprep.subr.mxu0 %v2739
    %2773 = vmatpush1.msra.mxu0 %v2738
    %2774 = vmatprep.subr.mxu0 %v2737
    %2775 = vmatpush1.msra.mxu0 %v2736
    %2776 = vmatprep.subr.mxu0 %v2735
    %2777 = vmatpush1.msra.mxu0 %v2734
    %2778 = vmatprep.subr.mxu0 %v2733
    %2779 = vmatpush1.msra.mxu0 %v2732
    %2780 = vmatprep.subr.mxu0 %v2731
    %2781 = vmatpush1.msra.mxu0 %v2730
    %2782 = vmatprep.subr.mxu0 %v2729
    %2783 = vmatpush1.msra.mxu0 %v2728
    %2784 = vmatprep.subr.mxu0 %v2727
    %2785 = vmatpush1.msra.mxu0 %v2726
    %2786 = vmatprep.subr.mxu0 %v2725
    %2787 = vmatpush1.msra.mxu0 %v2724
    %2788 = vmatprep.subr.mxu0 0.0
    %2789 = vmatpush2.msra.mxu0 0.0
    %2790 = vmatprep.subr.mxu0 0.0
    %2791 = vmatpush2.msra.mxu0 0.0
    %2792 = vmatprep.subr.mxu0 0.0
    %2793 = vmatpush2.msra.mxu0 0.0
    %2794 = vmatprep.subr.mxu0 0.0
    %2795 = vmatpush2.msra.mxu0 0.0
    %2796 = vmatprep.subr.mxu0 0.0
    %2797 = vmatpush2.msra.mxu0 0.0
    %2798 = vmatprep.subr.mxu0 0.0
    %2799 = vmatpush2.msra.mxu0 0.0
    %2800 = vmatprep.subr.mxu0 0.0
    %2801 = vmatpush2.msra.mxu0 0.0
    %2802 = vmatprep.subr.mxu0 0.0
    %2803 = vmatpush2.msra.mxu0 0.0
    %2804 = vmatprep.subr.mxu0 0.0
    %2805 = vmatpush2.msra.mxu0 0.0
    %2806 = vmatprep.subr.mxu0 0.0
    %2807 = vmatpush2.msra.mxu0 0.0
    %2808 = vmatprep.subr.mxu0 0.0
    %2809 = vmatpush2.msra.mxu0 0.0
    %2810 = vmatprep.subr.mxu0 0.0
    %2811 = vmatpush2.msra.mxu0 0.0
    %2812 = vmatprep.subr.mxu0 0.0
    %2813 = vmatpush2.msra.mxu0 0.0
    %2814 = vmatprep.subr.mxu0 0.0
    %2815 = vmatpush2.msra.mxu0 0.0
    %2816 = vmatprep.subr.mxu0 0.0
    %2817 = vmatpush2.msra.mxu0 0.0
    %2818 = vmatprep.subr.mxu0 0.0
    %2819 = vmatpush2.msra.mxu0 0.0
    %2820 = vmatprep.mubr.f32.mxu0 0.0
    %2821 = vmatmul.mubr.f32.gmra.mxu0 %v2720
    %v2822 = vpop.f32.mrf.mxu0
    %v2823 = vadd.f32 0.0, %v2822
    %v2824 = vpop.f32.mrf.mxu0
    %v2825 = vadd.f32 0.0, %v2824
    %2826 = vdwg.mxu0
    %v2827 = vadd.f32 %v2644, %v2823
    %v2828 = vadd.f32 %v2646, %v2825
    %s2829 = scalar_lea.vmem [#allocation10], 24
    %v2830 = vld [vmem:[%s2829] sm:$0xff]
    %v2832 = vsel %vm2292, %v2830, 0
    %2834 = vmatprep.subr.mxu0 0.0
    %2835 = vmatpush1.msra.mxu0 0.0
    %2836 = vmatprep.subr.mxu0 0.0
    %2837 = vmatpush1.msra.mxu0 0.0
    %2838 = vmatprep.subr.mxu0 0.0
    %2839 = vmatpush1.msra.mxu0 0.0
    %2840 = vmatprep.subr.mxu0 0.0
    %2841 = vmatpush1.msra.mxu0 0.0
    %2842 = vmatprep.subr.mxu0 0.0
    %2843 = vmatpush1.msra.mxu0 0.0
    %2844 = vmatprep.subr.mxu0 0.0
    %2845 = vmatpush1.msra.mxu0 0.0
    %2846 = vmatprep.subr.mxu0 0.0
    %2847 = vmatpush1.msra.mxu0 0.0
    %2848 = vmatprep.subr.mxu0 0.0
    %2849 = vmatpush1.msra.mxu0 0.0
    %2850 = vmatprep.subr.mxu0 0.0
    %2851 = vmatpush1.msra.mxu0 0.0
    %2852 = vmatprep.subr.mxu0 0.0
    %2853 = vmatpush1.msra.mxu0 0.0
    %2854 = vmatprep.subr.mxu0 0.0
    %2855 = vmatpush1.msra.mxu0 0.0
    %2856 = vmatprep.subr.mxu0 0.0
    %2857 = vmatpush1.msra.mxu0 0.0
    %2858 = vmatprep.subr.mxu0 0.0
    %2859 = vmatpush1.msra.mxu0 %v2290
    %2860 = vmatprep.subr.mxu0 0.0
    %2861 = vmatpush1.msra.mxu0 %v2289
    %2862 = vmatprep.subr.mxu0 0.0
    %2863 = vmatpush1.msra.mxu0 %v2288
    %2864 = vmatprep.subr.mxu0 0.0
    %2865 = vmatpush1.msra.mxu0 %v2287
    %2866 = vmatprep.subr.mxu0 0.0
    %2867 = vmatpush2.msra.mxu0 0.0
    %2868 = vmatprep.subr.mxu0 0.0
    %2869 = vmatpush2.msra.mxu0 0.0
    %2870 = vmatprep.subr.mxu0 0.0
    %2871 = vmatpush2.msra.mxu0 0.0
    %2872 = vmatprep.subr.mxu0 0.0
    %2873 = vmatpush2.msra.mxu0 0.0
    %2874 = vmatprep.subr.mxu0 0.0
    %2875 = vmatpush2.msra.mxu0 0.0
    %2876 = vmatprep.subr.mxu0 0.0
    %2877 = vmatpush2.msra.mxu0 0.0
    %2878 = vmatprep.subr.mxu0 0.0
    %2879 = vmatpush2.msra.mxu0 0.0
    %2880 = vmatprep.subr.mxu0 0.0
    %2881 = vmatpush2.msra.mxu0 0.0
    %2882 = vmatprep.subr.mxu0 0.0
    %2883 = vmatpush2.msra.mxu0 0.0
    %2884 = vmatprep.subr.mxu0 0.0
    %2885 = vmatpush2.msra.mxu0 0.0
    %2886 = vmatprep.subr.mxu0 0.0
    %2887 = vmatpush2.msra.mxu0 0.0
    %2888 = vmatprep.subr.mxu0 0.0
    %2889 = vmatpush2.msra.mxu0 0.0
    %2890 = vmatprep.subr.mxu0 0.0
    %2891 = vmatpush2.msra.mxu0 0.0
    %2892 = vmatprep.subr.mxu0 0.0
    %2893 = vmatpush2.msra.mxu0 0.0
    %2894 = vmatprep.subr.mxu0 0.0
    %2895 = vmatpush2.msra.mxu0 0.0
    %2896 = vmatprep.subr.mxu0 0.0
    %2897 = vmatpush2.msra.mxu0 0.0
    %2898 = vmatprep.mubr.f32.mxu0 0.0
    %2899 = vmatmul.mubr.f32.gmra.mxu0 %v2832
    %v2900 = vpop.f32.mrf.mxu0
    %v2901 = vadd.f32 0.0, %v2900
    %v2902 = vpop.f32.mrf.mxu0
    %2903 = vdwg.mxu0
    %s2904 = scalar_lea.vmem [#allocation11], 768
    %v2905 = vld [vmem:[%s2904] sm:$0xff]
    %v2906 = vld [vmem:[%s2904 + $0x8] sm:$0xff]
    %v2907 = vld [vmem:[%s2904 + $0x10] sm:$0xff]
    %v2908 = vld [vmem:[%s2904 + $0x18] sm:$0xff]
    %v2909 = vld [vmem:[%s2904 + $0x20] sm:$0xff]
    %v2910 = vld [vmem:[%s2904 + $0x28] sm:$0xff]
    %v2911 = vld [vmem:[%s2904 + $0x30] sm:$0xff]
    %v2912 = vld [vmem:[%s2904 + $0x38] sm:$0xff]
    %v2913 = vld [vmem:[%s2904 + $0x40] sm:$0xff]
    %v2914 = vld [vmem:[%s2904 + $0x48] sm:$0xff]
    %v2915 = vld [vmem:[%s2904 + $0x50] sm:$0xff]
    %v2916 = vld [vmem:[%s2904 + $0x58] sm:$0xff]
    %v2917 = vld [vmem:[%s2904 + $0x60] sm:$0xff]
    %v2918 = vld [vmem:[%s2904 + $0x68] sm:$0xff]
    %v2919 = vld [vmem:[%s2904 + $0x70] sm:$0xff]
    %v2920 = vld [vmem:[%s2904 + $0x78] sm:$0xff]
    %v2921 = vld [vmem:[%s2904 + $0x80] sm:$0xff]
    %v2922 = vld [vmem:[%s2904 + $0x88] sm:$0xff]
    %v2923 = vld [vmem:[%s2904 + $0x90] sm:$0xff]
    %v2924 = vld [vmem:[%s2904 + $0x98] sm:$0xff]
    %v2925 = vld [vmem:[%s2904 + $0xa0] sm:$0xff]
    %v2926 = vld [vmem:[%s2904 + $0xa8] sm:$0xff]
    %v2927 = vld [vmem:[%s2904 + $0xb0] sm:$0xff]
    %v2928 = vld [vmem:[%s2904 + $0xb8] sm:$0xff]
    %v2929 = vld [vmem:[%s2904 + $0xc0] sm:$0xff]
    %v2930 = vld [vmem:[%s2904 + $0xc8] sm:$0xff]
    %v2931 = vld [vmem:[%s2904 + $0xd0] sm:$0xff]
    %v2932 = vld [vmem:[%s2904 + $0xd8] sm:$0xff]
    %v2933 = vld [vmem:[%s2904 + $0xe0] sm:$0xff]
    %v2934 = vld [vmem:[%s2904 + $0xe8] sm:$0xff]
    %v2935 = vld [vmem:[%s2904 + $0xf0] sm:$0xff]
    %v2936 = vld [vmem:[%s2904 + $0xf8] sm:$0xff]
    %2937 = vmatprep.subr.mxu0 %v2936
    %2938 = vmatpush1.msra.mxu0 %v2935
    %2939 = vmatprep.subr.mxu0 %v2934
    %2940 = vmatpush1.msra.mxu0 %v2933
    %2941 = vmatprep.subr.mxu0 %v2932
    %2942 = vmatpush1.msra.mxu0 %v2931
    %2943 = vmatprep.subr.mxu0 %v2930
    %2944 = vmatpush1.msra.mxu0 %v2929
    %2945 = vmatprep.subr.mxu0 %v2928
    %2946 = vmatpush1.msra.mxu0 %v2927
    %2947 = vmatprep.subr.mxu0 %v2926
    %2948 = vmatpush1.msra.mxu0 %v2925
    %2949 = vmatprep.subr.mxu0 %v2924
    %2950 = vmatpush1.msra.mxu0 %v2923
    %2951 = vmatprep.subr.mxu0 %v2922
    %2952 = vmatpush1.msra.mxu0 %v2921
    %2953 = vmatprep.subr.mxu0 %v2920
    %2954 = vmatpush1.msra.mxu0 %v2919
    %2955 = vmatprep.subr.mxu0 %v2918
    %2956 = vmatpush1.msra.mxu0 %v2917
    %2957 = vmatprep.subr.mxu0 %v2916
    %2958 = vmatpush1.msra.mxu0 %v2915
    %2959 = vmatprep.subr.mxu0 %v2914
    %2960 = vmatpush1.msra.mxu0 %v2913
    %2961 = vmatprep.subr.mxu0 %v2912
    %2962 = vmatpush1.msra.mxu0 %v2911
    %2963 = vmatprep.subr.mxu0 %v2910
    %2964 = vmatpush1.msra.mxu0 %v2909
    %2965 = vmatprep.subr.mxu0 %v2908
    %2966 = vmatpush1.msra.mxu0 %v2907
    %2967 = vmatprep.subr.mxu0 %v2906
    %2968 = vmatpush1.msra.mxu0 %v2905
    %2969 = vmatprep.subr.mxu0 0.0
    %2970 = vmatpush2.msra.mxu0 0.0
    %2971 = vmatprep.subr.mxu0 0.0
    %2972 = vmatpush2.msra.mxu0 0.0
    %2973 = vmatprep.subr.mxu0 0.0
    %2974 = vmatpush2.msra.mxu0 0.0
    %2975 = vmatprep.subr.mxu0 0.0
    %2976 = vmatpush2.msra.mxu0 0.0
    %2977 = vmatprep.subr.mxu0 0.0
    %2978 = vmatpush2.msra.mxu0 0.0
    %2979 = vmatprep.subr.mxu0 0.0
    %2980 = vmatpush2.msra.mxu0 0.0
    %2981 = vmatprep.subr.mxu0 0.0
    %2982 = vmatpush2.msra.mxu0 0.0
    %2983 = vmatprep.subr.mxu0 0.0
    %2984 = vmatpush2.msra.mxu0 0.0
    %2985 = vmatprep.subr.mxu0 0.0
    %2986 = vmatpush2.msra.mxu0 0.0
    %2987 = vmatprep.subr.mxu0 0.0
    %2988 = vmatpush2.msra.mxu0 0.0
    %2989 = vmatprep.subr.mxu0 0.0
    %2990 = vmatpush2.msra.mxu0 0.0
    %2991 = vmatprep.subr.mxu0 0.0
    %2992 = vmatpush2.msra.mxu0 0.0
    %2993 = vmatprep.subr.mxu0 0.0
    %2994 = vmatpush2.msra.mxu0 0.0
    %2995 = vmatprep.subr.mxu0 0.0
    %2996 = vmatpush2.msra.mxu0 0.0
    %2997 = vmatprep.subr.mxu0 0.0
    %2998 = vmatpush2.msra.mxu0 0.0
    %2999 = vmatprep.subr.mxu0 0.0
    %3000 = vmatpush2.msra.mxu0 0.0
    %3001 = vmatprep.mubr.f32.mxu0 0.0
    %3002 = vmatmul.mubr.f32.gmra.mxu0 %v2901
    %v3003 = vpop.f32.mrf.mxu0
    %v3004 = vadd.f32 0.0, %v3003
    %v3005 = vpop.f32.mrf.mxu0
    %v3006 = vadd.f32 0.0, %v3005
    %3007 = vdwg.mxu0
    %v3008 = vadd.f32 %v2827, %v3004
    %v3009 = vadd.f32 %v2828, %v3006
    %s3010 = scalar_lea.vmem [#allocation10], 32
    %v3011 = vld [vmem:[%s3010] sm:$0xff]
    %v3013 = vsel %vm2292, %v3011, 0
    %3015 = vmatprep.subr.mxu0 0.0
    %3016 = vmatpush1.msra.mxu0 0.0
    %3017 = vmatprep.subr.mxu0 0.0
    %3018 = vmatpush1.msra.mxu0 0.0
    %3019 = vmatprep.subr.mxu0 0.0
    %3020 = vmatpush1.msra.mxu0 0.0
    %3021 = vmatprep.subr.mxu0 0.0
    %3022 = vmatpush1.msra.mxu0 0.0
    %3023 = vmatprep.subr.mxu0 0.0
    %3024 = vmatpush1.msra.mxu0 0.0
    %3025 = vmatprep.subr.mxu0 0.0
    %3026 = vmatpush1.msra.mxu0 0.0
    %3027 = vmatprep.subr.mxu0 0.0
    %3028 = vmatpush1.msra.mxu0 0.0
    %3029 = vmatprep.subr.mxu0 0.0
    %3030 = vmatpush1.msra.mxu0 0.0
    %3031 = vmatprep.subr.mxu0 0.0
    %3032 = vmatpush1.msra.mxu0 0.0
    %3033 = vmatprep.subr.mxu0 0.0
    %3034 = vmatpush1.msra.mxu0 0.0
    %3035 = vmatprep.subr.mxu0 0.0
    %3036 = vmatpush1.msra.mxu0 0.0
    %3037 = vmatprep.subr.mxu0 0.0
    %3038 = vmatpush1.msra.mxu0 0.0
    %3039 = vmatprep.subr.mxu0 0.0
    %3040 = vmatpush1.msra.mxu0 %v2290
    %3041 = vmatprep.subr.mxu0 0.0
    %3042 = vmatpush1.msra.mxu0 %v2289
    %3043 = vmatprep.subr.mxu0 0.0
    %3044 = vmatpush1.msra.mxu0 %v2288
    %3045 = vmatprep.subr.mxu0 0.0
    %3046 = vmatpush1.msra.mxu0 %v2287
    %3047 = vmatprep.subr.mxu0 0.0
    %3048 = vmatpush2.msra.mxu0 0.0
    %3049 = vmatprep.subr.mxu0 0.0
    %3050 = vmatpush2.msra.mxu0 0.0
    %3051 = vmatprep.subr.mxu0 0.0
    %3052 = vmatpush2.msra.mxu0 0.0
    %3053 = vmatprep.subr.mxu0 0.0
    %3054 = vmatpush2.msra.mxu0 0.0
    %3055 = vmatprep.subr.mxu0 0.0
    %3056 = vmatpush2.msra.mxu0 0.0
    %3057 = vmatprep.subr.mxu0 0.0
    %3058 = vmatpush2.msra.mxu0 0.0
    %3059 = vmatprep.subr.mxu0 0.0
    %3060 = vmatpush2.msra.mxu0 0.0
    %3061 = vmatprep.subr.mxu0 0.0
    %3062 = vmatpush2.msra.mxu0 0.0
    %3063 = vmatprep.subr.mxu0 0.0
    %3064 = vmatpush2.msra.mxu0 0.0
    %3065 = vmatprep.subr.mxu0 0.0
    %3066 = vmatpush2.msra.mxu0 0.0
    %3067 = vmatprep.subr.mxu0 0.0
    %3068 = vmatpush2.msra.mxu0 0.0
    %3069 = vmatprep.subr.mxu0 0.0
    %3070 = vmatpush2.msra.mxu0 0.0
    %3071 = vmatprep.subr.mxu0 0.0
    %3072 = vmatpush2.msra.mxu0 0.0
    %3073 = vmatprep.subr.mxu0 0.0
    %3074 = vmatpush2.msra.mxu0 0.0
    %3075 = vmatprep.subr.mxu0 0.0
    %3076 = vmatpush2.msra.mxu0 0.0
    %3077 = vmatprep.subr.mxu0 0.0
    %3078 = vmatpush2.msra.mxu0 0.0
    %3079 = vmatprep.mubr.f32.mxu0 0.0
    %3080 = vmatmul.mubr.f32.gmra.mxu0 %v3013
    %v3081 = vpop.f32.mrf.mxu0
    %v3082 = vadd.f32 0.0, %v3081
    %v3083 = vpop.f32.mrf.mxu0
    %3084 = vdwg.mxu0
    %s3085 = scalar_lea.vmem [#allocation11], 1024
    %v3086 = vld [vmem:[%s3085] sm:$0xff]
    %v3087 = vld [vmem:[%s3085 + $0x8] sm:$0xff]
    %v3088 = vld [vmem:[%s3085 + $0x10] sm:$0xff]
    %v3089 = vld [vmem:[%s3085 + $0x18] sm:$0xff]
    %v3090 = vld [vmem:[%s3085 + $0x20] sm:$0xff]
    %v3091 = vld [vmem:[%s3085 + $0x28] sm:$0xff]
    %v3092 = vld [vmem:[%s3085 + $0x30] sm:$0xff]
    %v3093 = vld [vmem:[%s3085 + $0x38] sm:$0xff]
    %v3094 = vld [vmem:[%s3085 + $0x40] sm:$0xff]
    %v3095 = vld [vmem:[%s3085 + $0x48] sm:$0xff]
    %v3096 = vld [vmem:[%s3085 + $0x50] sm:$0xff]
    %v3097 = vld [vmem:[%s3085 + $0x58] sm:$0xff]
    %v3098 = vld [vmem:[%s3085 + $0x60] sm:$0xff]
    %v3099 = vld [vmem:[%s3085 + $0x68] sm:$0xff]
    %v3100 = vld [vmem:[%s3085 + $0x70] sm:$0xff]
    %v3101 = vld [vmem:[%s3085 + $0x78] sm:$0xff]
    %v3102 = vld [vmem:[%s3085 + $0x80] sm:$0xff]
    %v3103 = vld [vmem:[%s3085 + $0x88] sm:$0xff]
    %v3104 = vld [vmem:[%s3085 + $0x90] sm:$0xff]
    %v3105 = vld [vmem:[%s3085 + $0x98] sm:$0xff]
    %v3106 = vld [vmem:[%s3085 + $0xa0] sm:$0xff]
    %v3107 = vld [vmem:[%s3085 + $0xa8] sm:$0xff]
    %v3108 = vld [vmem:[%s3085 + $0xb0] sm:$0xff]
    %v3109 = vld [vmem:[%s3085 + $0xb8] sm:$0xff]
    %v3110 = vld [vmem:[%s3085 + $0xc0] sm:$0xff]
    %v3111 = vld [vmem:[%s3085 + $0xc8] sm:$0xff]
    %v3112 = vld [vmem:[%s3085 + $0xd0] sm:$0xff]
    %v3113 = vld [vmem:[%s3085 + $0xd8] sm:$0xff]
    %v3114 = vld [vmem:[%s3085 + $0xe0] sm:$0xff]
    %v3115 = vld [vmem:[%s3085 + $0xe8] sm:$0xff]
    %v3116 = vld [vmem:[%s3085 + $0xf0] sm:$0xff]
    %v3117 = vld [vmem:[%s3085 + $0xf8] sm:$0xff]
    %3118 = vmatprep.subr.mxu0 %v3117
    %3119 = vmatpush1.msra.mxu0 %v3116
    %3120 = vmatprep.subr.mxu0 %v3115
    %3121 = vmatpush1.msra.mxu0 %v3114
    %3122 = vmatprep.subr.mxu0 %v3113
    %3123 = vmatpush1.msra.mxu0 %v3112
    %3124 = vmatprep.subr.mxu0 %v3111
    %3125 = vmatpush1.msra.mxu0 %v3110
    %3126 = vmatprep.subr.mxu0 %v3109
    %3127 = vmatpush1.msra.mxu0 %v3108
    %3128 = vmatprep.subr.mxu0 %v3107
    %3129 = vmatpush1.msra.mxu0 %v3106
    %3130 = vmatprep.subr.mxu0 %v3105
    %3131 = vmatpush1.msra.mxu0 %v3104
    %3132 = vmatprep.subr.mxu0 %v3103
    %3133 = vmatpush1.msra.mxu0 %v3102
    %3134 = vmatprep.subr.mxu0 %v3101
    %3135 = vmatpush1.msra.mxu0 %v3100
    %3136 = vmatprep.subr.mxu0 %v3099
    %3137 = vmatpush1.msra.mxu0 %v3098
    %3138 = vmatprep.subr.mxu0 %v3097
    %3139 = vmatpush1.msra.mxu0 %v3096
    %3140 = vmatprep.subr.mxu0 %v3095
    %3141 = vmatpush1.msra.mxu0 %v3094
    %3142 = vmatprep.subr.mxu0 %v3093
    %3143 = vmatpush1.msra.mxu0 %v3092
    %3144 = vmatprep.subr.mxu0 %v3091
    %3145 = vmatpush1.msra.mxu0 %v3090
    %3146 = vmatprep.subr.mxu0 %v3089
    %3147 = vmatpush1.msra.mxu0 %v3088
    %3148 = vmatprep.subr.mxu0 %v3087
    %3149 = vmatpush1.msra.mxu0 %v3086
    %3150 = vmatprep.subr.mxu0 0.0
    %3151 = vmatpush2.msra.mxu0 0.0
    %3152 = vmatprep.subr.mxu0 0.0
    %3153 = vmatpush2.msra.mxu0 0.0
    %3154 = vmatprep.subr.mxu0 0.0
    %3155 = vmatpush2.msra.mxu0 0.0
    %3156 = vmatprep.subr.mxu0 0.0
    %3157 = vmatpush2.msra.mxu0 0.0
    %3158 = vmatprep.subr.mxu0 0.0
    %3159 = vmatpush2.msra.mxu0 0.0
    %3160 = vmatprep.subr.mxu0 0.0
    %3161 = vmatpush2.msra.mxu0 0.0
    %3162 = vmatprep.subr.mxu0 0.0
    %3163 = vmatpush2.msra.mxu0 0.0
    %3164 = vmatprep.subr.mxu0 0.0
    %3165 = vmatpush2.msra.mxu0 0.0
    %3166 = vmatprep.subr.mxu0 0.0
    %3167 = vmatpush2.msra.mxu0 0.0
    %3168 = vmatprep.subr.mxu0 0.0
    %3169 = vmatpush2.msra.mxu0 0.0
    %3170 = vmatprep.subr.mxu0 0.0
    %3171 = vmatpush2.msra.mxu0 0.0
    %3172 = vmatprep.subr.mxu0 0.0
    %3173 = vmatpush2.msra.mxu0 0.0
    %3174 = vmatprep.subr.mxu0 0.0
    %3175 = vmatpush2.msra.mxu0 0.0
    %3176 = vmatprep.subr.mxu0 0.0
    %3177 = vmatpush2.msra.mxu0 0.0
    %3178 = vmatprep.subr.mxu0 0.0
    %3179 = vmatpush2.msra.mxu0 0.0
    %3180 = vmatprep.subr.mxu0 0.0
    %3181 = vmatpush2.msra.mxu0 0.0
    %3182 = vmatprep.mubr.f32.mxu0 0.0
    %3183 = vmatmul.mubr.f32.gmra.mxu0 %v3082
    %v3184 = vpop.f32.mrf.mxu0
    %v3185 = vadd.f32 0.0, %v3184
    %v3186 = vpop.f32.mrf.mxu0
    %v3187 = vadd.f32 0.0, %v3186
    %3188 = vdwg.mxu0
    %v3189 = vadd.f32 %v3008, %v3185
    %v3190 = vadd.f32 %v3009, %v3187
    %s3191 = scalar_lea.vmem [#allocation10], 40
    %v3192 = vld [vmem:[%s3191] sm:$0xff]
    %v3194 = vsel %vm2292, %v3192, 0
    %3196 = vmatprep.subr.mxu0 0.0
    %3197 = vmatpush1.msra.mxu0 0.0
    %3198 = vmatprep.subr.mxu0 0.0
    %3199 = vmatpush1.msra.mxu0 0.0
    %3200 = vmatprep.subr.mxu0 0.0
    %3201 = vmatpush1.msra.mxu0 0.0
    %3202 = vmatprep.subr.mxu0 0.0
    %3203 = vmatpush1.msra.mxu0 0.0
    %3204 = vmatprep.subr.mxu0 0.0
    %3205 = vmatpush1.msra.mxu0 0.0
    %3206 = vmatprep.subr.mxu0 0.0
    %3207 = vmatpush1.msra.mxu0 0.0
    %3208 = vmatprep.subr.mxu0 0.0
    %3209 = vmatpush1.msra.mxu0 0.0
    %3210 = vmatprep.subr.mxu0 0.0
    %3211 = vmatpush1.msra.mxu0 0.0
    %3212 = vmatprep.subr.mxu0 0.0
    %3213 = vmatpush1.msra.mxu0 0.0
    %3214 = vmatprep.subr.mxu0 0.0
    %3215 = vmatpush1.msra.mxu0 0.0
    %3216 = vmatprep.subr.mxu0 0.0
    %3217 = vmatpush1.msra.mxu0 0.0
    %3218 = vmatprep.subr.mxu0 0.0
    %3219 = vmatpush1.msra.mxu0 0.0
    %3220 = vmatprep.subr.mxu0 0.0
    %3221 = vmatpush1.msra.mxu0 %v2290
    %3222 = vmatprep.subr.mxu0 0.0
    %3223 = vmatpush1.msra.mxu0 %v2289
    %3224 = vmatprep.subr.mxu0 0.0
    %3225 = vmatpush1.msra.mxu0 %v2288
    %3226 = vmatprep.subr.mxu0 0.0
    %3227 = vmatpush1.msra.mxu0 %v2287
    %3228 = vmatprep.subr.mxu0 0.0
    %3229 = vmatpush2.msra.mxu0 0.0
    %3230 = vmatprep.subr.mxu0 0.0
    %3231 = vmatpush2.msra.mxu0 0.0
    %3232 = vmatprep.subr.mxu0 0.0
    %3233 = vmatpush2.msra.mxu0 0.0
    %3234 = vmatprep.subr.mxu0 0.0
    %3235 = vmatpush2.msra.mxu0 0.0
    %3236 = vmatprep.subr.mxu0 0.0
    %3237 = vmatpush2.msra.mxu0 0.0
    %3238 = vmatprep.subr.mxu0 0.0
    %3239 = vmatpush2.msra.mxu0 0.0
    %3240 = vmatprep.subr.mxu0 0.0
    %3241 = vmatpush2.msra.mxu0 0.0
    %3242 = vmatprep.subr.mxu0 0.0
    %3243 = vmatpush2.msra.mxu0 0.0
    %3244 = vmatprep.subr.mxu0 0.0
    %3245 = vmatpush2.msra.mxu0 0.0
    %3246 = vmatprep.subr.mxu0 0.0
    %3247 = vmatpush2.msra.mxu0 0.0
    %3248 = vmatprep.subr.mxu0 0.0
    %3249 = vmatpush2.msra.mxu0 0.0
    %3250 = vmatprep.subr.mxu0 0.0
    %3251 = vmatpush2.msra.mxu0 0.0
    %3252 = vmatprep.subr.mxu0 0.0
    %3253 = vmatpush2.msra.mxu0 0.0
    %3254 = vmatprep.subr.mxu0 0.0
    %3255 = vmatpush2.msra.mxu0 0.0
    %3256 = vmatprep.subr.mxu0 0.0
    %3257 = vmatpush2.msra.mxu0 0.0
    %3258 = vmatprep.subr.mxu0 0.0
    %3259 = vmatpush2.msra.mxu0 0.0
    %3260 = vmatprep.mubr.f32.mxu0 0.0
    %3261 = vmatmul.mubr.f32.gmra.mxu0 %v3194
    %v3262 = vpop.f32.mrf.mxu0
    %v3263 = vadd.f32 0.0, %v3262
    %v3264 = vpop.f32.mrf.mxu0
    %3265 = vdwg.mxu0
    %s3266 = scalar_lea.vmem [#allocation11], 1280
    %v3267 = vld [vmem:[%s3266] sm:$0xff]
    %v3268 = vld [vmem:[%s3266 + $0x8] sm:$0xff]
    %v3269 = vld [vmem:[%s3266 + $0x10] sm:$0xff]
    %v3270 = vld [vmem:[%s3266 + $0x18] sm:$0xff]
    %v3271 = vld [vmem:[%s3266 + $0x20] sm:$0xff]
    %v3272 = vld [vmem:[%s3266 + $0x28] sm:$0xff]
    %v3273 = vld [vmem:[%s3266 + $0x30] sm:$0xff]
    %v3274 = vld [vmem:[%s3266 + $0x38] sm:$0xff]
    %v3275 = vld [vmem:[%s3266 + $0x40] sm:$0xff]
    %v3276 = vld [vmem:[%s3266 + $0x48] sm:$0xff]
    %v3277 = vld [vmem:[%s3266 + $0x50] sm:$0xff]
    %v3278 = vld [vmem:[%s3266 + $0x58] sm:$0xff]
    %v3279 = vld [vmem:[%s3266 + $0x60] sm:$0xff]
    %v3280 = vld [vmem:[%s3266 + $0x68] sm:$0xff]
    %v3281 = vld [vmem:[%s3266 + $0x70] sm:$0xff]
    %v3282 = vld [vmem:[%s3266 + $0x78] sm:$0xff]
    %v3283 = vld [vmem:[%s3266 + $0x80] sm:$0xff]
    %v3284 = vld [vmem:[%s3266 + $0x88] sm:$0xff]
    %v3285 = vld [vmem:[%s3266 + $0x90] sm:$0xff]
    %v3286 = vld [vmem:[%s3266 + $0x98] sm:$0xff]
    %v3287 = vld [vmem:[%s3266 + $0xa0] sm:$0xff]
    %v3288 = vld [vmem:[%s3266 + $0xa8] sm:$0xff]
    %v3289 = vld [vmem:[%s3266 + $0xb0] sm:$0xff]
    %v3290 = vld [vmem:[%s3266 + $0xb8] sm:$0xff]
    %v3291 = vld [vmem:[%s3266 + $0xc0] sm:$0xff]
    %v3292 = vld [vmem:[%s3266 + $0xc8] sm:$0xff]
    %v3293 = vld [vmem:[%s3266 + $0xd0] sm:$0xff]
    %v3294 = vld [vmem:[%s3266 + $0xd8] sm:$0xff]
    %v3295 = vld [vmem:[%s3266 + $0xe0] sm:$0xff]
    %v3296 = vld [vmem:[%s3266 + $0xe8] sm:$0xff]
    %v3297 = vld [vmem:[%s3266 + $0xf0] sm:$0xff]
    %v3298 = vld [vmem:[%s3266 + $0xf8] sm:$0xff]
    %3299 = vmatprep.subr.mxu0 %v3298
    %3300 = vmatpush1.msra.mxu0 %v3297
    %3301 = vmatprep.subr.mxu0 %v3296
    %3302 = vmatpush1.msra.mxu0 %v3295
    %3303 = vmatprep.subr.mxu0 %v3294
    %3304 = vmatpush1.msra.mxu0 %v3293
    %3305 = vmatprep.subr.mxu0 %v3292
    %3306 = vmatpush1.msra.mxu0 %v3291
    %3307 = vmatprep.subr.mxu0 %v3290
    %3308 = vmatpush1.msra.mxu0 %v3289
    %3309 = vmatprep.subr.mxu0 %v3288
    %3310 = vmatpush1.msra.mxu0 %v3287
    %3311 = vmatprep.subr.mxu0 %v3286
    %3312 = vmatpush1.msra.mxu0 %v3285
    %3313 = vmatprep.subr.mxu0 %v3284
    %3314 = vmatpush1.msra.mxu0 %v3283
    %3315 = vmatprep.subr.mxu0 %v3282
    %3316 = vmatpush1.msra.mxu0 %v3281
    %3317 = vmatprep.subr.mxu0 %v3280
    %3318 = vmatpush1.msra.mxu0 %v3279
    %3319 = vmatprep.subr.mxu0 %v3278
    %3320 = vmatpush1.msra.mxu0 %v3277
    %3321 = vmatprep.subr.mxu0 %v3276
    %3322 = vmatpush1.msra.mxu0 %v3275
    %3323 = vmatprep.subr.mxu0 %v3274
    %3324 = vmatpush1.msra.mxu0 %v3273
    %3325 = vmatprep.subr.mxu0 %v3272
    %3326 = vmatpush1.msra.mxu0 %v3271
    %3327 = vmatprep.subr.mxu0 %v3270
    %3328 = vmatpush1.msra.mxu0 %v3269
    %3329 = vmatprep.subr.mxu0 %v3268
    %3330 = vmatpush1.msra.mxu0 %v3267
    %3331 = vmatprep.subr.mxu0 0.0
    %3332 = vmatpush2.msra.mxu0 0.0
    %3333 = vmatprep.subr.mxu0 0.0
    %3334 = vmatpush2.msra.mxu0 0.0
    %3335 = vmatprep.subr.mxu0 0.0
    %3336 = vmatpush2.msra.mxu0 0.0
    %3337 = vmatprep.subr.mxu0 0.0
    %3338 = vmatpush2.msra.mxu0 0.0
    %3339 = vmatprep.subr.mxu0 0.0
    %3340 = vmatpush2.msra.mxu0 0.0
    %3341 = vmatprep.subr.mxu0 0.0
    %3342 = vmatpush2.msra.mxu0 0.0
    %3343 = vmatprep.subr.mxu0 0.0
    %3344 = vmatpush2.msra.mxu0 0.0
    %3345 = vmatprep.subr.mxu0 0.0
    %3346 = vmatpush2.msra.mxu0 0.0
    %3347 = vmatprep.subr.mxu0 0.0
    %3348 = vmatpush2.msra.mxu0 0.0
    %3349 = vmatprep.subr.mxu0 0.0
    %3350 = vmatpush2.msra.mxu0 0.0
    %3351 = vmatprep.subr.mxu0 0.0
    %3352 = vmatpush2.msra.mxu0 0.0
    %3353 = vmatprep.subr.mxu0 0.0
    %3354 = vmatpush2.msra.mxu0 0.0
    %3355 = vmatprep.subr.mxu0 0.0
    %3356 = vmatpush2.msra.mxu0 0.0
    %3357 = vmatprep.subr.mxu0 0.0
    %3358 = vmatpush2.msra.mxu0 0.0
    %3359 = vmatprep.subr.mxu0 0.0
    %3360 = vmatpush2.msra.mxu0 0.0
    %3361 = vmatprep.subr.mxu0 0.0
    %3362 = vmatpush2.msra.mxu0 0.0
    %3363 = vmatprep.mubr.f32.mxu0 0.0
    %3364 = vmatmul.mubr.f32.gmra.mxu0 %v3263
    %v3365 = vpop.f32.mrf.mxu0
    %v3366 = vadd.f32 0.0, %v3365
    %v3367 = vpop.f32.mrf.mxu0
    %v3368 = vadd.f32 0.0, %v3367
    %3369 = vdwg.mxu0
    %v3370 = vadd.f32 %v3189, %v3366
    %v3371 = vadd.f32 %v3190, %v3368
    %s3372 = scalar_lea.vmem [#allocation10], 48
    %v3373 = vld [vmem:[%s3372] sm:$0xff]
    %v3375 = vsel %vm2292, %v3373, 0
    %3377 = vmatprep.subr.mxu0 0.0
    %3378 = vmatpush1.msra.mxu0 0.0
    %3379 = vmatprep.subr.mxu0 0.0
    %3380 = vmatpush1.msra.mxu0 0.0
    %3381 = vmatprep.subr.mxu0 0.0
    %3382 = vmatpush1.msra.mxu0 0.0
    %3383 = vmatprep.subr.mxu0 0.0
    %3384 = vmatpush1.msra.mxu0 0.0
    %3385 = vmatprep.subr.mxu0 0.0
    %3386 = vmatpush1.msra.mxu0 0.0
    %3387 = vmatprep.subr.mxu0 0.0
    %3388 = vmatpush1.msra.mxu0 0.0
    %3389 = vmatprep.subr.mxu0 0.0
    %3390 = vmatpush1.msra.mxu0 0.0
    %3391 = vmatprep.subr.mxu0 0.0
    %3392 = vmatpush1.msra.mxu0 0.0
    %3393 = vmatprep.subr.mxu0 0.0
    %3394 = vmatpush1.msra.mxu0 0.0
    %3395 = vmatprep.subr.mxu0 0.0
    %3396 = vmatpush1.msra.mxu0 0.0
    %3397 = vmatprep.subr.mxu0 0.0
    %3398 = vmatpush1.msra.mxu0 0.0
    %3399 = vmatprep.subr.mxu0 0.0
    %3400 = vmatpush1.msra.mxu0 0.0
    %3401 = vmatprep.subr.mxu0 0.0
    %3402 = vmatpush1.msra.mxu0 %v2290
    %3403 = vmatprep.subr.mxu0 0.0
    %3404 = vmatpush1.msra.mxu0 %v2289
    %3405 = vmatprep.subr.mxu0 0.0
    %3406 = vmatpush1.msra.mxu0 %v2288
    %3407 = vmatprep.subr.mxu0 0.0
    %3408 = vmatpush1.msra.mxu0 %v2287
    %3409 = vmatprep.subr.mxu0 0.0
    %3410 = vmatpush2.msra.mxu0 0.0
    %3411 = vmatprep.subr.mxu0 0.0
    %3412 = vmatpush2.msra.mxu0 0.0
    %3413 = vmatprep.subr.mxu0 0.0
    %3414 = vmatpush2.msra.mxu0 0.0
    %3415 = vmatprep.subr.mxu0 0.0
    %3416 = vmatpush2.msra.mxu0 0.0
    %3417 = vmatprep.subr.mxu0 0.0
    %3418 = vmatpush2.msra.mxu0 0.0
    %3419 = vmatprep.subr.mxu0 0.0
    %3420 = vmatpush2.msra.mxu0 0.0
    %3421 = vmatprep.subr.mxu0 0.0
    %3422 = vmatpush2.msra.mxu0 0.0
    %3423 = vmatprep.subr.mxu0 0.0
    %3424 = vmatpush2.msra.mxu0 0.0
    %3425 = vmatprep.subr.mxu0 0.0
    %3426 = vmatpush2.msra.mxu0 0.0
    %3427 = vmatprep.subr.mxu0 0.0
    %3428 = vmatpush2.msra.mxu0 0.0
    %3429 = vmatprep.subr.mxu0 0.0
    %3430 = vmatpush2.msra.mxu0 0.0
    %3431 = vmatprep.subr.mxu0 0.0
    %3432 = vmatpush2.msra.mxu0 0.0
    %3433 = vmatprep.subr.mxu0 0.0
    %3434 = vmatpush2.msra.mxu0 0.0
    %3435 = vmatprep.subr.mxu0 0.0
    %3436 = vmatpush2.msra.mxu0 0.0
    %3437 = vmatprep.subr.mxu0 0.0
    %3438 = vmatpush2.msra.mxu0 0.0
    %3439 = vmatprep.subr.mxu0 0.0
    %3440 = vmatpush2.msra.mxu0 0.0
    %3441 = vmatprep.mubr.f32.mxu0 0.0
    %3442 = vmatmul.mubr.f32.gmra.mxu0 %v3375
    %v3443 = vpop.f32.mrf.mxu0
    %v3444 = vadd.f32 0.0, %v3443
    %v3445 = vpop.f32.mrf.mxu0
    %3446 = vdwg.mxu0
    %s3447 = scalar_lea.vmem [#allocation11], 1536
    %v3448 = vld [vmem:[%s3447] sm:$0xff]
    %v3449 = vld [vmem:[%s3447 + $0x8] sm:$0xff]
    %v3450 = vld [vmem:[%s3447 + $0x10] sm:$0xff]
    %v3451 = vld [vmem:[%s3447 + $0x18] sm:$0xff]
    %v3452 = vld [vmem:[%s3447 + $0x20] sm:$0xff]
    %v3453 = vld [vmem:[%s3447 + $0x28] sm:$0xff]
    %v3454 = vld [vmem:[%s3447 + $0x30] sm:$0xff]
    %v3455 = vld [vmem:[%s3447 + $0x38] sm:$0xff]
    %v3456 = vld [vmem:[%s3447 + $0x40] sm:$0xff]
    %v3457 = vld [vmem:[%s3447 + $0x48] sm:$0xff]
    %v3458 = vld [vmem:[%s3447 + $0x50] sm:$0xff]
    %v3459 = vld [vmem:[%s3447 + $0x58] sm:$0xff]
    %v3460 = vld [vmem:[%s3447 + $0x60] sm:$0xff]
    %v3461 = vld [vmem:[%s3447 + $0x68] sm:$0xff]
    %v3462 = vld [vmem:[%s3447 + $0x70] sm:$0xff]
    %v3463 = vld [vmem:[%s3447 + $0x78] sm:$0xff]
    %v3464 = vld [vmem:[%s3447 + $0x80] sm:$0xff]
    %v3465 = vld [vmem:[%s3447 + $0x88] sm:$0xff]
    %v3466 = vld [vmem:[%s3447 + $0x90] sm:$0xff]
    %v3467 = vld [vmem:[%s3447 + $0x98] sm:$0xff]
    %v3468 = vld [vmem:[%s3447 + $0xa0] sm:$0xff]
    %v3469 = vld [vmem:[%s3447 + $0xa8] sm:$0xff]
    %v3470 = vld [vmem:[%s3447 + $0xb0] sm:$0xff]
    %v3471 = vld [vmem:[%s3447 + $0xb8] sm:$0xff]
    %v3472 = vld [vmem:[%s3447 + $0xc0] sm:$0xff]
    %v3473 = vld [vmem:[%s3447 + $0xc8] sm:$0xff]
    %v3474 = vld [vmem:[%s3447 + $0xd0] sm:$0xff]
    %v3475 = vld [vmem:[%s3447 + $0xd8] sm:$0xff]
    %v3476 = vld [vmem:[%s3447 + $0xe0] sm:$0xff]
    %v3477 = vld [vmem:[%s3447 + $0xe8] sm:$0xff]
    %v3478 = vld [vmem:[%s3447 + $0xf0] sm:$0xff]
    %v3479 = vld [vmem:[%s3447 + $0xf8] sm:$0xff]
    %3480 = vmatprep.subr.mxu0 %v3479
    %3481 = vmatpush1.msra.mxu0 %v3478
    %3482 = vmatprep.subr.mxu0 %v3477
    %3483 = vmatpush1.msra.mxu0 %v3476
    %3484 = vmatprep.subr.mxu0 %v3475
    %3485 = vmatpush1.msra.mxu0 %v3474
    %3486 = vmatprep.subr.mxu0 %v3473
    %3487 = vmatpush1.msra.mxu0 %v3472
    %3488 = vmatprep.subr.mxu0 %v3471
    %3489 = vmatpush1.msra.mxu0 %v3470
    %3490 = vmatprep.subr.mxu0 %v3469
    %3491 = vmatpush1.msra.mxu0 %v3468
    %3492 = vmatprep.subr.mxu0 %v3467
    %3493 = vmatpush1.msra.mxu0 %v3466
    %3494 = vmatprep.subr.mxu0 %v3465
    %3495 = vmatpush1.msra.mxu0 %v3464
    %3496 = vmatprep.subr.mxu0 %v3463
    %3497 = vmatpush1.msra.mxu0 %v3462
    %3498 = vmatprep.subr.mxu0 %v3461
    %3499 = vmatpush1.msra.mxu0 %v3460
    %3500 = vmatprep.subr.mxu0 %v3459
    %3501 = vmatpush1.msra.mxu0 %v3458
    %3502 = vmatprep.subr.mxu0 %v3457
    %3503 = vmatpush1.msra.mxu0 %v3456
    %3504 = vmatprep.subr.mxu0 %v3455
    %3505 = vmatpush1.msra.mxu0 %v3454
    %3506 = vmatprep.subr.mxu0 %v3453
    %3507 = vmatpush1.msra.mxu0 %v3452
    %3508 = vmatprep.subr.mxu0 %v3451
    %3509 = vmatpush1.msra.mxu0 %v3450
    %3510 = vmatprep.subr.mxu0 %v3449
    %3511 = vmatpush1.msra.mxu0 %v3448
    %3512 = vmatprep.subr.mxu0 0.0
    %3513 = vmatpush2.msra.mxu0 0.0
    %3514 = vmatprep.subr.mxu0 0.0
    %3515 = vmatpush2.msra.mxu0 0.0
    %3516 = vmatprep.subr.mxu0 0.0
    %3517 = vmatpush2.msra.mxu0 0.0
    %3518 = vmatprep.subr.mxu0 0.0
    %3519 = vmatpush2.msra.mxu0 0.0
    %3520 = vmatprep.subr.mxu0 0.0
    %3521 = vmatpush2.msra.mxu0 0.0
    %3522 = vmatprep.subr.mxu0 0.0
    %3523 = vmatpush2.msra.mxu0 0.0
    %3524 = vmatprep.subr.mxu0 0.0
    %3525 = vmatpush2.msra.mxu0 0.0
    %3526 = vmatprep.subr.mxu0 0.0
    %3527 = vmatpush2.msra.mxu0 0.0
    %3528 = vmatprep.subr.mxu0 0.0
    %3529 = vmatpush2.msra.mxu0 0.0
    %3530 = vmatprep.subr.mxu0 0.0
    %3531 = vmatpush2.msra.mxu0 0.0
    %3532 = vmatprep.subr.mxu0 0.0
    %3533 = vmatpush2.msra.mxu0 0.0
    %3534 = vmatprep.subr.mxu0 0.0
    %3535 = vmatpush2.msra.mxu0 0.0
    %3536 = vmatprep.subr.mxu0 0.0
    %3537 = vmatpush2.msra.mxu0 0.0
    %3538 = vmatprep.subr.mxu0 0.0
    %3539 = vmatpush2.msra.mxu0 0.0
    %3540 = vmatprep.subr.mxu0 0.0
    %3541 = vmatpush2.msra.mxu0 0.0
    %3542 = vmatprep.subr.mxu0 0.0
    %3543 = vmatpush2.msra.mxu0 0.0
    %3544 = vmatprep.mubr.f32.mxu0 0.0
    %3545 = vmatmul.mubr.f32.gmra.mxu0 %v3444
    %v3546 = vpop.f32.mrf.mxu0
    %v3547 = vadd.f32 0.0, %v3546
    %v3548 = vpop.f32.mrf.mxu0
    %v3549 = vadd.f32 0.0, %v3548
    %3550 = vdwg.mxu0
    %v3551 = vadd.f32 %v3370, %v3547
    %v3552 = vadd.f32 %v3371, %v3549
    %s3553 = scalar_lea.vmem [#allocation10], 56
    %v3554 = vld [vmem:[%s3553] sm:$0xff]
    %v3556 = vsel %vm2292, %v3554, 0
    %3558 = vmatprep.subr.mxu0 0.0
    %3559 = vmatpush1.msra.mxu0 0.0
    %3560 = vmatprep.subr.mxu0 0.0
    %3561 = vmatpush1.msra.mxu0 0.0
    %3562 = vmatprep.subr.mxu0 0.0
    %3563 = vmatpush1.msra.mxu0 0.0
    %3564 = vmatprep.subr.mxu0 0.0
    %3565 = vmatpush1.msra.mxu0 0.0
    %3566 = vmatprep.subr.mxu0 0.0
    %3567 = vmatpush1.msra.mxu0 0.0
    %3568 = vmatprep.subr.mxu0 0.0
    %3569 = vmatpush1.msra.mxu0 0.0
    %3570 = vmatprep.subr.mxu0 0.0
    %3571 = vmatpush1.msra.mxu0 0.0
    %3572 = vmatprep.subr.mxu0 0.0
    %3573 = vmatpush1.msra.mxu0 0.0
    %3574 = vmatprep.subr.mxu0 0.0
    %3575 = vmatpush1.msra.mxu0 0.0
    %3576 = vmatprep.subr.mxu0 0.0
    %3577 = vmatpush1.msra.mxu0 0.0
    %3578 = vmatprep.subr.mxu0 0.0
    %3579 = vmatpush1.msra.mxu0 0.0
    %3580 = vmatprep.subr.mxu0 0.0
    %3581 = vmatpush1.msra.mxu0 0.0
    %3582 = vmatprep.subr.mxu0 0.0
    %3583 = vmatpush1.msra.mxu0 %v2290
    %3584 = vmatprep.subr.mxu0 0.0
    %3585 = vmatpush1.msra.mxu0 %v2289
    %3586 = vmatprep.subr.mxu0 0.0
    %3587 = vmatpush1.msra.mxu0 %v2288
    %3588 = vmatprep.subr.mxu0 0.0
    %3589 = vmatpush1.msra.mxu0 %v2287
    %3590 = vmatprep.subr.mxu0 0.0
    %3591 = vmatpush2.msra.mxu0 0.0
    %3592 = vmatprep.subr.mxu0 0.0
    %3593 = vmatpush2.msra.mxu0 0.0
    %3594 = vmatprep.subr.mxu0 0.0
    %3595 = vmatpush2.msra.mxu0 0.0
    %3596 = vmatprep.subr.mxu0 0.0
    %3597 = vmatpush2.msra.mxu0 0.0
    %3598 = vmatprep.subr.mxu0 0.0
    %3599 = vmatpush2.msra.mxu0 0.0
    %3600 = vmatprep.subr.mxu0 0.0
    %3601 = vmatpush2.msra.mxu0 0.0
    %3602 = vmatprep.subr.mxu0 0.0
    %3603 = vmatpush2.msra.mxu0 0.0
    %3604 = vmatprep.subr.mxu0 0.0
    %3605 = vmatpush2.msra.mxu0 0.0
    %3606 = vmatprep.subr.mxu0 0.0
    %3607 = vmatpush2.msra.mxu0 0.0
    %3608 = vmatprep.subr.mxu0 0.0
    %3609 = vmatpush2.msra.mxu0 0.0
    %3610 = vmatprep.subr.mxu0 0.0
    %3611 = vmatpush2.msra.mxu0 0.0
    %3612 = vmatprep.subr.mxu0 0.0
    %3613 = vmatpush2.msra.mxu0 0.0
    %3614 = vmatprep.subr.mxu0 0.0
    %3615 = vmatpush2.msra.mxu0 0.0
    %3616 = vmatprep.subr.mxu0 0.0
    %3617 = vmatpush2.msra.mxu0 0.0
    %3618 = vmatprep.subr.mxu0 0.0
    %3619 = vmatpush2.msra.mxu0 0.0
    %3620 = vmatprep.subr.mxu0 0.0
    %3621 = vmatpush2.msra.mxu0 0.0
    %3622 = vmatprep.mubr.f32.mxu0 0.0
    %3623 = vmatmul.mubr.f32.gmra.mxu0 %v3556
    %v3624 = vpop.f32.mrf.mxu0
    %v3625 = vadd.f32 0.0, %v3624
    %v3626 = vpop.f32.mrf.mxu0
    %3627 = vdwg.mxu0
    %s3628 = scalar_lea.vmem [#allocation11], 1792
    %v3629 = vld [vmem:[%s3628] sm:$0xff]
    %v3630 = vld [vmem:[%s3628 + $0x8] sm:$0xff]
    %v3631 = vld [vmem:[%s3628 + $0x10] sm:$0xff]
    %v3632 = vld [vmem:[%s3628 + $0x18] sm:$0xff]
    %v3633 = vld [vmem:[%s3628 + $0x20] sm:$0xff]
    %v3634 = vld [vmem:[%s3628 + $0x28] sm:$0xff]
    %v3635 = vld [vmem:[%s3628 + $0x30] sm:$0xff]
    %v3636 = vld [vmem:[%s3628 + $0x38] sm:$0xff]
    %v3637 = vld [vmem:[%s3628 + $0x40] sm:$0xff]
    %v3638 = vld [vmem:[%s3628 + $0x48] sm:$0xff]
    %v3639 = vld [vmem:[%s3628 + $0x50] sm:$0xff]
    %v3640 = vld [vmem:[%s3628 + $0x58] sm:$0xff]
    %v3641 = vld [vmem:[%s3628 + $0x60] sm:$0xff]
    %v3642 = vld [vmem:[%s3628 + $0x68] sm:$0xff]
    %v3643 = vld [vmem:[%s3628 + $0x70] sm:$0xff]
    %v3644 = vld [vmem:[%s3628 + $0x78] sm:$0xff]
    %v3645 = vld [vmem:[%s3628 + $0x80] sm:$0xff]
    %v3646 = vld [vmem:[%s3628 + $0x88] sm:$0xff]
    %v3647 = vld [vmem:[%s3628 + $0x90] sm:$0xff]
    %v3648 = vld [vmem:[%s3628 + $0x98] sm:$0xff]
    %v3649 = vld [vmem:[%s3628 + $0xa0] sm:$0xff]
    %v3650 = vld [vmem:[%s3628 + $0xa8] sm:$0xff]
    %v3651 = vld [vmem:[%s3628 + $0xb0] sm:$0xff]
    %v3652 = vld [vmem:[%s3628 + $0xb8] sm:$0xff]
    %v3653 = vld [vmem:[%s3628 + $0xc0] sm:$0xff]
    %v3654 = vld [vmem:[%s3628 + $0xc8] sm:$0xff]
    %v3655 = vld [vmem:[%s3628 + $0xd0] sm:$0xff]
    %v3656 = vld [vmem:[%s3628 + $0xd8] sm:$0xff]
    %v3657 = vld [vmem:[%s3628 + $0xe0] sm:$0xff]
    %v3658 = vld [vmem:[%s3628 + $0xe8] sm:$0xff]
    %v3659 = vld [vmem:[%s3628 + $0xf0] sm:$0xff]
    %v3660 = vld [vmem:[%s3628 + $0xf8] sm:$0xff]
    %3661 = vmatprep.subr.mxu0 %v3660
    %3662 = vmatpush1.msra.mxu0 %v3659
    %3663 = vmatprep.subr.mxu0 %v3658
    %3664 = vmatpush1.msra.mxu0 %v3657
    %3665 = vmatprep.subr.mxu0 %v3656
    %3666 = vmatpush1.msra.mxu0 %v3655
    %3667 = vmatprep.subr.mxu0 %v3654
    %3668 = vmatpush1.msra.mxu0 %v3653
    %3669 = vmatprep.subr.mxu0 %v3652
    %3670 = vmatpush1.msra.mxu0 %v3651
    %3671 = vmatprep.subr.mxu0 %v3650
    %3672 = vmatpush1.msra.mxu0 %v3649
    %3673 = vmatprep.subr.mxu0 %v3648
    %3674 = vmatpush1.msra.mxu0 %v3647
    %3675 = vmatprep.subr.mxu0 %v3646
    %3676 = vmatpush1.msra.mxu0 %v3645
    %3677 = vmatprep.subr.mxu0 %v3644
    %3678 = vmatpush1.msra.mxu0 %v3643
    %3679 = vmatprep.subr.mxu0 %v3642
    %3680 = vmatpush1.msra.mxu0 %v3641
    %3681 = vmatprep.subr.mxu0 %v3640
    %3682 = vmatpush1.msra.mxu0 %v3639
    %3683 = vmatprep.subr.mxu0 %v3638
    %3684 = vmatpush1.msra.mxu0 %v3637
    %3685 = vmatprep.subr.mxu0 %v3636
    %3686 = vmatpush1.msra.mxu0 %v3635
    %3687 = vmatprep.subr.mxu0 %v3634
    %3688 = vmatpush1.msra.mxu0 %v3633
    %3689 = vmatprep.subr.mxu0 %v3632
    %3690 = vmatpush1.msra.mxu0 %v3631
    %3691 = vmatprep.subr.mxu0 %v3630
    %3692 = vmatpush1.msra.mxu0 %v3629
    %3693 = vmatprep.subr.mxu0 0.0
    %3694 = vmatpush2.msra.mxu0 0.0
    %3695 = vmatprep.subr.mxu0 0.0
    %3696 = vmatpush2.msra.mxu0 0.0
    %3697 = vmatprep.subr.mxu0 0.0
    %3698 = vmatpush2.msra.mxu0 0.0
    %3699 = vmatprep.subr.mxu0 0.0
    %3700 = vmatpush2.msra.mxu0 0.0
    %3701 = vmatprep.subr.mxu0 0.0
    %3702 = vmatpush2.msra.mxu0 0.0
    %3703 = vmatprep.subr.mxu0 0.0
    %3704 = vmatpush2.msra.mxu0 0.0
    %3705 = vmatprep.subr.mxu0 0.0
    %3706 = vmatpush2.msra.mxu0 0.0
    %3707 = vmatprep.subr.mxu0 0.0
    %3708 = vmatpush2.msra.mxu0 0.0
    %3709 = vmatprep.subr.mxu0 0.0
    %3710 = vmatpush2.msra.mxu0 0.0
    %3711 = vmatprep.subr.mxu0 0.0
    %3712 = vmatpush2.msra.mxu0 0.0
    %3713 = vmatprep.subr.mxu0 0.0
    %3714 = vmatpush2.msra.mxu0 0.0
    %3715 = vmatprep.subr.mxu0 0.0
    %3716 = vmatpush2.msra.mxu0 0.0
    %3717 = vmatprep.subr.mxu0 0.0
    %3718 = vmatpush2.msra.mxu0 0.0
    %3719 = vmatprep.subr.mxu0 0.0
    %3720 = vmatpush2.msra.mxu0 0.0
    %3721 = vmatprep.subr.mxu0 0.0
    %3722 = vmatpush2.msra.mxu0 0.0
    %3723 = vmatprep.subr.mxu0 0.0
    %3724 = vmatpush2.msra.mxu0 0.0
    %3725 = vmatprep.mubr.f32.mxu0 0.0
    %3726 = vmatmul.mubr.f32.gmra.mxu0 %v3625
    %v3727 = vpop.f32.mrf.mxu0
    %v3728 = vadd.f32 0.0, %v3727
    %v3729 = vpop.f32.mrf.mxu0
    %v3730 = vadd.f32 0.0, %v3729
    %3731 = vdwg.mxu0
    %v3732 = vadd.f32 %v3551, %v3728
    %v3733 = vadd.f32 %v3552, %v3730
    %s3734 = scalar_lea.vmem [#allocation10], 64
    %v3735 = vld [vmem:[%s3734] sm:$0xff]
    %v3737 = vsel %vm2292, %v3735, 0
    %3739 = vmatprep.subr.mxu0 0.0
    %3740 = vmatpush1.msra.mxu0 0.0
    %3741 = vmatprep.subr.mxu0 0.0
    %3742 = vmatpush1.msra.mxu0 0.0
    %3743 = vmatprep.subr.mxu0 0.0
    %3744 = vmatpush1.msra.mxu0 0.0
    %3745 = vmatprep.subr.mxu0 0.0
    %3746 = vmatpush1.msra.mxu0 0.0
    %3747 = vmatprep.subr.mxu0 0.0
    %3748 = vmatpush1.msra.mxu0 0.0
    %3749 = vmatprep.subr.mxu0 0.0
    %3750 = vmatpush1.msra.mxu0 0.0
    %3751 = vmatprep.subr.mxu0 0.0
    %3752 = vmatpush1.msra.mxu0 0.0
    %3753 = vmatprep.subr.mxu0 0.0
    %3754 = vmatpush1.msra.mxu0 0.0
    %3755 = vmatprep.subr.mxu0 0.0
    %3756 = vmatpush1.msra.mxu0 0.0
    %3757 = vmatprep.subr.mxu0 0.0
    %3758 = vmatpush1.msra.mxu0 0.0
    %3759 = vmatprep.subr.mxu0 0.0
    %3760 = vmatpush1.msra.mxu0 0.0
    %3761 = vmatprep.subr.mxu0 0.0
    %3762 = vmatpush1.msra.mxu0 0.0
    %3763 = vmatprep.subr.mxu0 0.0
    %3764 = vmatpush1.msra.mxu0 %v2290
    %3765 = vmatprep.subr.mxu0 0.0
    %3766 = vmatpush1.msra.mxu0 %v2289
    %3767 = vmatprep.subr.mxu0 0.0
    %3768 = vmatpush1.msra.mxu0 %v2288
    %3769 = vmatprep.subr.mxu0 0.0
    %3770 = vmatpush1.msra.mxu0 %v2287
    %3771 = vmatprep.subr.mxu0 0.0
    %3772 = vmatpush2.msra.mxu0 0.0
    %3773 = vmatprep.subr.mxu0 0.0
    %3774 = vmatpush2.msra.mxu0 0.0
    %3775 = vmatprep.subr.mxu0 0.0
    %3776 = vmatpush2.msra.mxu0 0.0
    %3777 = vmatprep.subr.mxu0 0.0
    %3778 = vmatpush2.msra.mxu0 0.0
    %3779 = vmatprep.subr.mxu0 0.0
    %3780 = vmatpush2.msra.mxu0 0.0
    %3781 = vmatprep.subr.mxu0 0.0
    %3782 = vmatpush2.msra.mxu0 0.0
    %3783 = vmatprep.subr.mxu0 0.0
    %3784 = vmatpush2.msra.mxu0 0.0
    %3785 = vmatprep.subr.mxu0 0.0
    %3786 = vmatpush2.msra.mxu0 0.0
    %3787 = vmatprep.subr.mxu0 0.0
    %3788 = vmatpush2.msra.mxu0 0.0
    %3789 = vmatprep.subr.mxu0 0.0
    %3790 = vmatpush2.msra.mxu0 0.0
    %3791 = vmatprep.subr.mxu0 0.0
    %3792 = vmatpush2.msra.mxu0 0.0
    %3793 = vmatprep.subr.mxu0 0.0
    %3794 = vmatpush2.msra.mxu0 0.0
    %3795 = vmatprep.subr.mxu0 0.0
    %3796 = vmatpush2.msra.mxu0 0.0
    %3797 = vmatprep.subr.mxu0 0.0
    %3798 = vmatpush2.msra.mxu0 0.0
    %3799 = vmatprep.subr.mxu0 0.0
    %3800 = vmatpush2.msra.mxu0 0.0
    %3801 = vmatprep.subr.mxu0 0.0
    %3802 = vmatpush2.msra.mxu0 0.0
    %3803 = vmatprep.mubr.f32.mxu0 0.0
    %3804 = vmatmul.mubr.f32.gmra.mxu0 %v3737
    %v3805 = vpop.f32.mrf.mxu0
    %v3806 = vadd.f32 0.0, %v3805
    %v3807 = vpop.f32.mrf.mxu0
    %3808 = vdwg.mxu0
    %s3809 = scalar_lea.vmem [#allocation11], 2048
    %v3810 = vld [vmem:[%s3809] sm:$0xff]
    %v3811 = vld [vmem:[%s3809 + $0x8] sm:$0xff]
    %v3812 = vld [vmem:[%s3809 + $0x10] sm:$0xff]
    %v3813 = vld [vmem:[%s3809 + $0x18] sm:$0xff]
    %v3814 = vld [vmem:[%s3809 + $0x20] sm:$0xff]
    %v3815 = vld [vmem:[%s3809 + $0x28] sm:$0xff]
    %v3816 = vld [vmem:[%s3809 + $0x30] sm:$0xff]
    %v3817 = vld [vmem:[%s3809 + $0x38] sm:$0xff]
    %v3818 = vld [vmem:[%s3809 + $0x40] sm:$0xff]
    %v3819 = vld [vmem:[%s3809 + $0x48] sm:$0xff]
    %v3820 = vld [vmem:[%s3809 + $0x50] sm:$0xff]
    %v3821 = vld [vmem:[%s3809 + $0x58] sm:$0xff]
    %v3822 = vld [vmem:[%s3809 + $0x60] sm:$0xff]
    %v3823 = vld [vmem:[%s3809 + $0x68] sm:$0xff]
    %v3824 = vld [vmem:[%s3809 + $0x70] sm:$0xff]
    %v3825 = vld [vmem:[%s3809 + $0x78] sm:$0xff]
    %v3826 = vld [vmem:[%s3809 + $0x80] sm:$0xff]
    %v3827 = vld [vmem:[%s3809 + $0x88] sm:$0xff]
    %v3828 = vld [vmem:[%s3809 + $0x90] sm:$0xff]
    %v3829 = vld [vmem:[%s3809 + $0x98] sm:$0xff]
    %v3830 = vld [vmem:[%s3809 + $0xa0] sm:$0xff]
    %v3831 = vld [vmem:[%s3809 + $0xa8] sm:$0xff]
    %v3832 = vld [vmem:[%s3809 + $0xb0] sm:$0xff]
    %v3833 = vld [vmem:[%s3809 + $0xb8] sm:$0xff]
    %v3834 = vld [vmem:[%s3809 + $0xc0] sm:$0xff]
    %v3835 = vld [vmem:[%s3809 + $0xc8] sm:$0xff]
    %v3836 = vld [vmem:[%s3809 + $0xd0] sm:$0xff]
    %v3837 = vld [vmem:[%s3809 + $0xd8] sm:$0xff]
    %v3838 = vld [vmem:[%s3809 + $0xe0] sm:$0xff]
    %v3839 = vld [vmem:[%s3809 + $0xe8] sm:$0xff]
    %v3840 = vld [vmem:[%s3809 + $0xf0] sm:$0xff]
    %v3841 = vld [vmem:[%s3809 + $0xf8] sm:$0xff]
    %3842 = vmatprep.subr.mxu0 %v3841
    %3843 = vmatpush1.msra.mxu0 %v3840
    %3844 = vmatprep.subr.mxu0 %v3839
    %3845 = vmatpush1.msra.mxu0 %v3838
    %3846 = vmatprep.subr.mxu0 %v3837
    %3847 = vmatpush1.msra.mxu0 %v3836
    %3848 = vmatprep.subr.mxu0 %v3835
    %3849 = vmatpush1.msra.mxu0 %v3834
    %3850 = vmatprep.subr.mxu0 %v3833
    %3851 = vmatpush1.msra.mxu0 %v3832
    %3852 = vmatprep.subr.mxu0 %v3831
    %3853 = vmatpush1.msra.mxu0 %v3830
    %3854 = vmatprep.subr.mxu0 %v3829
    %3855 = vmatpush1.msra.mxu0 %v3828
    %3856 = vmatprep.subr.mxu0 %v3827
    %3857 = vmatpush1.msra.mxu0 %v3826
    %3858 = vmatprep.subr.mxu0 %v3825
    %3859 = vmatpush1.msra.mxu0 %v3824
    %3860 = vmatprep.subr.mxu0 %v3823
    %3861 = vmatpush1.msra.mxu0 %v3822
    %3862 = vmatprep.subr.mxu0 %v3821
    %3863 = vmatpush1.msra.mxu0 %v3820
    %3864 = vmatprep.subr.mxu0 %v3819
    %3865 = vmatpush1.msra.mxu0 %v3818
    %3866 = vmatprep.subr.mxu0 %v3817
    %3867 = vmatpush1.msra.mxu0 %v3816
    %3868 = vmatprep.subr.mxu0 %v3815
    %3869 = vmatpush1.msra.mxu0 %v3814
    %3870 = vmatprep.subr.mxu0 %v3813
    %3871 = vmatpush1.msra.mxu0 %v3812
    %3872 = vmatprep.subr.mxu0 %v3811
    %3873 = vmatpush1.msra.mxu0 %v3810
    %3874 = vmatprep.subr.mxu0 0.0
    %3875 = vmatpush2.msra.mxu0 0.0
    %3876 = vmatprep.subr.mxu0 0.0
    %3877 = vmatpush2.msra.mxu0 0.0
    %3878 = vmatprep.subr.mxu0 0.0
    %3879 = vmatpush2.msra.mxu0 0.0
    %3880 = vmatprep.subr.mxu0 0.0
    %3881 = vmatpush2.msra.mxu0 0.0
    %3882 = vmatprep.subr.mxu0 0.0
    %3883 = vmatpush2.msra.mxu0 0.0
    %3884 = vmatprep.subr.mxu0 0.0
    %3885 = vmatpush2.msra.mxu0 0.0
    %3886 = vmatprep.subr.mxu0 0.0
    %3887 = vmatpush2.msra.mxu0 0.0
    %3888 = vmatprep.subr.mxu0 0.0
    %3889 = vmatpush2.msra.mxu0 0.0
    %3890 = vmatprep.subr.mxu0 0.0
    %3891 = vmatpush2.msra.mxu0 0.0
    %3892 = vmatprep.subr.mxu0 0.0
    %3893 = vmatpush2.msra.mxu0 0.0
    %3894 = vmatprep.subr.mxu0 0.0
    %3895 = vmatpush2.msra.mxu0 0.0
    %3896 = vmatprep.subr.mxu0 0.0
    %3897 = vmatpush2.msra.mxu0 0.0
    %3898 = vmatprep.subr.mxu0 0.0
    %3899 = vmatpush2.msra.mxu0 0.0
    %3900 = vmatprep.subr.mxu0 0.0
    %3901 = vmatpush2.msra.mxu0 0.0
    %3902 = vmatprep.subr.mxu0 0.0
    %3903 = vmatpush2.msra.mxu0 0.0
    %3904 = vmatprep.subr.mxu0 0.0
    %3905 = vmatpush2.msra.mxu0 0.0
    %3906 = vmatprep.mubr.f32.mxu0 0.0
    %3907 = vmatmul.mubr.f32.gmra.mxu0 %v3806
    %v3908 = vpop.f32.mrf.mxu0
    %v3909 = vadd.f32 0.0, %v3908
    %v3910 = vpop.f32.mrf.mxu0
    %v3911 = vadd.f32 0.0, %v3910
    %3912 = vdwg.mxu0
    %v3913 = vadd.f32 %v3732, %v3909
    %v3914 = vadd.f32 %v3733, %v3911
    %v3915 = vld [vmem:[#allocation13] sm:$0x3]
    %v3917 = vlaneseq
    %v3918 = vshrl.u32 %v3917, 7
    %v3919 = vsub.s32 0, %v3918
    %v3920 = vrot.slane %v3915, %v3919
    %v3921 = vlaneseq
    %v3922 = vshrl.u32 %v3921, 7
    %v3923 = vsub.s32 1, %v3922
    %v3924 = vrot.slane %v3915, %v3923
    %v3927 = vadd.f32 %v3913, %v3920
    %v3928 = vadd.f32 %v3914, %v3924
    %v3929 = vmax.f32 %v3927, 0.0
    %v3930 = vmax.f32 %v3928, 0.0
    %v3931 = vld [vmem:[#allocation14] sm:$0x3]
    %vm3932 = vcmask 64512
    %v3934 = vsel %vm3932, %v3931, 0
    %3936 = vmatprep.subr.mxu0 0.0
    %3937 = vmatpush1.msra.mxu0 0.0
    %3938 = vmatprep.subr.mxu0 0.0
    %3939 = vmatpush1.msra.mxu0 0.0
    %3940 = vmatprep.subr.mxu0 0.0
    %3941 = vmatpush1.msra.mxu0 0.0
    %3942 = vmatprep.subr.mxu0 0.0
    %3943 = vmatpush1.msra.mxu0 0.0
    %3944 = vmatprep.subr.mxu0 0.0
    %3945 = vmatpush1.msra.mxu0 0.0
    %3946 = vmatprep.subr.mxu0 0.0
    %3947 = vmatpush1.msra.mxu0 0.0
    %3948 = vmatprep.subr.mxu0 0.0
    %3949 = vmatpush1.msra.mxu0 0.0
    %3950 = vmatprep.subr.mxu0 0.0
    %3951 = vmatpush1.msra.mxu0 0.0
    %3952 = vmatprep.subr.mxu0 0.0
    %3953 = vmatpush1.msra.mxu0 0.0
    %3954 = vmatprep.subr.mxu0 0.0
    %3955 = vmatpush1.msra.mxu0 0.0
    %3956 = vmatprep.subr.mxu0 0.0
    %3957 = vmatpush1.msra.mxu0 0.0
    %3958 = vmatprep.subr.mxu0 0.0
    %3959 = vmatpush1.msra.mxu0 0.0
    %3960 = vmatprep.subr.mxu0 0.0
    %3961 = vmatpush1.msra.mxu0 0.0
    %3962 = vmatprep.subr.mxu0 0.0
    %3963 = vmatpush1.msra.mxu0 0.0
    %3964 = vmatprep.subr.mxu0 0.0
    %3965 = vmatpush1.msra.mxu0 0.0
    %3966 = vmatprep.subr.mxu0 %v3930
    %3967 = vmatpush1.msra.mxu0 %v3929
    %3968 = vmatprep.subr.mxu0 0.0
    %3969 = vmatpush2.msra.mxu0 0.0
    %3970 = vmatprep.subr.mxu0 0.0
    %3971 = vmatpush2.msra.mxu0 0.0
    %3972 = vmatprep.subr.mxu0 0.0
    %3973 = vmatpush2.msra.mxu0 0.0
    %3974 = vmatprep.subr.mxu0 0.0
    %3975 = vmatpush2.msra.mxu0 0.0
    %3976 = vmatprep.subr.mxu0 0.0
    %3977 = vmatpush2.msra.mxu0 0.0
    %3978 = vmatprep.subr.mxu0 0.0
    %3979 = vmatpush2.msra.mxu0 0.0
    %3980 = vmatprep.subr.mxu0 0.0
    %3981 = vmatpush2.msra.mxu0 0.0
    %3982 = vmatprep.subr.mxu0 0.0
    %3983 = vmatpush2.msra.mxu0 0.0
    %3984 = vmatprep.subr.mxu0 0.0
    %3985 = vmatpush2.msra.mxu0 0.0
    %3986 = vmatprep.subr.mxu0 0.0
    %3987 = vmatpush2.msra.mxu0 0.0
    %3988 = vmatprep.subr.mxu0 0.0
    %3989 = vmatpush2.msra.mxu0 0.0
    %3990 = vmatprep.subr.mxu0 0.0
    %3991 = vmatpush2.msra.mxu0 0.0
    %3992 = vmatprep.subr.mxu0 0.0
    %3993 = vmatpush2.msra.mxu0 0.0
    %3994 = vmatprep.subr.mxu0 0.0
    %3995 = vmatpush2.msra.mxu0 0.0
    %3996 = vmatprep.subr.mxu0 0.0
    %3997 = vmatpush2.msra.mxu0 0.0
    %3998 = vmatprep.subr.mxu0 0.0
    %3999 = vmatpush2.msra.mxu0 0.0
    %4000 = vmatprep.mubr.f32.mxu0 0.0
    %4001 = vmatmul.mubr.f32.gmra.mxu0 %v3934
    %v4002 = vpop.f32.mrf.mxu0
    %v4003 = vadd.f32 0.0, %v4002
    %v4004 = vpop.f32.mrf.mxu0
    %v4005 = vadd.f32 0.0, %v4004
    %4006 = vdwg.mxu0
    %v4007 = vld [vmem:[#allocation16] sm:$0xff]
    %v4008 = vld [vmem:[#allocation16 + $0x8] sm:$0xff]
    %v4009 = vld [vmem:[#allocation16 + $0x10] sm:$0xff]
    %v4010 = vld [vmem:[#allocation16 + $0x18] sm:$0xff]
    %v4011 = vld [vmem:[#allocation16 + $0x20] sm:$0xff]
    %v4012 = vld [vmem:[#allocation16 + $0x28] sm:$0xff]
    %v4013 = vld [vmem:[#allocation16 + $0x30] sm:$0xff]
    %v4014 = vld [vmem:[#allocation16 + $0x38] sm:$0xff]
    %v4015 = vld [vmem:[#allocation16 + $0x40] sm:$0xff]
    %v4016 = vld [vmem:[#allocation16 + $0x48] sm:$0xff]
    %v4017 = vld [vmem:[#allocation16 + $0x50] sm:$0xff]
    %v4018 = vld [vmem:[#allocation16 + $0x58] sm:$0xff]
    %v4019 = vld [vmem:[#allocation16 + $0x60] sm:$0xff]
    %v4020 = vld [vmem:[#allocation16 + $0x68] sm:$0xff]
    %v4021 = vld [vmem:[#allocation16 + $0x70] sm:$0xff]
    %v4022 = vld [vmem:[#allocation16 + $0x78] sm:$0xff]
    %v4023 = vld [vmem:[#allocation16 + $0x80] sm:$0xff]
    %v4024 = vld [vmem:[#allocation16 + $0x88] sm:$0xff]
    %v4025 = vld [vmem:[#allocation16 + $0x90] sm:$0xff]
    %v4026 = vld [vmem:[#allocation16 + $0x98] sm:$0xff]
    %v4027 = vld [vmem:[#allocation16 + $0xa0] sm:$0xff]
    %v4028 = vld [vmem:[#allocation16 + $0xa8] sm:$0xff]
    %v4029 = vld [vmem:[#allocation16 + $0xb0] sm:$0xff]
    %v4030 = vld [vmem:[#allocation16 + $0xb8] sm:$0xff]
    %v4031 = vld [vmem:[#allocation16 + $0xc0] sm:$0xff]
    %v4032 = vld [vmem:[#allocation16 + $0xc8] sm:$0xff]
    %v4033 = vld [vmem:[#allocation16 + $0xd0] sm:$0xff]
    %v4034 = vld [vmem:[#allocation16 + $0xd8] sm:$0xff]
    %v4035 = vld [vmem:[#allocation16 + $0xe0] sm:$0xff]
    %v4036 = vld [vmem:[#allocation16 + $0xe8] sm:$0xff]
    %v4037 = vld [vmem:[#allocation16 + $0xf0] sm:$0xff]
    %v4038 = vld [vmem:[#allocation16 + $0xf8] sm:$0xff]
    %v4039 = vld [vmem:[#allocation16 + $0x100] sm:$0xff]
    %v4040 = vld [vmem:[#allocation16 + $0x108] sm:$0xff]
    %v4041 = vld [vmem:[#allocation16 + $0x110] sm:$0xff]
    %v4042 = vld [vmem:[#allocation16 + $0x118] sm:$0xff]
    %v4043 = vld [vmem:[#allocation16 + $0x120] sm:$0xff]
    %v4044 = vld [vmem:[#allocation16 + $0x128] sm:$0xff]
    %v4045 = vld [vmem:[#allocation16 + $0x130] sm:$0xff]
    %v4046 = vld [vmem:[#allocation16 + $0x138] sm:$0xff]
    %v4047 = vld [vmem:[#allocation16 + $0x140] sm:$0xff]
    %v4048 = vld [vmem:[#allocation16 + $0x148] sm:$0xff]
    %v4049 = vld [vmem:[#allocation16 + $0x150] sm:$0xff]
    %v4050 = vld [vmem:[#allocation16 + $0x158] sm:$0xff]
    %v4051 = vld [vmem:[#allocation16 + $0x160] sm:$0xff]
    %v4052 = vld [vmem:[#allocation16 + $0x168] sm:$0xff]
    %v4053 = vld [vmem:[#allocation16 + $0x170] sm:$0xff]
    %v4054 = vld [vmem:[#allocation16 + $0x178] sm:$0xff]
    %v4055 = vld [vmem:[#allocation16 + $0x180] sm:$0xff]
    %v4056 = vld [vmem:[#allocation16 + $0x188] sm:$0xff]
    %v4057 = vld [vmem:[#allocation16 + $0x190] sm:$0xff]
    %v4058 = vld [vmem:[#allocation16 + $0x198] sm:$0xff]
    %v4059 = vld [vmem:[#allocation16 + $0x1a0] sm:$0xff]
    %v4060 = vld [vmem:[#allocation16 + $0x1a8] sm:$0xff]
    %v4061 = vld [vmem:[#allocation16 + $0x1b0] sm:$0xff]
    %v4062 = vld [vmem:[#allocation16 + $0x1b8] sm:$0xff]
    %v4063 = vld [vmem:[#allocation16 + $0x1c0] sm:$0xff]
    %v4064 = vld [vmem:[#allocation16 + $0x1c8] sm:$0xff]
    %v4065 = vld [vmem:[#allocation16 + $0x1d0] sm:$0xff]
    %v4066 = vld [vmem:[#allocation16 + $0x1d8] sm:$0xff]
    %v4067 = vld [vmem:[#allocation16 + $0x1e0] sm:$0xff]
    %v4068 = vld [vmem:[#allocation16 + $0x1e8] sm:$0xff]
    %v4069 = vld [vmem:[#allocation16 + $0x1f0] sm:$0xff]
    %v4070 = vld [vmem:[#allocation16 + $0x1f8] sm:$0xff]
    %v4071 = vld [vmem:[#allocation16 + $0x200] sm:$0xff]
    %v4072 = vld [vmem:[#allocation16 + $0x208] sm:$0xff]
    %v4073 = vld [vmem:[#allocation16 + $0x210] sm:$0xff]
    %v4074 = vld [vmem:[#allocation16 + $0x218] sm:$0xff]
    %v4075 = vld [vmem:[#allocation16 + $0x220] sm:$0xff]
    %v4076 = vld [vmem:[#allocation16 + $0x228] sm:$0xff]
    %v4077 = vld [vmem:[#allocation16 + $0x230] sm:$0xff]
    %v4078 = vld [vmem:[#allocation16 + $0x238] sm:$0xff]
    %v4079 = vld [vmem:[#allocation16 + $0x240] sm:$0xff]
    %v4080 = vld [vmem:[#allocation16 + $0x248] sm:$0xff]
    %v4081 = vld [vmem:[#allocation16 + $0x250] sm:$0xff]
    %v4082 = vld [vmem:[#allocation16 + $0x258] sm:$0xff]
    %v4083 = vld [vmem:[#allocation16 + $0x260] sm:$0xff]
    %v4084 = vld [vmem:[#allocation16 + $0x268] sm:$0xff]
    %v4085 = vld [vmem:[#allocation16 + $0x270] sm:$0xff]
    %v4086 = vld [vmem:[#allocation16 + $0x278] sm:$0xff]
    %v4087 = vld [vmem:[#allocation16 + $0x280] sm:$0xff]
    %v4088 = vld [vmem:[#allocation16 + $0x288] sm:$0xff]
    %v4089 = vld [vmem:[#allocation16 + $0x290] sm:$0xff]
    %v4090 = vld [vmem:[#allocation16 + $0x298] sm:$0xff]
    %v4091 = vld [vmem:[#allocation16 + $0x2a0] sm:$0xff]
    %v4092 = vld [vmem:[#allocation16 + $0x2a8] sm:$0xff]
    %v4093 = vld [vmem:[#allocation16 + $0x2b0] sm:$0xff]
    %v4094 = vld [vmem:[#allocation16 + $0x2b8] sm:$0xff]
    %v4095 = vld [vmem:[#allocation16 + $0x2c0] sm:$0xff]
    %v4096 = vld [vmem:[#allocation16 + $0x2c8] sm:$0xff]
    %v4097 = vld [vmem:[#allocation16 + $0x2d0] sm:$0xff]
    %v4098 = vld [vmem:[#allocation16 + $0x2d8] sm:$0xff]
    %v4099 = vld [vmem:[#allocation16 + $0x2e0] sm:$0xff]
    %v4100 = vld [vmem:[#allocation16 + $0x2e8] sm:$0xff]
    %v4101 = vld [vmem:[#allocation16 + $0x2f0] sm:$0xff]
    %v4102 = vld [vmem:[#allocation16 + $0x2f8] sm:$0xff]
    %v4103 = vld [vmem:[#allocation16 + $0x300] sm:$0xff]
    %v4104 = vld [vmem:[#allocation16 + $0x308] sm:$0xff]
    %v4105 = vld [vmem:[#allocation16 + $0x310] sm:$0xff]
    %v4106 = vld [vmem:[#allocation16 + $0x318] sm:$0xff]
    %v4107 = vld [vmem:[#allocation16 + $0x320] sm:$0xff]
    %v4108 = vld [vmem:[#allocation16 + $0x328] sm:$0xff]
    %v4109 = vld [vmem:[#allocation16 + $0x330] sm:$0xff]
    %v4110 = vld [vmem:[#allocation16 + $0x338] sm:$0xff]
    %v4111 = vld [vmem:[#allocation16 + $0x340] sm:$0xff]
    %v4112 = vld [vmem:[#allocation16 + $0x348] sm:$0xff]
    %v4113 = vld [vmem:[#allocation16 + $0x350] sm:$0xff]
    %v4114 = vld [vmem:[#allocation16 + $0x358] sm:$0xff]
    %v4115 = vld [vmem:[#allocation16 + $0x360] sm:$0xff]
    %v4116 = vld [vmem:[#allocation16 + $0x368] sm:$0xff]
    %v4117 = vld [vmem:[#allocation16 + $0x370] sm:$0xff]
    %v4118 = vld [vmem:[#allocation16 + $0x378] sm:$0xff]
    %v4119 = vld [vmem:[#allocation16 + $0x380] sm:$0xff]
    %v4120 = vld [vmem:[#allocation16 + $0x388] sm:$0xff]
    %v4121 = vld [vmem:[#allocation16 + $0x390] sm:$0xff]
    %v4122 = vld [vmem:[#allocation16 + $0x398] sm:$0xff]
    %v4123 = vld [vmem:[#allocation16 + $0x3a0] sm:$0xff]
    %v4124 = vld [vmem:[#allocation16 + $0x3a8] sm:$0xff]
    %v4125 = vld [vmem:[#allocation16 + $0x3b0] sm:$0xff]
    %v4126 = vld [vmem:[#allocation16 + $0x3b8] sm:$0xff]
    %v4127 = vld [vmem:[#allocation16 + $0x3c0] sm:$0xff]
    %v4128 = vld [vmem:[#allocation16 + $0x3c8] sm:$0xff]
    %v4129 = vld [vmem:[#allocation16 + $0x3d0] sm:$0xff]
    %v4130 = vld [vmem:[#allocation16 + $0x3d8] sm:$0xff]
    %v4131 = vld [vmem:[#allocation16 + $0x3e0] sm:$0xff]
    %v4132 = vld [vmem:[#allocation16 + $0x3e8] sm:$0xff]
    %v4133 = vld [vmem:[#allocation16 + $0x3f0] sm:$0xff]
    %v4134 = vld [vmem:[#allocation16 + $0x3f8] sm:$0xff]
    %v4135 = vld [vmem:[#allocation17] sm:$0xf]
    %v4137 = vlaneseq
    %v4138 = vshrl.u32 %v4137, 7
    %v4139 = vsub.s32 0, %v4138
    %v4140 = vrot.slane %v4135, %v4139
    %v4141 = vlaneseq
    %v4142 = vshrl.u32 %v4141, 7
    %v4143 = vsub.s32 1, %v4142
    %v4144 = vrot.slane %v4135, %v4143
    %v4145 = vlaneseq
    %v4146 = vshrl.u32 %v4145, 7
    %v4147 = vsub.s32 2, %v4146
    %v4148 = vrot.slane %v4135, %v4147
    %v4149 = vlaneseq
    %v4150 = vshrl.u32 %v4149, 7
    %v4151 = vsub.s32 3, %v4150
    %v4152 = vrot.slane %v4135, %v4151
    %4157 = vmatprep.subr.mxu0 %v4068
    %4158 = vmatpush1.msra.mxu0 %v4067
    %4159 = vmatprep.subr.mxu0 %v4064
    %4160 = vmatpush1.msra.mxu0 %v4063
    %4161 = vmatprep.subr.mxu0 %v4060
    %4162 = vmatpush1.msra.mxu0 %v4059
    %4163 = vmatprep.subr.mxu0 %v4056
    %4164 = vmatpush1.msra.mxu0 %v4055
    %4165 = vmatprep.subr.mxu0 %v4052
    %4166 = vmatpush1.msra.mxu0 %v4051
    %4167 = vmatprep.subr.mxu0 %v4048
    %4168 = vmatpush1.msra.mxu0 %v4047
    %4169 = vmatprep.subr.mxu0 %v4044
    %4170 = vmatpush1.msra.mxu0 %v4043
    %4171 = vmatprep.subr.mxu0 %v4040
    %4172 = vmatpush1.msra.mxu0 %v4039
    %4173 = vmatprep.subr.mxu0 %v4036
    %4174 = vmatpush1.msra.mxu0 %v4035
    %4175 = vmatprep.subr.mxu0 %v4032
    %4176 = vmatpush1.msra.mxu0 %v4031
    %4177 = vmatprep.subr.mxu0 %v4028
    %4178 = vmatpush1.msra.mxu0 %v4027
    %4179 = vmatprep.subr.mxu0 %v4024
    %4180 = vmatpush1.msra.mxu0 %v4023
    %4181 = vmatprep.subr.mxu0 %v4020
    %4182 = vmatpush1.msra.mxu0 %v4019
    %4183 = vmatprep.subr.mxu0 %v4016
    %4184 = vmatpush1.msra.mxu0 %v4015
    %4185 = vmatprep.subr.mxu0 %v4012
    %4186 = vmatpush1.msra.mxu0 %v4011
    %4187 = vmatprep.subr.mxu0 %v4008
    %4188 = vmatpush1.msra.mxu0 %v4007
    %4189 = vmatprep.subr.mxu0 %v4132
    %4190 = vmatpush2.msra.mxu0 %v4131
    %4191 = vmatprep.subr.mxu0 %v4128
    %4192 = vmatpush2.msra.mxu0 %v4127
    %4193 = vmatprep.subr.mxu0 %v4124
    %4194 = vmatpush2.msra.mxu0 %v4123
    %4195 = vmatprep.subr.mxu0 %v4120
    %4196 = vmatpush2.msra.mxu0 %v4119
    %4197 = vmatprep.subr.mxu0 %v4116
    %4198 = vmatpush2.msra.mxu0 %v4115
    %4199 = vmatprep.subr.mxu0 %v4112
    %4200 = vmatpush2.msra.mxu0 %v4111
    %4201 = vmatprep.subr.mxu0 %v4108
    %4202 = vmatpush2.msra.mxu0 %v4107
    %4203 = vmatprep.subr.mxu0 %v4104
    %4204 = vmatpush2.msra.mxu0 %v4103
    %4205 = vmatprep.subr.mxu0 %v4100
    %4206 = vmatpush2.msra.mxu0 %v4099
    %4207 = vmatprep.subr.mxu0 %v4096
    %4208 = vmatpush2.msra.mxu0 %v4095
    %4209 = vmatprep.subr.mxu0 %v4092
    %4210 = vmatpush2.msra.mxu0 %v4091
    %4211 = vmatprep.subr.mxu0 %v4088
    %4212 = vmatpush2.msra.mxu0 %v4087
    %4213 = vmatprep.subr.mxu0 %v4084
    %4214 = vmatpush2.msra.mxu0 %v4083
    %4215 = vmatprep.subr.mxu0 %v4080
    %4216 = vmatpush2.msra.mxu0 %v4079
    %4217 = vmatprep.subr.mxu0 %v4076
    %4218 = vmatpush2.msra.mxu0 %v4075
    %4219 = vmatprep.subr.mxu0 %v4072
    %4220 = vmatpush2.msra.mxu0 %v4071
    %4221 = vmatprep.mubr.f32.mxu0 %v4005
    %4222 = vmatmul.mubr.f32.gmra.mxu0 %v4003
    %v4223 = vpop.f32.mrf.mxu0
    %v4224 = vadd.f32 %v4140, %v4223
    %v4225 = vpop.f32.mrf.mxu0
    %v4226 = vadd.f32 %v4144, %v4225
    %4227 = vdwg.mxu0
    %4228 = vmatprep.subr.mxu0 %v4070
    %4229 = vmatpush1.msra.mxu0 %v4069
    %4230 = vmatprep.subr.mxu0 %v4066
    %4231 = vmatpush1.msra.mxu0 %v4065
    %4232 = vmatprep.subr.mxu0 %v4062
    %4233 = vmatpush1.msra.mxu0 %v4061
    %4234 = vmatprep.subr.mxu0 %v4058
    %4235 = vmatpush1.msra.mxu0 %v4057
    %4236 = vmatprep.subr.mxu0 %v4054
    %4237 = vmatpush1.msra.mxu0 %v4053
    %4238 = vmatprep.subr.mxu0 %v4050
    %4239 = vmatpush1.msra.mxu0 %v4049
    %4240 = vmatprep.subr.mxu0 %v4046
    %4241 = vmatpush1.msra.mxu0 %v4045
    %4242 = vmatprep.subr.mxu0 %v4042
    %4243 = vmatpush1.msra.mxu0 %v4041
    %4244 = vmatprep.subr.mxu0 %v4038
    %4245 = vmatpush1.msra.mxu0 %v4037
    %4246 = vmatprep.subr.mxu0 %v4034
    %4247 = vmatpush1.msra.mxu0 %v4033
    %4248 = vmatprep.subr.mxu0 %v4030
    %4249 = vmatpush1.msra.mxu0 %v4029
    %4250 = vmatprep.subr.mxu0 %v4026
    %4251 = vmatpush1.msra.mxu0 %v4025
    %4252 = vmatprep.subr.mxu0 %v4022
    %4253 = vmatpush1.msra.mxu0 %v4021
    %4254 = vmatprep.subr.mxu0 %v4018
    %4255 = vmatpush1.msra.mxu0 %v4017
    %4256 = vmatprep.subr.mxu0 %v4014
    %4257 = vmatpush1.msra.mxu0 %v4013
    %4258 = vmatprep.subr.mxu0 %v4010
    %4259 = vmatpush1.msra.mxu0 %v4009
    %4260 = vmatprep.subr.mxu0 %v4134
    %4261 = vmatpush2.msra.mxu0 %v4133
    %4262 = vmatprep.subr.mxu0 %v4130
    %4263 = vmatpush2.msra.mxu0 %v4129
    %4264 = vmatprep.subr.mxu0 %v4126
    %4265 = vmatpush2.msra.mxu0 %v4125
    %4266 = vmatprep.subr.mxu0 %v4122
    %4267 = vmatpush2.msra.mxu0 %v4121
    %4268 = vmatprep.subr.mxu0 %v4118
    %4269 = vmatpush2.msra.mxu0 %v4117
    %4270 = vmatprep.subr.mxu0 %v4114
    %4271 = vmatpush2.msra.mxu0 %v4113
    %4272 = vmatprep.subr.mxu0 %v4110
    %4273 = vmatpush2.msra.mxu0 %v4109
    %4274 = vmatprep.subr.mxu0 %v4106
    %4275 = vmatpush2.msra.mxu0 %v4105
    %4276 = vmatprep.subr.mxu0 %v4102
    %4277 = vmatpush2.msra.mxu0 %v4101
    %4278 = vmatprep.subr.mxu0 %v4098
    %4279 = vmatpush2.msra.mxu0 %v4097
    %4280 = vmatprep.subr.mxu0 %v4094
    %4281 = vmatpush2.msra.mxu0 %v4093
    %4282 = vmatprep.subr.mxu0 %v4090
    %4283 = vmatpush2.msra.mxu0 %v4089
    %4284 = vmatprep.subr.mxu0 %v4086
    %4285 = vmatpush2.msra.mxu0 %v4085
    %4286 = vmatprep.subr.mxu0 %v4082
    %4287 = vmatpush2.msra.mxu0 %v4081
    %4288 = vmatprep.subr.mxu0 %v4078
    %4289 = vmatpush2.msra.mxu0 %v4077
    %4290 = vmatprep.subr.mxu0 %v4074
    %4291 = vmatpush2.msra.mxu0 %v4073
    %4292 = vmatprep.mubr.f32.mxu0 %v4005
    %4293 = vmatmul.mubr.f32.gmra.mxu0 %v4003
    %v4294 = vpop.f32.mrf.mxu0
    %v4295 = vadd.f32 %v4148, %v4294
    %v4296 = vpop.f32.mrf.mxu0
    %v4297 = vadd.f32 %v4152, %v4296
    %4298 = vdwg.mxu0
    %v4299 = vld [vmem:[#allocation20] sm:$0xff]
    %v4300 = vld [vmem:[#allocation20 + $0x8] sm:$0xff]
    %v4301 = vld [vmem:[#allocation20 + $0x10] sm:$0xff]
    %v4302 = vld [vmem:[#allocation20 + $0x18] sm:$0xff]
    %v4303 = vld [vmem:[#allocation20 + $0x20] sm:$0xff]
    %v4304 = vld [vmem:[#allocation20 + $0x28] sm:$0xff]
    %v4305 = vld [vmem:[#allocation20 + $0x30] sm:$0xff]
    %v4306 = vld [vmem:[#allocation20 + $0x38] sm:$0xff]
    %v4307 = vld [vmem:[#allocation20 + $0x40] sm:$0xff]
    %v4308 = vld [vmem:[#allocation20 + $0x48] sm:$0xff]
    %v4309 = vld [vmem:[#allocation20 + $0x50] sm:$0xff]
    %v4310 = vld [vmem:[#allocation20 + $0x58] sm:$0xff]
    %v4311 = vld [vmem:[#allocation20 + $0x60] sm:$0xff]
    %v4312 = vld [vmem:[#allocation20 + $0x68] sm:$0xff]
    %v4313 = vld [vmem:[#allocation20 + $0x70] sm:$0xff]
    %v4314 = vld [vmem:[#allocation20 + $0x78] sm:$0xff]
    %v4315 = vld [vmem:[#allocation20 + $0x80] sm:$0xff]
    %v4316 = vld [vmem:[#allocation20 + $0x88] sm:$0xff]
    %v4317 = vld [vmem:[#allocation20 + $0x90] sm:$0xff]
    %v4318 = vld [vmem:[#allocation20 + $0x98] sm:$0xff]
    %v4319 = vld [vmem:[#allocation20 + $0xa0] sm:$0xff]
    %v4320 = vld [vmem:[#allocation20 + $0xa8] sm:$0xff]
    %v4321 = vld [vmem:[#allocation20 + $0xb0] sm:$0xff]
    %v4322 = vld [vmem:[#allocation20 + $0xb8] sm:$0xff]
    %v4323 = vld [vmem:[#allocation20 + $0xc0] sm:$0xff]
    %v4324 = vld [vmem:[#allocation20 + $0xc8] sm:$0xff]
    %v4325 = vld [vmem:[#allocation20 + $0xd0] sm:$0xff]
    %v4326 = vld [vmem:[#allocation20 + $0xd8] sm:$0xff]
    %v4327 = vld [vmem:[#allocation20 + $0xe0] sm:$0xff]
    %v4328 = vld [vmem:[#allocation20 + $0xe8] sm:$0xff]
    %v4329 = vld [vmem:[#allocation20 + $0xf0] sm:$0xff]
    %v4330 = vld [vmem:[#allocation20 + $0xf8] sm:$0xff]
    %v4331 = vld [vmem:[#allocation20 + $0x100] sm:$0xff]
    %v4332 = vld [vmem:[#allocation20 + $0x108] sm:$0xff]
    %v4333 = vld [vmem:[#allocation20 + $0x110] sm:$0xff]
    %v4334 = vld [vmem:[#allocation20 + $0x118] sm:$0xff]
    %v4335 = vld [vmem:[#allocation20 + $0x120] sm:$0xff]
    %v4336 = vld [vmem:[#allocation20 + $0x128] sm:$0xff]
    %v4337 = vld [vmem:[#allocation20 + $0x130] sm:$0xff]
    %v4338 = vld [vmem:[#allocation20 + $0x138] sm:$0xff]
    %v4339 = vld [vmem:[#allocation20 + $0x140] sm:$0xff]
    %v4340 = vld [vmem:[#allocation20 + $0x148] sm:$0xff]
    %v4341 = vld [vmem:[#allocation20 + $0x150] sm:$0xff]
    %v4342 = vld [vmem:[#allocation20 + $0x158] sm:$0xff]
    %v4343 = vld [vmem:[#allocation20 + $0x160] sm:$0xff]
    %v4344 = vld [vmem:[#allocation20 + $0x168] sm:$0xff]
    %v4345 = vld [vmem:[#allocation20 + $0x170] sm:$0xff]
    %v4346 = vld [vmem:[#allocation20 + $0x178] sm:$0xff]
    %v4347 = vld [vmem:[#allocation20 + $0x180] sm:$0xff]
    %v4348 = vld [vmem:[#allocation20 + $0x188] sm:$0xff]
    %v4349 = vld [vmem:[#allocation20 + $0x190] sm:$0xff]
    %v4350 = vld [vmem:[#allocation20 + $0x198] sm:$0xff]
    %v4351 = vld [vmem:[#allocation20 + $0x1a0] sm:$0xff]
    %v4352 = vld [vmem:[#allocation20 + $0x1a8] sm:$0xff]
    %v4353 = vld [vmem:[#allocation20 + $0x1b0] sm:$0xff]
    %v4354 = vld [vmem:[#allocation20 + $0x1b8] sm:$0xff]
    %v4355 = vld [vmem:[#allocation20 + $0x1c0] sm:$0xff]
    %v4356 = vld [vmem:[#allocation20 + $0x1c8] sm:$0xff]
    %v4357 = vld [vmem:[#allocation20 + $0x1d0] sm:$0xff]
    %v4358 = vld [vmem:[#allocation20 + $0x1d8] sm:$0xff]
    %v4359 = vld [vmem:[#allocation20 + $0x1e0] sm:$0xff]
    %v4360 = vld [vmem:[#allocation20 + $0x1e8] sm:$0xff]
    %v4361 = vld [vmem:[#allocation20 + $0x1f0] sm:$0xff]
    %v4362 = vld [vmem:[#allocation20 + $0x1f8] sm:$0xff]
    %v4363 = vld [vmem:[#allocation20 + $0x200] sm:$0xff]
    %v4364 = vld [vmem:[#allocation20 + $0x208] sm:$0xff]
    %v4365 = vld [vmem:[#allocation20 + $0x210] sm:$0xff]
    %v4366 = vld [vmem:[#allocation20 + $0x218] sm:$0xff]
    %v4367 = vld [vmem:[#allocation20 + $0x220] sm:$0xff]
    %v4368 = vld [vmem:[#allocation20 + $0x228] sm:$0xff]
    %v4369 = vld [vmem:[#allocation20 + $0x230] sm:$0xff]
    %v4370 = vld [vmem:[#allocation20 + $0x238] sm:$0xff]
    %v4371 = vld [vmem:[#allocation20 + $0x240] sm:$0x7]
    %v4372 = vld [vmem:[#allocation20 + $0x248] sm:$0x7]
    %v4373 = vld [vmem:[#allocation20 + $0x250] sm:$0x7]
    %v4374 = vld [vmem:[#allocation20 + $0x258] sm:$0x7]
    %v4376 = vsel %vm320, %v4371, 0
    %v4379 = vsel %vm320, %v4372, 0
    %v4382 = vsel %vm320, %v4373, 0
    %v4385 = vsel %vm320, %v4374, 0
    %4387 = vmatprep.subr.mxu0 %v4360
    %4388 = vmatpush1.msra.mxu0 %v4359
    %4389 = vmatprep.subr.mxu0 %v4356
    %4390 = vmatpush1.msra.mxu0 %v4355
    %4391 = vmatprep.subr.mxu0 %v4352
    %4392 = vmatpush1.msra.mxu0 %v4351
    %4393 = vmatprep.subr.mxu0 %v4348
    %4394 = vmatpush1.msra.mxu0 %v4347
    %4395 = vmatprep.subr.mxu0 %v4344
    %4396 = vmatpush1.msra.mxu0 %v4343
    %4397 = vmatprep.subr.mxu0 %v4340
    %4398 = vmatpush1.msra.mxu0 %v4339
    %4399 = vmatprep.subr.mxu0 %v4336
    %4400 = vmatpush1.msra.mxu0 %v4335
    %4401 = vmatprep.subr.mxu0 %v4332
    %4402 = vmatpush1.msra.mxu0 %v4331
    %4403 = vmatprep.subr.mxu0 %v4328
    %4404 = vmatpush1.msra.mxu0 %v4327
    %4405 = vmatprep.subr.mxu0 %v4324
    %4406 = vmatpush1.msra.mxu0 %v4323
    %4407 = vmatprep.subr.mxu0 %v4320
    %4408 = vmatpush1.msra.mxu0 %v4319
    %4409 = vmatprep.subr.mxu0 %v4316
    %4410 = vmatpush1.msra.mxu0 %v4315
    %4411 = vmatprep.subr.mxu0 %v4312
    %4412 = vmatpush1.msra.mxu0 %v4311
    %4413 = vmatprep.subr.mxu0 %v4308
    %4414 = vmatpush1.msra.mxu0 %v4307
    %4415 = vmatprep.subr.mxu0 %v4304
    %4416 = vmatpush1.msra.mxu0 %v4303
    %4417 = vmatprep.subr.mxu0 %v4300
    %4418 = vmatpush1.msra.mxu0 %v4299
    %4419 = vmatprep.subr.mxu0 0.0
    %4420 = vmatpush2.msra.mxu0 0.0
    %4421 = vmatprep.subr.mxu0 0.0
    %4422 = vmatpush2.msra.mxu0 0.0
    %4423 = vmatprep.subr.mxu0 0.0
    %4424 = vmatpush2.msra.mxu0 0.0
    %4425 = vmatprep.subr.mxu0 0.0
    %4426 = vmatpush2.msra.mxu0 0.0
    %4427 = vmatprep.subr.mxu0 0.0
    %4428 = vmatpush2.msra.mxu0 0.0
    %4429 = vmatprep.subr.mxu0 0.0
    %4430 = vmatpush2.msra.mxu0 0.0
    %4431 = vmatprep.subr.mxu0 0.0
    %4432 = vmatpush2.msra.mxu0 0.0
    %4433 = vmatprep.subr.mxu0 0.0
    %4434 = vmatpush2.msra.mxu0 0.0
    %4435 = vmatprep.subr.mxu0 0.0
    %4436 = vmatpush2.msra.mxu0 0.0
    %4437 = vmatprep.subr.mxu0 0.0
    %4438 = vmatpush2.msra.mxu0 0.0
    %4439 = vmatprep.subr.mxu0 0.0
    %4440 = vmatpush2.msra.mxu0 0.0
    %4441 = vmatprep.subr.mxu0 0.0
    %4442 = vmatpush2.msra.mxu0 0.0
    %4443 = vmatprep.subr.mxu0 0.0
    %4444 = vmatpush2.msra.mxu0 0.0
    %4445 = vmatprep.subr.mxu0 %v4379
    %4446 = vmatpush2.msra.mxu0 %v4376
    %4447 = vmatprep.subr.mxu0 %v4368
    %4448 = vmatpush2.msra.mxu0 %v4367
    %4449 = vmatprep.subr.mxu0 %v4364
    %4450 = vmatpush2.msra.mxu0 %v4363
    %4451 = vmatprep.mubr.f32.mxu0 %v273
    %4452 = vmatmul.mubr.f32.gmra.mxu0 %v213
    %v4453 = vpop.f32.mrf.mxu0
    %v4454 = vadd.f32 0.0, %v4453
    %v4455 = vpop.f32.mrf.mxu0
    %v4456 = vadd.f32 0.0, %v4455
    %4457 = vmatprep.mubr.f32.mxu0 %v276
    %4458 = vmatmul.mubr.f32.gmra.mxu0 %v215
    %v4459 = vpop.f32.mrf.mxu0
    %v4460 = vadd.f32 0.0, %v4459
    %v4461 = vpop.f32.mrf.mxu0
    %v4462 = vadd.f32 0.0, %v4461
    %4463 = vmatprep.mubr.f32.mxu0 %v279
    %4464 = vmatmul.mubr.f32.gmra.mxu0 %v217
    %v4465 = vpop.f32.mrf.mxu0
    %v4466 = vadd.f32 0.0, %v4465
    %v4467 = vpop.f32.mrf.mxu0
    %v4468 = vadd.f32 0.0, %v4467
    %4469 = vmatprep.mubr.f32.mxu0 %v282
    %4470 = vmatmul.mubr.f32.gmra.mxu0 %v219
    %v4471 = vpop.f32.mrf.mxu0
    %v4472 = vadd.f32 0.0, %v4471
    %v4473 = vpop.f32.mrf.mxu0
    %v4474 = vadd.f32 0.0, %v4473
    %4475 = vmatprep.mubr.f32.mxu0 %v285
    %4476 = vmatmul.mubr.f32.gmra.mxu0 %v221
    %v4477 = vpop.f32.mrf.mxu0
    %v4478 = vadd.f32 0.0, %v4477
    %v4479 = vpop.f32.mrf.mxu0
    %v4480 = vadd.f32 0.0, %v4479
    %4481 = vmatprep.mubr.f32.mxu0 %v288
    %4482 = vmatmul.mubr.f32.gmra.mxu0 %v223
    %v4483 = vpop.f32.mrf.mxu0
    %v4484 = vadd.f32 0.0, %v4483
    %v4485 = vpop.f32.mrf.mxu0
    %v4486 = vadd.f32 0.0, %v4485
    %4487 = vmatprep.mubr.f32.mxu0 %v291
    %4488 = vmatmul.mubr.f32.gmra.mxu0 %v225
    %v4489 = vpop.f32.mrf.mxu0
    %v4490 = vadd.f32 0.0, %v4489
    %v4491 = vpop.f32.mrf.mxu0
    %v4492 = vadd.f32 0.0, %v4491
    %4493 = vmatprep.mubr.f32.mxu0 %v294
    %4494 = vmatmul.mubr.f32.gmra.mxu0 %v227
    %v4495 = vpop.f32.mrf.mxu0
    %v4496 = vadd.f32 0.0, %v4495
    %v4497 = vpop.f32.mrf.mxu0
    %v4498 = vadd.f32 0.0, %v4497
    %4499 = vmatprep.mubr.f32.mxu0 %v297
    %4500 = vmatmul.mubr.f32.gmra.mxu0 %v229
    %v4501 = vpop.f32.mrf.mxu0
    %v4502 = vadd.f32 0.0, %v4501
    %v4503 = vpop.f32.mrf.mxu0
    %v4504 = vadd.f32 0.0, %v4503
    %4505 = vmatprep.mubr.f32.mxu0 %v300
    %4506 = vmatmul.mubr.f32.gmra.mxu0 %v231
    %v4507 = vpop.f32.mrf.mxu0
    %v4508 = vadd.f32 0.0, %v4507
    %v4509 = vpop.f32.mrf.mxu0
    %v4510 = vadd.f32 0.0, %v4509
    %4511 = vmatprep.mubr.f32.mxu0 %v303
    %4512 = vmatmul.mubr.f32.gmra.mxu0 %v233
    %v4513 = vpop.f32.mrf.mxu0
    %v4514 = vadd.f32 0.0, %v4513
    %v4515 = vpop.f32.mrf.mxu0
    %v4516 = vadd.f32 0.0, %v4515
    %4517 = vmatprep.mubr.f32.mxu0 %v306
    %4518 = vmatmul.mubr.f32.gmra.mxu0 %v235
    %v4519 = vpop.f32.mrf.mxu0
    %v4520 = vadd.f32 0.0, %v4519
    %v4521 = vpop.f32.mrf.mxu0
    %v4522 = vadd.f32 0.0, %v4521
    %4523 = vmatprep.mubr.f32.mxu0 %v309
    %4524 = vmatmul.mubr.f32.gmra.mxu0 %v237
    %v4525 = vpop.f32.mrf.mxu0
    %v4526 = vadd.f32 0.0, %v4525
    %v4527 = vpop.f32.mrf.mxu0
    %v4528 = vadd.f32 0.0, %v4527
    %4529 = vmatprep.mubr.f32.mxu0 %v312
    %4530 = vmatmul.mubr.f32.gmra.mxu0 %v239
    %v4531 = vpop.f32.mrf.mxu0
    %v4532 = vadd.f32 0.0, %v4531
    %v4533 = vpop.f32.mrf.mxu0
    %v4534 = vadd.f32 0.0, %v4533
    %4535 = vmatprep.mubr.f32.mxu0 %v315
    %4536 = vmatmul.mubr.f32.gmra.mxu0 %v241
    %v4537 = vpop.f32.mrf.mxu0
    %v4538 = vadd.f32 0.0, %v4537
    %v4539 = vpop.f32.mrf.mxu0
    %v4540 = vadd.f32 0.0, %v4539
    %4541 = vmatprep.mubr.f32.mxu0 %v318
    %4542 = vmatmul.mubr.f32.gmra.mxu0 %v243
    %v4543 = vpop.f32.mrf.mxu0
    %v4544 = vadd.f32 0.0, %v4543
    %v4545 = vpop.f32.mrf.mxu0
    %v4546 = vadd.f32 0.0, %v4545
    %4547 = vdwg.mxu0
    %4548 = vmatprep.subr.mxu0 %v4362
    %4549 = vmatpush1.msra.mxu0 %v4361
    %4550 = vmatprep.subr.mxu0 %v4358
    %4551 = vmatpush1.msra.mxu0 %v4357
    %4552 = vmatprep.subr.mxu0 %v4354
    %4553 = vmatpush1.msra.mxu0 %v4353
    %4554 = vmatprep.subr.mxu0 %v4350
    %4555 = vmatpush1.msra.mxu0 %v4349
    %4556 = vmatprep.subr.mxu0 %v4346
    %4557 = vmatpush1.msra.mxu0 %v4345
    %4558 = vmatprep.subr.mxu0 %v4342
    %4559 = vmatpush1.msra.mxu0 %v4341
    %4560 = vmatprep.subr.mxu0 %v4338
    %4561 = vmatpush1.msra.mxu0 %v4337
    %4562 = vmatprep.subr.mxu0 %v4334
    %4563 = vmatpush1.msra.mxu0 %v4333
    %4564 = vmatprep.subr.mxu0 %v4330
    %4565 = vmatpush1.msra.mxu0 %v4329
    %4566 = vmatprep.subr.mxu0 %v4326
    %4567 = vmatpush1.msra.mxu0 %v4325
    %4568 = vmatprep.subr.mxu0 %v4322
    %4569 = vmatpush1.msra.mxu0 %v4321
    %4570 = vmatprep.subr.mxu0 %v4318
    %4571 = vmatpush1.msra.mxu0 %v4317
    %4572 = vmatprep.subr.mxu0 %v4314
    %4573 = vmatpush1.msra.mxu0 %v4313
    %4574 = vmatprep.subr.mxu0 %v4310
    %4575 = vmatpush1.msra.mxu0 %v4309
    %4576 = vmatprep.subr.mxu0 %v4306
    %4577 = vmatpush1.msra.mxu0 %v4305
    %4578 = vmatprep.subr.mxu0 %v4302
    %4579 = vmatpush1.msra.mxu0 %v4301
    %4580 = vmatprep.subr.mxu0 0.0
    %4581 = vmatpush2.msra.mxu0 0.0
    %4582 = vmatprep.subr.mxu0 0.0
    %4583 = vmatpush2.msra.mxu0 0.0
    %4584 = vmatprep.subr.mxu0 0.0
    %4585 = vmatpush2.msra.mxu0 0.0
    %4586 = vmatprep.subr.mxu0 0.0
    %4587 = vmatpush2.msra.mxu0 0.0
    %4588 = vmatprep.subr.mxu0 0.0
    %4589 = vmatpush2.msra.mxu0 0.0
    %4590 = vmatprep.subr.mxu0 0.0
    %4591 = vmatpush2.msra.mxu0 0.0
    %4592 = vmatprep.subr.mxu0 0.0
    %4593 = vmatpush2.msra.mxu0 0.0
    %4594 = vmatprep.subr.mxu0 0.0
    %4595 = vmatpush2.msra.mxu0 0.0
    %4596 = vmatprep.subr.mxu0 0.0
    %4597 = vmatpush2.msra.mxu0 0.0
    %4598 = vmatprep.subr.mxu0 0.0
    %4599 = vmatpush2.msra.mxu0 0.0
    %4600 = vmatprep.subr.mxu0 0.0
    %4601 = vmatpush2.msra.mxu0 0.0
    %4602 = vmatprep.subr.mxu0 0.0
    %4603 = vmatpush2.msra.mxu0 0.0
    %4604 = vmatprep.subr.mxu0 0.0
    %4605 = vmatpush2.msra.mxu0 0.0
    %4606 = vmatprep.subr.mxu0 %v4385
    %4607 = vmatpush2.msra.mxu0 %v4382
    %4608 = vmatprep.subr.mxu0 %v4370
    %4609 = vmatpush2.msra.mxu0 %v4369
    %4610 = vmatprep.subr.mxu0 %v4366
    %4611 = vmatpush2.msra.mxu0 %v4365
    %4612 = vmatprep.mubr.f32.mxu0 %v273
    %4613 = vmatmul.mubr.f32.gmra.mxu0 %v213
    %v4614 = vpop.f32.mrf.mxu0
    %v4615 = vadd.f32 0.0, %v4614
    %v4616 = vpop.f32.mrf.mxu0
    %v4617 = vadd.f32 0.0, %v4616
    %4618 = vmatprep.mubr.f32.mxu0 %v276
    %4619 = vmatmul.mubr.f32.gmra.mxu0 %v215
    %v4620 = vpop.f32.mrf.mxu0
    %v4621 = vadd.f32 0.0, %v4620
    %v4622 = vpop.f32.mrf.mxu0
    %v4623 = vadd.f32 0.0, %v4622
    %4624 = vmatprep.mubr.f32.mxu0 %v279
    %4625 = vmatmul.mubr.f32.gmra.mxu0 %v217
    %v4626 = vpop.f32.mrf.mxu0
    %v4627 = vadd.f32 0.0, %v4626
    %v4628 = vpop.f32.mrf.mxu0
    %v4629 = vadd.f32 0.0, %v4628
    %4630 = vmatprep.mubr.f32.mxu0 %v282
    %4631 = vmatmul.mubr.f32.gmra.mxu0 %v219
    %v4632 = vpop.f32.mrf.mxu0
    %v4633 = vadd.f32 0.0, %v4632
    %v4634 = vpop.f32.mrf.mxu0
    %v4635 = vadd.f32 0.0, %v4634
    %4636 = vmatprep.mubr.f32.mxu0 %v285
    %4637 = vmatmul.mubr.f32.gmra.mxu0 %v221
    %v4638 = vpop.f32.mrf.mxu0
    %v4639 = vadd.f32 0.0, %v4638
    %v4640 = vpop.f32.mrf.mxu0
    %v4641 = vadd.f32 0.0, %v4640
    %4642 = vmatprep.mubr.f32.mxu0 %v288
    %4643 = vmatmul.mubr.f32.gmra.mxu0 %v223
    %v4644 = vpop.f32.mrf.mxu0
    %v4645 = vadd.f32 0.0, %v4644
    %v4646 = vpop.f32.mrf.mxu0
    %v4647 = vadd.f32 0.0, %v4646
    %4648 = vmatprep.mubr.f32.mxu0 %v291
    %4649 = vmatmul.mubr.f32.gmra.mxu0 %v225
    %v4650 = vpop.f32.mrf.mxu0
    %v4651 = vadd.f32 0.0, %v4650
    %v4652 = vpop.f32.mrf.mxu0
    %v4653 = vadd.f32 0.0, %v4652
    %4654 = vmatprep.mubr.f32.mxu0 %v294
    %4655 = vmatmul.mubr.f32.gmra.mxu0 %v227
    %v4656 = vpop.f32.mrf.mxu0
    %v4657 = vadd.f32 0.0, %v4656
    %v4658 = vpop.f32.mrf.mxu0
    %v4659 = vadd.f32 0.0, %v4658
    %4660 = vmatprep.mubr.f32.mxu0 %v297
    %4661 = vmatmul.mubr.f32.gmra.mxu0 %v229
    %v4662 = vpop.f32.mrf.mxu0
    %v4663 = vadd.f32 0.0, %v4662
    %v4664 = vpop.f32.mrf.mxu0
    %v4665 = vadd.f32 0.0, %v4664
    %4666 = vmatprep.mubr.f32.mxu0 %v300
    %4667 = vmatmul.mubr.f32.gmra.mxu0 %v231
    %v4668 = vpop.f32.mrf.mxu0
    %v4669 = vadd.f32 0.0, %v4668
    %v4670 = vpop.f32.mrf.mxu0
    %v4671 = vadd.f32 0.0, %v4670
    %4672 = vmatprep.mubr.f32.mxu0 %v303
    %4673 = vmatmul.mubr.f32.gmra.mxu0 %v233
    %v4674 = vpop.f32.mrf.mxu0
    %v4675 = vadd.f32 0.0, %v4674
    %v4676 = vpop.f32.mrf.mxu0
    %v4677 = vadd.f32 0.0, %v4676
    %4678 = vmatprep.mubr.f32.mxu0 %v306
    %4679 = vmatmul.mubr.f32.gmra.mxu0 %v235
    %v4680 = vpop.f32.mrf.mxu0
    %v4681 = vadd.f32 0.0, %v4680
    %v4682 = vpop.f32.mrf.mxu0
    %v4683 = vadd.f32 0.0, %v4682
    %4684 = vmatprep.mubr.f32.mxu0 %v309
    %4685 = vmatmul.mubr.f32.gmra.mxu0 %v237
    %v4686 = vpop.f32.mrf.mxu0
    %v4687 = vadd.f32 0.0, %v4686
    %v4688 = vpop.f32.mrf.mxu0
    %v4689 = vadd.f32 0.0, %v4688
    %4690 = vmatprep.mubr.f32.mxu0 %v312
    %4691 = vmatmul.mubr.f32.gmra.mxu0 %v239
    %v4692 = vpop.f32.mrf.mxu0
    %v4693 = vadd.f32 0.0, %v4692
    %v4694 = vpop.f32.mrf.mxu0
    %v4695 = vadd.f32 0.0, %v4694
    %4696 = vmatprep.mubr.f32.mxu0 %v315
    %4697 = vmatmul.mubr.f32.gmra.mxu0 %v241
    %v4698 = vpop.f32.mrf.mxu0
    %v4699 = vadd.f32 0.0, %v4698
    %v4700 = vpop.f32.mrf.mxu0
    %v4701 = vadd.f32 0.0, %v4700
    %4702 = vmatprep.mubr.f32.mxu0 %v318
    %4703 = vmatmul.mubr.f32.gmra.mxu0 %v243
    %v4704 = vpop.f32.mrf.mxu0
    %v4705 = vadd.f32 0.0, %v4704
    %v4706 = vpop.f32.mrf.mxu0
    %v4707 = vadd.f32 0.0, %v4706
    %4708 = vdwg.mxu0
    %v4709 = vld [vmem:[#allocation19] sm:$0x3]
    %v4710 = vld [vmem:[#allocation22] sm:$0xf]
    %v4712 = vlaneseq
    %v4713 = vshrl.u32 %v4712, 7
    %v4714 = vsub.s32 0, %v4713
    %v4715 = vrot.slane %v4710, %v4714
    %v4716 = vlaneseq
    %v4717 = vshrl.u32 %v4716, 7
    %v4718 = vsub.s32 1, %v4717
    %v4719 = vrot.slane %v4710, %v4718
    %v4720 = vlaneseq
    %v4721 = vshrl.u32 %v4720, 7
    %v4722 = vsub.s32 2, %v4721
    %v4723 = vrot.slane %v4710, %v4722
    %v4724 = vlaneseq
    %v4725 = vshrl.u32 %v4724, 7
    %v4726 = vsub.s32 3, %v4725
    %v4727 = vrot.slane %v4710, %v4726
    %4732 = vmatprep.subr.mxu0 %v4546
    %4733 = vmatpush1.msra.mxu0 %v4544
    %4734 = vmatprep.subr.mxu0 %v4540
    %4735 = vmatpush1.msra.mxu0 %v4538
    %4736 = vmatprep.subr.mxu0 %v4534
    %4737 = vmatpush1.msra.mxu0 %v4532
    %4738 = vmatprep.subr.mxu0 %v4528
    %4739 = vmatpush1.msra.mxu0 %v4526
    %4740 = vmatprep.subr.mxu0 %v4522
    %4741 = vmatpush1.msra.mxu0 %v4520
    %4742 = vmatprep.subr.mxu0 %v4516
    %4743 = vmatpush1.msra.mxu0 %v4514
    %4744 = vmatprep.subr.mxu0 %v4510
    %4745 = vmatpush1.msra.mxu0 %v4508
    %4746 = vmatprep.subr.mxu0 %v4504
    %4747 = vmatpush1.msra.mxu0 %v4502
    %4748 = vmatprep.subr.mxu0 %v4498
    %4749 = vmatpush1.msra.mxu0 %v4496
    %4750 = vmatprep.subr.mxu0 %v4492
    %4751 = vmatpush1.msra.mxu0 %v4490
    %4752 = vmatprep.subr.mxu0 %v4486
    %4753 = vmatpush1.msra.mxu0 %v4484
    %4754 = vmatprep.subr.mxu0 %v4480
    %4755 = vmatpush1.msra.mxu0 %v4478
    %4756 = vmatprep.subr.mxu0 %v4474
    %4757 = vmatpush1.msra.mxu0 %v4472
    %4758 = vmatprep.subr.mxu0 %v4468
    %4759 = vmatpush1.msra.mxu0 %v4466
    %4760 = vmatprep.subr.mxu0 %v4462
    %4761 = vmatpush1.msra.mxu0 %v4460
    %4762 = vmatprep.subr.mxu0 %v4456
    %4763 = vmatpush1.msra.mxu0 %v4454
    %4764 = vmatprep.subr.mxu0 0.0
    %4765 = vmatpush2.msra.mxu0 0.0
    %4766 = vmatprep.subr.mxu0 0.0
    %4767 = vmatpush2.msra.mxu0 0.0
    %4768 = vmatprep.subr.mxu0 0.0
    %4769 = vmatpush2.msra.mxu0 0.0
    %4770 = vmatprep.subr.mxu0 0.0
    %4771 = vmatpush2.msra.mxu0 0.0
    %4772 = vmatprep.subr.mxu0 0.0
    %4773 = vmatpush2.msra.mxu0 0.0
    %4774 = vmatprep.subr.mxu0 0.0
    %4775 = vmatpush2.msra.mxu0 0.0
    %4776 = vmatprep.subr.mxu0 0.0
    %4777 = vmatpush2.msra.mxu0 0.0
    %4778 = vmatprep.subr.mxu0 0.0
    %4779 = vmatpush2.msra.mxu0 0.0
    %4780 = vmatprep.subr.mxu0 0.0
    %4781 = vmatpush2.msra.mxu0 0.0
    %4782 = vmatprep.subr.mxu0 0.0
    %4783 = vmatpush2.msra.mxu0 0.0
    %4784 = vmatprep.subr.mxu0 0.0
    %4785 = vmatpush2.msra.mxu0 0.0
    %4786 = vmatprep.subr.mxu0 0.0
    %4787 = vmatpush2.msra.mxu0 0.0
    %4788 = vmatprep.subr.mxu0 0.0
    %4789 = vmatpush2.msra.mxu0 0.0
    %4790 = vmatprep.subr.mxu0 0.0
    %4791 = vmatpush2.msra.mxu0 0.0
    %4792 = vmatprep.subr.mxu0 0.0
    %4793 = vmatpush2.msra.mxu0 0.0
    %4794 = vmatprep.subr.mxu0 0.0
    %4795 = vmatpush2.msra.mxu0 0.0
    %4796 = vmatprep.mubr.f32.mxu0 0.0
    %4797 = vmatmul.mubr.f32.gmra.mxu0 %v4709
    %v4798 = vpop.f32.mrf.mxu0
    %v4799 = vadd.f32 %v4715, %v4798
    %v4800 = vpop.f32.mrf.mxu0
    %v4801 = vadd.f32 %v4719, %v4800
    %4802 = vdwg.mxu0
    %4803 = vmatprep.subr.mxu0 %v4707
    %4804 = vmatpush1.msra.mxu0 %v4705
    %4805 = vmatprep.subr.mxu0 %v4701
    %4806 = vmatpush1.msra.mxu0 %v4699
    %4807 = vmatprep.subr.mxu0 %v4695
    %4808 = vmatpush1.msra.mxu0 %v4693
    %4809 = vmatprep.subr.mxu0 %v4689
    %4810 = vmatpush1.msra.mxu0 %v4687
    %4811 = vmatprep.subr.mxu0 %v4683
    %4812 = vmatpush1.msra.mxu0 %v4681
    %4813 = vmatprep.subr.mxu0 %v4677
    %4814 = vmatpush1.msra.mxu0 %v4675
    %4815 = vmatprep.subr.mxu0 %v4671
    %4816 = vmatpush1.msra.mxu0 %v4669
    %4817 = vmatprep.subr.mxu0 %v4665
    %4818 = vmatpush1.msra.mxu0 %v4663
    %4819 = vmatprep.subr.mxu0 %v4659
    %4820 = vmatpush1.msra.mxu0 %v4657
    %4821 = vmatprep.subr.mxu0 %v4653
    %4822 = vmatpush1.msra.mxu0 %v4651
    %4823 = vmatprep.subr.mxu0 %v4647
    %4824 = vmatpush1.msra.mxu0 %v4645
    %4825 = vmatprep.subr.mxu0 %v4641
    %4826 = vmatpush1.msra.mxu0 %v4639
    %4827 = vmatprep.subr.mxu0 %v4635
    %4828 = vmatpush1.msra.mxu0 %v4633
    %4829 = vmatprep.subr.mxu0 %v4629
    %4830 = vmatpush1.msra.mxu0 %v4627
    %4831 = vmatprep.subr.mxu0 %v4623
    %4832 = vmatpush1.msra.mxu0 %v4621
    %4833 = vmatprep.subr.mxu0 %v4617
    %4834 = vmatpush1.msra.mxu0 %v4615
    %4835 = vmatprep.subr.mxu0 0.0
    %4836 = vmatpush2.msra.mxu0 0.0
    %4837 = vmatprep.subr.mxu0 0.0
    %4838 = vmatpush2.msra.mxu0 0.0
    %4839 = vmatprep.subr.mxu0 0.0
    %4840 = vmatpush2.msra.mxu0 0.0
    %4841 = vmatprep.subr.mxu0 0.0
    %4842 = vmatpush2.msra.mxu0 0.0
    %4843 = vmatprep.subr.mxu0 0.0
    %4844 = vmatpush2.msra.mxu0 0.0
    %4845 = vmatprep.subr.mxu0 0.0
    %4846 = vmatpush2.msra.mxu0 0.0
    %4847 = vmatprep.subr.mxu0 0.0
    %4848 = vmatpush2.msra.mxu0 0.0
    %4849 = vmatprep.subr.mxu0 0.0
    %4850 = vmatpush2.msra.mxu0 0.0
    %4851 = vmatprep.subr.mxu0 0.0
    %4852 = vmatpush2.msra.mxu0 0.0
    %4853 = vmatprep.subr.mxu0 0.0
    %4854 = vmatpush2.msra.mxu0 0.0
    %4855 = vmatprep.subr.mxu0 0.0
    %4856 = vmatpush2.msra.mxu0 0.0
    %4857 = vmatprep.subr.mxu0 0.0
    %4858 = vmatpush2.msra.mxu0 0.0
    %4859 = vmatprep.subr.mxu0 0.0
    %4860 = vmatpush2.msra.mxu0 0.0
    %4861 = vmatprep.subr.mxu0 0.0
    %4862 = vmatpush2.msra.mxu0 0.0
    %4863 = vmatprep.subr.mxu0 0.0
    %4864 = vmatpush2.msra.mxu0 0.0
    %4865 = vmatprep.subr.mxu0 0.0
    %4866 = vmatpush2.msra.mxu0 0.0
    %4867 = vmatprep.mubr.f32.mxu0 0.0
    %4868 = vmatmul.mubr.f32.gmra.mxu0 %v4709
    %v4869 = vpop.f32.mrf.mxu0
    %v4870 = vadd.f32 %v4723, %v4869
    %v4871 = vpop.f32.mrf.mxu0
    %v4872 = vadd.f32 %v4727, %v4871
    %4873 = vdwg.mxu0
    %v4878 = vcombine.low %v4799, %v4801
    %v4879 = vcombine.low %v4870, %v4872
    %v4881 = vunpack.c.l.s4 1983009808
    %v4882 = vunpack.c.0.s8 %v4881
    %v4883 = vlaneseq
    %v4884 = vshrl.u32 %v4883, 7
    %v4885 = vsub.s32 %v4882, %v4884
    %v4886 = vrot.slane %v4878, %v4885
    %v4888 = vunpack.c.l.s4 1983009808
    %v4889 = vunpack.c.0.s8 %v4888
    %v4890 = vlaneseq
    %v4891 = vshrl.u32 %v4890, 7
    %v4892 = vsub.s32 %v4889, %v4891
    %v4893 = vrot.slane %v4879, %v4892
    %v4894 = vcombine.low %v4886, %v4893
    %4896 = vst [vmem:[#allocation23] sm:$0xff] %v4894
    %v4901 = vcombine.low %v4224, %v4226
    %v4902 = vcombine.low %v4295, %v4297
    %v4904 = vunpack.c.l.s4 1983009808
    %v4905 = vunpack.c.0.s8 %v4904
    %v4906 = vlaneseq
    %v4907 = vshrl.u32 %v4906, 7
    %v4908 = vsub.s32 %v4905, %v4907
    %v4909 = vrot.slane %v4901, %v4908
    %v4911 = vunpack.c.l.s4 1983009808
    %v4912 = vunpack.c.0.s8 %v4911
    %v4913 = vlaneseq
    %v4914 = vshrl.u32 %v4913, 7
    %v4915 = vsub.s32 %v4912, %v4914
    %v4916 = vrot.slane %v4902, %v4915
    %v4917 = vcombine.low %v4909, %v4916
    %4919 = vst [vmem:[#allocation23 + $0x8] sm:$0xff] %v4917
    // Predicated region
    $region114: #{tpu_custom_call.1} parent=1 // pred_check
      _
    $region115: #{tpu_custom_call.1} parent=1 // pred_check_branch
      %4921 = sbr.rel (0) target = $region117
    $region116: #{tpu_custom_call.1} parent=1 // pred_region
      %s4923 = ssub.s32 256, 256
      %4924 = vsyncadd [#allocation4], %s4923
      %s4926 = sshll.u32 [#allocation23], 4
      %s4927 = int_to_ptr.vmem [resolvable:$true] %s4926
      %4929 = dma.vmem_to_hbm [thread:$0]  %s4927, 256, %s15, [#allocation4]
    $region117: #{tpu_custom_call.1} parent=1 // pred_fallthru
      _
    // Predicated region
    $region118: #{tpu_custom_call.1} parent=1 // pred_check
      _
    $region119: #{tpu_custom_call.1} parent=1 // pred_check_branch
      %4931 = sbr.rel (0) target = $region121
    $region120: #{tpu_custom_call.1} parent=1 // pred_region
      %4932 = dma.done [#allocation4], 256
    $region121: #{tpu_custom_call.1} parent=1 // pred_fallthru
      _
    %4933 = vsyncpa [#allocation3], 1
    %4934 = vsyncpa [#allocation6], 1
    %4935 = vsyncpa [#allocation9], 1
    %4936 = vsyncpa [#allocation12], 1
    %4937 = vsyncpa [#allocation15], 1
    %4938 = vsyncpa [#allocation18], 1
    %4939 = vsyncpa [#allocation21], 1
    %4940 = vsyncpa [#allocation4], 1

</llo_original>
